<compile_context>
chip_gen: v6e
topology: v6e:2x2x1
jax: 0.10.0
libtpu: 0.0.40
codegen_flags: <defaults>
</compile_context>

<pallas_src>
import functools

import jax
import jax.numpy as jnp
from jax.experimental import pallas as pl

HIDDEN = 128


# ---------------------------------------------------------------------------
# Fused kernel.
# Gate column order (after host-side permutation): i, f, o, g.
# ---------------------------------------------------------------------------
def _fused_lstm_kernel(T, B, x_ref, w_ih1_ref, b1_ref, w_blk_ref, b2_ref,
                       w_fc_ref, b_fc_ref, o_ref):
    H = HIDDEN

    def lstm_cell(gates, c_prev):
        # gates: (.., 4H) in [i, f, o, g] order.
        sig = jax.nn.sigmoid(gates[:, :3 * H])          # one EUP slab for i,f,o
        i = sig[:, 0 * H:1 * H]
        f = sig[:, 1 * H:2 * H]
        o = sig[:, 2 * H:3 * H]
        g = jnp.tanh(gates[:, 3 * H:])
        c = f * c_prev + i * g
        h = o * jnp.tanh(c)
        return h, c

    # Hoisted layer-1 input projection for ALL timesteps (one MXU call).
    # x_ref is time-major: row t*B + b.  (T*B, 4H) f32 accumulator (~8 vregs).
    xg1 = (jnp.dot(x_ref[...], w_ih1_ref[...],
                   preferred_element_type=jnp.float32)
           + b1_ref[...])

    # Prologue: layer-1 step 0 (h1_{-1} = 0 -> recurrent term is zero).
    h1, c1 = lstm_cell(xg1[0:B, :], jnp.zeros((B, H), jnp.float32))
    h2 = jnp.zeros((B, H), jnp.float32)
    c2 = jnp.zeros((B, H), jnp.float32)

    # Fully unrolled wavefront recurrence: one merged K=2H matmul per step
    # producing [ h1_t @ w_hh1 | h1_t @ w_ih2 + h2_{t-1} @ w_hh2 ].
    for t in range(T):
        lhs = jnp.concatenate([h1, h2], axis=1).astype(jnp.bfloat16)   # (B, 2H)
        m = jnp.dot(lhs, w_blk_ref[...],
                    preferred_element_type=jnp.float32)                # (B, 8H)
        g2 = m[:, 4 * H:] + b2_ref[...]                                # layer-2(t) gates
        if t + 1 < T:
            g1_next = m[:, :4 * H] + xg1[(t + 1) * B:(t + 2) * B, :]   # layer-1(t+1) gates
            g_stack = jnp.concatenate([g2, g1_next], axis=0)           # (2B, 4H)
            c_stack = jnp.concatenate([c2, c1], axis=0)
            h_stack, c_stack = lstm_cell(g_stack, c_stack)
            h2, c2 = h_stack[:B, :], c_stack[:B, :]
            h1, c1 = h_stack[B:, :], c_stack[B:, :]
        else:
            h2, c2 = lstm_cell(g2, c2)

    # Dropout p=0.5 -> identity in eval mode.
    z = (jnp.dot(h2.astype(jnp.bfloat16), w_fc_ref[...],
                 preferred_element_type=jnp.float32)
         + b_fc_ref[...])                                              # (B, C)
    o_ref[...] = jax.nn.sigmoid(z).astype(o_ref.dtype)


def lstm_fused(x_flat, w_ih1, b1, w_blk, b2, w_fc, b_fc, *, T, B):
    """x_flat: (T*B, F) time-major bf16 input -> (B, C) f32 sigmoid output."""
    TB, F = x_flat.shape
    H = HIDDEN
    C = w_fc.shape[1]
    kernel = functools.partial(_fused_lstm_kernel, T, B)
    return pl.pallas_call(
        kernel,
        out_shape=jax.ShapeDtypeStruct((B, C), jnp.float32),
        in_specs=[
            pl.BlockSpec((TB, F), lambda: (0, 0)),           # x (time-major flat, bf16)
            pl.BlockSpec((F, 4 * H), lambda: (0, 0)),        # W_ih1^T (bf16, perm)
            pl.BlockSpec((1, 4 * H), lambda: (0, 0)),        # b1 (f32, perm)
            pl.BlockSpec((2 * H, 8 * H), lambda: (0, 0)),    # [[w_hh1,w_ih2],[0,w_hh2]] bf16
            pl.BlockSpec((1, 4 * H), lambda: (0, 0)),        # b2 (f32, perm)
            pl.BlockSpec((H, C), lambda: (0, 0)),            # W_fc^T (bf16)
            pl.BlockSpec((1, C), lambda: (0, 0)),            # b_fc (f32)
        ],
        out_specs=pl.BlockSpec((B, C), lambda: (0, 0)),
    )(x_flat, w_ih1, b1, w_blk, b2, w_fc, b_fc)


# ---------------------------------------------------------------------------
# Parameter init (deterministic, PyTorch-style U(-1/sqrt(H), 1/sqrt(H)))
# ---------------------------------------------------------------------------
def init_params(key, num_features, num_classes):
    H = HIDDEN
    k = 1.0 / jnp.sqrt(jnp.float32(H))

    def u(key, shape):
        return jax.random.uniform(key, shape, jnp.float32, -k, k)

    keys = jax.random.split(key, 10)
    return {
        # lstm1 (PyTorch layout: gate rows [i, f, g, o])
        "w_ih1": u(keys[0], (4 * H, num_features)),
        "w_hh1": u(keys[1], (4 * H, H)),
        "b_ih1": u(keys[2], (4 * H,)),
        "b_hh1": u(keys[3], (4 * H,)),
        # lstm2
        "w_ih2": u(keys[4], (4 * H, H)),
        "w_hh2": u(keys[5], (4 * H, H)),
        "b_ih2": u(keys[6], (4 * H,)),
        "b_hh2": u(keys[7], (4 * H,)),
        # fc
        "w_fc": u(keys[8], (num_classes, H)),
        "b_fc": u(keys[9], (num_classes,)),
    }


# ---------------------------------------------------------------------------
# One-time parameter preprocessing (hoisted out of the per-call forward).
# ---------------------------------------------------------------------------
def _perm_gate_rows(w):
    """PyTorch gate-row order [i, f, g, o] -> kernel order [i, f, o, g]."""
    H = HIDDEN
    return jnp.concatenate([w[:2 * H], w[3 * H:], w[2 * H:3 * H]], axis=0)


def prepare_params(params):
    H = HIDDEN
    w_ih1_t = _perm_gate_rows(params["w_ih1"]).T            # (F, 4H)
    w_hh1_t = _perm_gate_rows(params["w_hh1"]).T            # (H, 4H)
    w_ih2_t = _perm_gate_rows(params["w_ih2"]).T            # (H, 4H)
    w_hh2_t = _perm_gate_rows(params["w_hh2"]).T            # (H, 4H)

    # Block weight for the merged per-step matmul: LHS = [h1_t | h2_{t-1}]
    #   m[:, :4H] = h1_t @ w_hh1      (layer-1 recurrent term for step t+1)
    #   m[:, 4H:] = h1_t @ w_ih2 + h2_{t-1} @ w_hh2   (layer-2 gates for step t)
    top = jnp.concatenate([w_hh1_t, w_ih2_t], axis=1)                       # (H, 8H)
    bot = jnp.concatenate([jnp.zeros((H, 4 * H), jnp.float32), w_hh2_t], 1)  # (H, 8H)
    w_blk = jnp.concatenate([top, bot], axis=0)                              # (2H, 8H)

    return {
        "w_ih1": w_ih1_t.astype(jnp.bfloat16),
        "b1": _perm_gate_rows(params["b_ih1"] + params["b_hh1"])[None, :],   # f32
        "w_blk": w_blk.astype(jnp.bfloat16),
        "b2": _perm_gate_rows(params["b_ih2"] + params["b_hh2"])[None, :],   # f32
        "w_fc": params["w_fc"].T.astype(jnp.bfloat16),                       # (H, C)
        "b_fc": params["b_fc"][None, :],                                     # (1, C) f32
    }


# ---------------------------------------------------------------------------
# Forward pass (matches PyTorch LSTM.forward in eval mode).
# ---------------------------------------------------------------------------
@jax.jit
def lstm_forward(x_btf, prepped):
    # x_btf: (B, T, F) batch_first, like the PyTorch module.
    B, T, F = x_btf.shape
    # Time-major flatten so the hoisted input projection is one dense matmul;
    # row index t*B + b corresponds to (time t, batch b).
    x_flat = jnp.transpose(x_btf, (1, 0, 2)).reshape(T * B, F).astype(jnp.bfloat16)
    return lstm_fused(
        x_flat,
        prepped["w_ih1"], prepped["b1"],
        prepped["w_blk"], prepped["b2"],
        prepped["w_fc"], prepped["b_fc"],
        T=T, B=B,
    )                                                       # (B, C) f32


# ---------------------------------------------------------------------------
# Pure-JAX f32 reference (straight port of the PyTorch module, eval mode).
# ---------------------------------------------------------------------------
def lstm_reference(x_btf, params):
    H = HIDDEN

    def cell(x, h, c, w_ih, w_hh, b_ih, b_hh):
        g = x @ w_ih.T + b_ih + h @ w_hh.T + b_hh
        i, f, gg, o = (g[:, :H], g[:, H:2 * H], g[:, 2 * H:3 * H], g[:, 3 * H:])
        i, f, o = jax.nn.sigmoid(i), jax.nn.sigmoid(f), jax.nn.sigmoid(o)
        c = f * c + i * jnp.tanh(gg)
        h = o * jnp.tanh(c)
        return h, c

    B, T, _ = x_btf.shape
    h1 = c1 = h2 = c2 = jnp.zeros((B, H), jnp.float32)
    for t in range(T):
        h1, c1 = cell(x_btf[:, t], h1, c1, params["w_ih1"], params["w_hh1"],
                      params["b_ih1"], params["b_hh1"])
        h2, c2 = cell(h1, h2, c2, params["w_ih2"], params["w_hh2"],
                      params["b_ih2"], params["b_hh2"])
    return jax.nn.sigmoid(h2 @ params["w_fc"].T + params["b_fc"])


if __name__ == "__main__":
    B, T, F, C = 2, 8, 32, 8

    key = jax.random.PRNGKey(0)
    k_x, k_p = jax.random.split(key)
    x = jax.random.normal(k_x, (B, T, F), jnp.float32)
    params = init_params(k_p, num_features=F, num_classes=C)
    prepped = prepare_params(params)          # one-time weight preprocessing

    out = lstm_forward(x, prepped)
    out = jax.block_until_ready(out)

    assert out.shape == (B, C)
    assert bool(jnp.all((out >= 0.0) & (out <= 1.0)))

    ref = lstm_reference(x, params)
    max_err = float(jnp.max(jnp.abs(out - ref)))
    assert max_err < 3e-2, f"mismatch vs reference: {max_err}"

    print("KERNEL_OK")
</pallas_src>

<mosaic_0001>
module attributes {stable_mosaic.version = 11 : i64} {
  func.func @_fused_lstm_kernel(%arg0: memref<16x32xbf16, #tpu.memory_space<vmem>>, %arg1: memref<32x512xbf16, #tpu.memory_space<vmem>>, %arg2: memref<1x512xf32, #tpu.memory_space<vmem>>, %arg3: memref<256x1024xbf16, #tpu.memory_space<vmem>>, %arg4: memref<1x512xf32, #tpu.memory_space<vmem>>, %arg5: memref<128x8xbf16, #tpu.memory_space<vmem>>, %arg6: memref<1x8xf32, #tpu.memory_space<vmem>>, %arg7: memref<2x8xf32, #tpu.memory_space<vmem>>) attributes {dimension_semantics = [], scalar_prefetch = 0 : i64, scratch_operands = 0 : i64, tpu.core_type = #tpu.core_type<tc>} {
    %c0 = arith.constant 0 : index
    %c0_0 = arith.constant 0 : index
    %0 = vector.load %arg0[%c0, %c0_0] : memref<16x32xbf16, #tpu.memory_space<vmem>>, vector<16x32xbf16>
    %c0_1 = arith.constant 0 : index
    %c0_2 = arith.constant 0 : index
    %1 = vector.load %arg1[%c0_1, %c0_2] : memref<32x512xbf16, #tpu.memory_space<vmem>>, vector<32x512xbf16>
    %cst = arith.constant dense<0.000000e+00> : vector<16x512xf32>
    %2 = tpu.matmul %0, %1, %cst {dimension_numbers = #tpu.dot_dimension_numbers<[1], [0], [0], [1], [0, 0, 1, 1], [], []>} : vector<16x32xbf16>, vector<32x512xbf16>, vector<16x512xf32> -> vector<16x512xf32>
    %c0_3 = arith.constant 0 : index
    %c0_4 = arith.constant 0 : index
    %3 = vector.load %arg2[%c0_3, %c0_4] : memref<1x512xf32, #tpu.memory_space<vmem>>, vector<1x512xf32>
    %4 = vector.broadcast %3 : vector<1x512xf32> to vector<16x512xf32>
    %5 = arith.addf %2, %4 : vector<16x512xf32>
    %6 = vector.extract_strided_slice %5 {offsets = [0, 0], sizes = [2, 512], strides = [1, 1]} : vector<16x512xf32> to vector<2x512xf32>
    %cst_5 = arith.constant 0.000000e+00 : f32
    %7 = vector.broadcast %cst_5 : f32 to vector<2x128xf32>
    %8 = vector.extract_strided_slice %6 {offsets = [0, 0], sizes = [2, 384], strides = [1, 1]} : vector<2x512xf32> to vector<2x384xf32>
    %9 = arith.negf %8 : vector<2x384xf32>
    %10 = math.exp %9 : vector<2x384xf32>
    %cst_6 = arith.constant 1.000000e+00 : f32
    %11 = vector.broadcast %cst_6 : f32 to vector<2x384xf32>
    %12 = arith.addf %11, %10 : vector<2x384xf32>
    %13 = arith.divf %11, %12 : vector<2x384xf32>
    %14 = vector.extract_strided_slice %13 {offsets = [0, 0], sizes = [2, 128], strides = [1, 1]} : vector<2x384xf32> to vector<2x128xf32>
    %15 = vector.extract_strided_slice %13 {offsets = [0, 128], sizes = [2, 128], strides = [1, 1]} : vector<2x384xf32> to vector<2x128xf32>
    %16 = vector.extract_strided_slice %13 {offsets = [0, 256], sizes = [2, 128], strides = [1, 1]} : vector<2x384xf32> to vector<2x128xf32>
    %17 = vector.extract_strided_slice %6 {offsets = [0, 384], sizes = [2, 128], strides = [1, 1]} : vector<2x512xf32> to vector<2x128xf32>
    %18 = math.tanh %17 : vector<2x128xf32>
    %19 = arith.mulf %15, %7 : vector<2x128xf32>
    %20 = arith.mulf %14, %18 : vector<2x128xf32>
    %21 = arith.addf %19, %20 : vector<2x128xf32>
    %22 = math.tanh %21 : vector<2x128xf32>
    %23 = arith.mulf %16, %22 : vector<2x128xf32>
    %cst_7 = arith.constant 0.000000e+00 : f32
    %24 = vector.broadcast %cst_7 : f32 to vector<2x128xf32>
    %cst_8 = arith.constant 0.000000e+00 : f32
    %25 = vector.broadcast %cst_8 : f32 to vector<2x128xf32>
    %26 = tpu.concatenate %23, %24 in 1 : vector<2x128xf32>, vector<2x128xf32> -> vector<2x256xf32>
    %27 = arith.truncf %26 : vector<2x256xf32> to vector<2x256xbf16>
    %c0_9 = arith.constant 0 : index
    %c0_10 = arith.constant 0 : index
    %28 = vector.load %arg3[%c0_9, %c0_10] : memref<256x1024xbf16, #tpu.memory_space<vmem>>, vector<256x1024xbf16>
    %cst_11 = arith.constant dense<0.000000e+00> : vector<2x1024xf32>
    %29 = tpu.matmul %27, %28, %cst_11 {dimension_numbers = #tpu.dot_dimension_numbers<[1], [0], [0], [1], [0, 0, 1, 1], [], []>} : vector<2x256xbf16>, vector<256x1024xbf16>, vector<2x1024xf32> -> vector<2x1024xf32>
    %30 = vector.extract_strided_slice %29 {offsets = [0, 512], sizes = [2, 512], strides = [1, 1]} : vector<2x1024xf32> to vector<2x512xf32>
    %c0_12 = arith.constant 0 : index
    %c0_13 = arith.constant 0 : index
    %31 = vector.load %arg4[%c0_12, %c0_13] : memref<1x512xf32, #tpu.memory_space<vmem>>, vector<1x512xf32>
    %32 = vector.broadcast %31 : vector<1x512xf32> to vector<2x512xf32>
    %33 = arith.addf %30, %32 : vector<2x512xf32>
    %34 = vector.extract_strided_slice %29 {offsets = [0, 0], sizes = [2, 512], strides = [1, 1]} : vector<2x1024xf32> to vector<2x512xf32>
    %35 = vector.extract_strided_slice %5 {offsets = [2, 0], sizes = [2, 512], strides = [1, 1]} : vector<16x512xf32> to vector<2x512xf32>
    %36 = arith.addf %34, %35 : vector<2x512xf32>
    %37 = tpu.concatenate %33, %36 in 0 : vector<2x512xf32>, vector<2x512xf32> -> vector<4x512xf32>
    %38 = tpu.concatenate %25, %21 in 0 : vector<2x128xf32>, vector<2x128xf32> -> vector<4x128xf32>
    %39 = vector.extract_strided_slice %37 {offsets = [0, 0], sizes = [4, 384], strides = [1, 1]} : vector<4x512xf32> to vector<4x384xf32>
    %40 = arith.negf %39 : vector<4x384xf32>
    %41 = math.exp %40 : vector<4x384xf32>
    %cst_14 = arith.constant 1.000000e+00 : f32
    %42 = vector.broadcast %cst_14 : f32 to vector<4x384xf32>
    %43 = arith.addf %42, %41 : vector<4x384xf32>
    %44 = arith.divf %42, %43 : vector<4x384xf32>
    %45 = vector.extract_strided_slice %44 {offsets = [0, 0], sizes = [4, 128], strides = [1, 1]} : vector<4x384xf32> to vector<4x128xf32>
    %46 = vector.extract_strided_slice %44 {offsets = [0, 128], sizes = [4, 128], strides = [1, 1]} : vector<4x384xf32> to vector<4x128xf32>
    %47 = vector.extract_strided_slice %44 {offsets = [0, 256], sizes = [4, 128], strides = [1, 1]} : vector<4x384xf32> to vector<4x128xf32>
    %48 = vector.extract_strided_slice %37 {offsets = [0, 384], sizes = [4, 128], strides = [1, 1]} : vector<4x512xf32> to vector<4x128xf32>
    %49 = math.tanh %48 : vector<4x128xf32>
    %50 = arith.mulf %46, %38 : vector<4x128xf32>
    %51 = arith.mulf %45, %49 : vector<4x128xf32>
    %52 = arith.addf %50, %51 : vector<4x128xf32>
    %53 = math.tanh %52 : vector<4x128xf32>
    %54 = arith.mulf %47, %53 : vector<4x128xf32>
    %55 = vector.extract_strided_slice %54 {offsets = [0, 0], sizes = [2, 128], strides = [1, 1]} : vector<4x128xf32> to vector<2x128xf32>
    %56 = vector.extract_strided_slice %52 {offsets = [0, 0], sizes = [2, 128], strides = [1, 1]} : vector<4x128xf32> to vector<2x128xf32>
    %57 = vector.extract_strided_slice %54 {offsets = [2, 0], sizes = [2, 128], strides = [1, 1]} : vector<4x128xf32> to vector<2x128xf32>
    %58 = vector.extract_strided_slice %52 {offsets = [2, 0], sizes = [2, 128], strides = [1, 1]} : vector<4x128xf32> to vector<2x128xf32>
    %59 = tpu.concatenate %57, %55 in 1 : vector<2x128xf32>, vector<2x128xf32> -> vector<2x256xf32>
    %60 = arith.truncf %59 : vector<2x256xf32> to vector<2x256xbf16>
    %c0_15 = arith.constant 0 : index
    %c0_16 = arith.constant 0 : index
    %61 = vector.load %arg3[%c0_15, %c0_16] : memref<256x1024xbf16, #tpu.memory_space<vmem>>, vector<256x1024xbf16>
    %cst_17 = arith.constant dense<0.000000e+00> : vector<2x1024xf32>
    %62 = tpu.matmul %60, %61, %cst_17 {dimension_numbers = #tpu.dot_dimension_numbers<[1], [0], [0], [1], [0, 0, 1, 1], [], []>} : vector<2x256xbf16>, vector<256x1024xbf16>, vector<2x1024xf32> -> vector<2x1024xf32>
    %63 = vector.extract_strided_slice %62 {offsets = [0, 512], sizes = [2, 512], strides = [1, 1]} : vector<2x1024xf32> to vector<2x512xf32>
    %c0_18 = arith.constant 0 : index
    %c0_19 = arith.constant 0 : index
    %64 = vector.load %arg4[%c0_18, %c0_19] : memref<1x512xf32, #tpu.memory_space<vmem>>, vector<1x512xf32>
    %65 = vector.broadcast %64 : vector<1x512xf32> to vector<2x512xf32>
    %66 = arith.addf %63, %65 : vector<2x512xf32>
    %67 = vector.extract_strided_slice %62 {offsets = [0, 0], sizes = [2, 512], strides = [1, 1]} : vector<2x1024xf32> to vector<2x512xf32>
    %68 = vector.extract_strided_slice %5 {offsets = [4, 0], sizes = [2, 512], strides = [1, 1]} : vector<16x512xf32> to vector<2x512xf32>
    %69 = arith.addf %67, %68 : vector<2x512xf32>
    %70 = tpu.concatenate %66, %69 in 0 : vector<2x512xf32>, vector<2x512xf32> -> vector<4x512xf32>
    %71 = tpu.concatenate %56, %58 in 0 : vector<2x128xf32>, vector<2x128xf32> -> vector<4x128xf32>
    %72 = vector.extract_strided_slice %70 {offsets = [0, 0], sizes = [4, 384], strides = [1, 1]} : vector<4x512xf32> to vector<4x384xf32>
    %73 = arith.negf %72 : vector<4x384xf32>
    %74 = math.exp %73 : vector<4x384xf32>
    %cst_20 = arith.constant 1.000000e+00 : f32
    %75 = vector.broadcast %cst_20 : f32 to vector<4x384xf32>
    %76 = arith.addf %75, %74 : vector<4x384xf32>
    %77 = arith.divf %75, %76 : vector<4x384xf32>
    %78 = vector.extract_strided_slice %77 {offsets = [0, 0], sizes = [4, 128], strides = [1, 1]} : vector<4x384xf32> to vector<4x128xf32>
    %79 = vector.extract_strided_slice %77 {offsets = [0, 128], sizes = [4, 128], strides = [1, 1]} : vector<4x384xf32> to vector<4x128xf32>
    %80 = vector.extract_strided_slice %77 {offsets = [0, 256], sizes = [4, 128], strides = [1, 1]} : vector<4x384xf32> to vector<4x128xf32>
    %81 = vector.extract_strided_slice %70 {offsets = [0, 384], sizes = [4, 128], strides = [1, 1]} : vector<4x512xf32> to vector<4x128xf32>
    %82 = math.tanh %81 : vector<4x128xf32>
    %83 = arith.mulf %79, %71 : vector<4x128xf32>
    %84 = arith.mulf %78, %82 : vector<4x128xf32>
    %85 = arith.addf %83, %84 : vector<4x128xf32>
    %86 = math.tanh %85 : vector<4x128xf32>
    %87 = arith.mulf %80, %86 : vector<4x128xf32>
    %88 = vector.extract_strided_slice %87 {offsets = [0, 0], sizes = [2, 128], strides = [1, 1]} : vector<4x128xf32> to vector<2x128xf32>
    %89 = vector.extract_strided_slice %85 {offsets = [0, 0], sizes = [2, 128], strides = [1, 1]} : vector<4x128xf32> to vector<2x128xf32>
    %90 = vector.extract_strided_slice %87 {offsets = [2, 0], sizes = [2, 128], strides = [1, 1]} : vector<4x128xf32> to vector<2x128xf32>
    %91 = vector.extract_strided_slice %85 {offsets = [2, 0], sizes = [2, 128], strides = [1, 1]} : vector<4x128xf32> to vector<2x128xf32>
    %92 = tpu.concatenate %90, %88 in 1 : vector<2x128xf32>, vector<2x128xf32> -> vector<2x256xf32>
    %93 = arith.truncf %92 : vector<2x256xf32> to vector<2x256xbf16>
    %c0_21 = arith.constant 0 : index
    %c0_22 = arith.constant 0 : index
    %94 = vector.load %arg3[%c0_21, %c0_22] : memref<256x1024xbf16, #tpu.memory_space<vmem>>, vector<256x1024xbf16>
    %cst_23 = arith.constant dense<0.000000e+00> : vector<2x1024xf32>
    %95 = tpu.matmul %93, %94, %cst_23 {dimension_numbers = #tpu.dot_dimension_numbers<[1], [0], [0], [1], [0, 0, 1, 1], [], []>} : vector<2x256xbf16>, vector<256x1024xbf16>, vector<2x1024xf32> -> vector<2x1024xf32>
    %96 = vector.extract_strided_slice %95 {offsets = [0, 512], sizes = [2, 512], strides = [1, 1]} : vector<2x1024xf32> to vector<2x512xf32>
    %c0_24 = arith.constant 0 : index
    %c0_25 = arith.constant 0 : index
    %97 = vector.load %arg4[%c0_24, %c0_25] : memref<1x512xf32, #tpu.memory_space<vmem>>, vector<1x512xf32>
    %98 = vector.broadcast %97 : vector<1x512xf32> to vector<2x512xf32>
    %99 = arith.addf %96, %98 : vector<2x512xf32>
    %100 = vector.extract_strided_slice %95 {offsets = [0, 0], sizes = [2, 512], strides = [1, 1]} : vector<2x1024xf32> to vector<2x512xf32>
    %101 = vector.extract_strided_slice %5 {offsets = [6, 0], sizes = [2, 512], strides = [1, 1]} : vector<16x512xf32> to vector<2x512xf32>
    %102 = arith.addf %100, %101 : vector<2x512xf32>
    %103 = tpu.concatenate %99, %102 in 0 : vector<2x512xf32>, vector<2x512xf32> -> vector<4x512xf32>
    %104 = tpu.concatenate %89, %91 in 0 : vector<2x128xf32>, vector<2x128xf32> -> vector<4x128xf32>
    %105 = vector.extract_strided_slice %103 {offsets = [0, 0], sizes = [4, 384], strides = [1, 1]} : vector<4x512xf32> to vector<4x384xf32>
    %106 = arith.negf %105 : vector<4x384xf32>
    %107 = math.exp %106 : vector<4x384xf32>
    %cst_26 = arith.constant 1.000000e+00 : f32
    %108 = vector.broadcast %cst_26 : f32 to vector<4x384xf32>
    %109 = arith.addf %108, %107 : vector<4x384xf32>
    %110 = arith.divf %108, %109 : vector<4x384xf32>
    %111 = vector.extract_strided_slice %110 {offsets = [0, 0], sizes = [4, 128], strides = [1, 1]} : vector<4x384xf32> to vector<4x128xf32>
    %112 = vector.extract_strided_slice %110 {offsets = [0, 128], sizes = [4, 128], strides = [1, 1]} : vector<4x384xf32> to vector<4x128xf32>
    %113 = vector.extract_strided_slice %110 {offsets = [0, 256], sizes = [4, 128], strides = [1, 1]} : vector<4x384xf32> to vector<4x128xf32>
    %114 = vector.extract_strided_slice %103 {offsets = [0, 384], sizes = [4, 128], strides = [1, 1]} : vector<4x512xf32> to vector<4x128xf32>
    %115 = math.tanh %114 : vector<4x128xf32>
    %116 = arith.mulf %112, %104 : vector<4x128xf32>
    %117 = arith.mulf %111, %115 : vector<4x128xf32>
    %118 = arith.addf %116, %117 : vector<4x128xf32>
    %119 = math.tanh %118 : vector<4x128xf32>
    %120 = arith.mulf %113, %119 : vector<4x128xf32>
    %121 = vector.extract_strided_slice %120 {offsets = [0, 0], sizes = [2, 128], strides = [1, 1]} : vector<4x128xf32> to vector<2x128xf32>
    %122 = vector.extract_strided_slice %118 {offsets = [0, 0], sizes = [2, 128], strides = [1, 1]} : vector<4x128xf32> to vector<2x128xf32>
    %123 = vector.extract_strided_slice %120 {offsets = [2, 0], sizes = [2, 128], strides = [1, 1]} : vector<4x128xf32> to vector<2x128xf32>
    %124 = vector.extract_strided_slice %118 {offsets = [2, 0], sizes = [2, 128], strides = [1, 1]} : vector<4x128xf32> to vector<2x128xf32>
    %125 = tpu.concatenate %123, %121 in 1 : vector<2x128xf32>, vector<2x128xf32> -> vector<2x256xf32>
    %126 = arith.truncf %125 : vector<2x256xf32> to vector<2x256xbf16>
    %c0_27 = arith.constant 0 : index
    %c0_28 = arith.constant 0 : index
    %127 = vector.load %arg3[%c0_27, %c0_28] : memref<256x1024xbf16, #tpu.memory_space<vmem>>, vector<256x1024xbf16>
    %cst_29 = arith.constant dense<0.000000e+00> : vector<2x1024xf32>
    %128 = tpu.matmul %126, %127, %cst_29 {dimension_numbers = #tpu.dot_dimension_numbers<[1], [0], [0], [1], [0, 0, 1, 1], [], []>} : vector<2x256xbf16>, vector<256x1024xbf16>, vector<2x1024xf32> -> vector<2x1024xf32>
    %129 = vector.extract_strided_slice %128 {offsets = [0, 512], sizes = [2, 512], strides = [1, 1]} : vector<2x1024xf32> to vector<2x512xf32>
    %c0_30 = arith.constant 0 : index
    %c0_31 = arith.constant 0 : index
    %130 = vector.load %arg4[%c0_30, %c0_31] : memref<1x512xf32, #tpu.memory_space<vmem>>, vector<1x512xf32>
    %131 = vector.broadcast %130 : vector<1x512xf32> to vector<2x512xf32>
    %132 = arith.addf %129, %131 : vector<2x512xf32>
    %133 = vector.extract_strided_slice %128 {offsets = [0, 0], sizes = [2, 512], strides = [1, 1]} : vector<2x1024xf32> to vector<2x512xf32>
    %134 = vector.extract_strided_slice %5 {offsets = [8, 0], sizes = [2, 512], strides = [1, 1]} : vector<16x512xf32> to vector<2x512xf32>
    %135 = arith.addf %133, %134 : vector<2x512xf32>
    %136 = tpu.concatenate %132, %135 in 0 : vector<2x512xf32>, vector<2x512xf32> -> vector<4x512xf32>
    %137 = tpu.concatenate %122, %124 in 0 : vector<2x128xf32>, vector<2x128xf32> -> vector<4x128xf32>
    %138 = vector.extract_strided_slice %136 {offsets = [0, 0], sizes = [4, 384], strides = [1, 1]} : vector<4x512xf32> to vector<4x384xf32>
    %139 = arith.negf %138 : vector<4x384xf32>
    %140 = math.exp %139 : vector<4x384xf32>
    %cst_32 = arith.constant 1.000000e+00 : f32
    %141 = vector.broadcast %cst_32 : f32 to vector<4x384xf32>
    %142 = arith.addf %141, %140 : vector<4x384xf32>
    %143 = arith.divf %141, %142 : vector<4x384xf32>
    %144 = vector.extract_strided_slice %143 {offsets = [0, 0], sizes = [4, 128], strides = [1, 1]} : vector<4x384xf32> to vector<4x128xf32>
    %145 = vector.extract_strided_slice %143 {offsets = [0, 128], sizes = [4, 128], strides = [1, 1]} : vector<4x384xf32> to vector<4x128xf32>
    %146 = vector.extract_strided_slice %143 {offsets = [0, 256], sizes = [4, 128], strides = [1, 1]} : vector<4x384xf32> to vector<4x128xf32>
    %147 = vector.extract_strided_slice %136 {offsets = [0, 384], sizes = [4, 128], strides = [1, 1]} : vector<4x512xf32> to vector<4x128xf32>
    %148 = math.tanh %147 : vector<4x128xf32>
    %149 = arith.mulf %145, %137 : vector<4x128xf32>
    %150 = arith.mulf %144, %148 : vector<4x128xf32>
    %151 = arith.addf %149, %150 : vector<4x128xf32>
    %152 = math.tanh %151 : vector<4x128xf32>
    %153 = arith.mulf %146, %152 : vector<4x128xf32>
    %154 = vector.extract_strided_slice %153 {offsets = [0, 0], sizes = [2, 128], strides = [1, 1]} : vector<4x128xf32> to vector<2x128xf32>
    %155 = vector.extract_strided_slice %151 {offsets = [0, 0], sizes = [2, 128], strides = [1, 1]} : vector<4x128xf32> to vector<2x128xf32>
    %156 = vector.extract_strided_slice %153 {offsets = [2, 0], sizes = [2, 128], strides = [1, 1]} : vector<4x128xf32> to vector<2x128xf32>
    %157 = vector.extract_strided_slice %151 {offsets = [2, 0], sizes = [2, 128], strides = [1, 1]} : vector<4x128xf32> to vector<2x128xf32>
    %158 = tpu.concatenate %156, %154 in 1 : vector<2x128xf32>, vector<2x128xf32> -> vector<2x256xf32>
    %159 = arith.truncf %158 : vector<2x256xf32> to vector<2x256xbf16>
    %c0_33 = arith.constant 0 : index
    %c0_34 = arith.constant 0 : index
    %160 = vector.load %arg3[%c0_33, %c0_34] : memref<256x1024xbf16, #tpu.memory_space<vmem>>, vector<256x1024xbf16>
    %cst_35 = arith.constant dense<0.000000e+00> : vector<2x1024xf32>
    %161 = tpu.matmul %159, %160, %cst_35 {dimension_numbers = #tpu.dot_dimension_numbers<[1], [0], [0], [1], [0, 0, 1, 1], [], []>} : vector<2x256xbf16>, vector<256x1024xbf16>, vector<2x1024xf32> -> vector<2x1024xf32>
    %162 = vector.extract_strided_slice %161 {offsets = [0, 512], sizes = [2, 512], strides = [1, 1]} : vector<2x1024xf32> to vector<2x512xf32>
    %c0_36 = arith.constant 0 : index
    %c0_37 = arith.constant 0 : index
    %163 = vector.load %arg4[%c0_36, %c0_37] : memref<1x512xf32, #tpu.memory_space<vmem>>, vector<1x512xf32>
    %164 = vector.broadcast %163 : vector<1x512xf32> to vector<2x512xf32>
    %165 = arith.addf %162, %164 : vector<2x512xf32>
    %166 = vector.extract_strided_slice %161 {offsets = [0, 0], sizes = [2, 512], strides = [1, 1]} : vector<2x1024xf32> to vector<2x512xf32>
    %167 = vector.extract_strided_slice %5 {offsets = [10, 0], sizes = [2, 512], strides = [1, 1]} : vector<16x512xf32> to vector<2x512xf32>
    %168 = arith.addf %166, %167 : vector<2x512xf32>
    %169 = tpu.concatenate %165, %168 in 0 : vector<2x512xf32>, vector<2x512xf32> -> vector<4x512xf32>
    %170 = tpu.concatenate %155, %157 in 0 : vector<2x128xf32>, vector<2x128xf32> -> vector<4x128xf32>
    %171 = vector.extract_strided_slice %169 {offsets = [0, 0], sizes = [4, 384], strides = [1, 1]} : vector<4x512xf32> to vector<4x384xf32>
    %172 = arith.negf %171 : vector<4x384xf32>
    %173 = math.exp %172 : vector<4x384xf32>
    %cst_38 = arith.constant 1.000000e+00 : f32
    %174 = vector.broadcast %cst_38 : f32 to vector<4x384xf32>
    %175 = arith.addf %174, %173 : vector<4x384xf32>
    %176 = arith.divf %174, %175 : vector<4x384xf32>
    %177 = vector.extract_strided_slice %176 {offsets = [0, 0], sizes = [4, 128], strides = [1, 1]} : vector<4x384xf32> to vector<4x128xf32>
    %178 = vector.extract_strided_slice %176 {offsets = [0, 128], sizes = [4, 128], strides = [1, 1]} : vector<4x384xf32> to vector<4x128xf32>
    %179 = vector.extract_strided_slice %176 {offsets = [0, 256], sizes = [4, 128], strides = [1, 1]} : vector<4x384xf32> to vector<4x128xf32>
    %180 = vector.extract_strided_slice %169 {offsets = [0, 384], sizes = [4, 128], strides = [1, 1]} : vector<4x512xf32> to vector<4x128xf32>
    %181 = math.tanh %180 : vector<4x128xf32>
    %182 = arith.mulf %178, %170 : vector<4x128xf32>
    %183 = arith.mulf %177, %181 : vector<4x128xf32>
    %184 = arith.addf %182, %183 : vector<4x128xf32>
    %185 = math.tanh %184 : vector<4x128xf32>
    %186 = arith.mulf %179, %185 : vector<4x128xf32>
    %187 = vector.extract_strided_slice %186 {offsets = [0, 0], sizes = [2, 128], strides = [1, 1]} : vector<4x128xf32> to vector<2x128xf32>
    %188 = vector.extract_strided_slice %184 {offsets = [0, 0], sizes = [2, 128], strides = [1, 1]} : vector<4x128xf32> to vector<2x128xf32>
    %189 = vector.extract_strided_slice %186 {offsets = [2, 0], sizes = [2, 128], strides = [1, 1]} : vector<4x128xf32> to vector<2x128xf32>
    %190 = vector.extract_strided_slice %184 {offsets = [2, 0], sizes = [2, 128], strides = [1, 1]} : vector<4x128xf32> to vector<2x128xf32>
    %191 = tpu.concatenate %189, %187 in 1 : vector<2x128xf32>, vector<2x128xf32> -> vector<2x256xf32>
    %192 = arith.truncf %191 : vector<2x256xf32> to vector<2x256xbf16>
    %c0_39 = arith.constant 0 : index
    %c0_40 = arith.constant 0 : index
    %193 = vector.load %arg3[%c0_39, %c0_40] : memref<256x1024xbf16, #tpu.memory_space<vmem>>, vector<256x1024xbf16>
    %cst_41 = arith.constant dense<0.000000e+00> : vector<2x1024xf32>
    %194 = tpu.matmul %192, %193, %cst_41 {dimension_numbers = #tpu.dot_dimension_numbers<[1], [0], [0], [1], [0, 0, 1, 1], [], []>} : vector<2x256xbf16>, vector<256x1024xbf16>, vector<2x1024xf32> -> vector<2x1024xf32>
    %195 = vector.extract_strided_slice %194 {offsets = [0, 512], sizes = [2, 512], strides = [1, 1]} : vector<2x1024xf32> to vector<2x512xf32>
    %c0_42 = arith.constant 0 : index
    %c0_43 = arith.constant 0 : index
    %196 = vector.load %arg4[%c0_42, %c0_43] : memref<1x512xf32, #tpu.memory_space<vmem>>, vector<1x512xf32>
    %197 = vector.broadcast %196 : vector<1x512xf32> to vector<2x512xf32>
    %198 = arith.addf %195, %197 : vector<2x512xf32>
    %199 = vector.extract_strided_slice %194 {offsets = [0, 0], sizes = [2, 512], strides = [1, 1]} : vector<2x1024xf32> to vector<2x512xf32>
    %200 = vector.extract_strided_slice %5 {offsets = [12, 0], sizes = [2, 512], strides = [1, 1]} : vector<16x512xf32> to vector<2x512xf32>
    %201 = arith.addf %199, %200 : vector<2x512xf32>
    %202 = tpu.concatenate %198, %201 in 0 : vector<2x512xf32>, vector<2x512xf32> -> vector<4x512xf32>
    %203 = tpu.concatenate %188, %190 in 0 : vector<2x128xf32>, vector<2x128xf32> -> vector<4x128xf32>
    %204 = vector.extract_strided_slice %202 {offsets = [0, 0], sizes = [4, 384], strides = [1, 1]} : vector<4x512xf32> to vector<4x384xf32>
    %205 = arith.negf %204 : vector<4x384xf32>
    %206 = math.exp %205 : vector<4x384xf32>
    %cst_44 = arith.constant 1.000000e+00 : f32
    %207 = vector.broadcast %cst_44 : f32 to vector<4x384xf32>
    %208 = arith.addf %207, %206 : vector<4x384xf32>
    %209 = arith.divf %207, %208 : vector<4x384xf32>
    %210 = vector.extract_strided_slice %209 {offsets = [0, 0], sizes = [4, 128], strides = [1, 1]} : vector<4x384xf32> to vector<4x128xf32>
    %211 = vector.extract_strided_slice %209 {offsets = [0, 128], sizes = [4, 128], strides = [1, 1]} : vector<4x384xf32> to vector<4x128xf32>
    %212 = vector.extract_strided_slice %209 {offsets = [0, 256], sizes = [4, 128], strides = [1, 1]} : vector<4x384xf32> to vector<4x128xf32>
    %213 = vector.extract_strided_slice %202 {offsets = [0, 384], sizes = [4, 128], strides = [1, 1]} : vector<4x512xf32> to vector<4x128xf32>
    %214 = math.tanh %213 : vector<4x128xf32>
    %215 = arith.mulf %211, %203 : vector<4x128xf32>
    %216 = arith.mulf %210, %214 : vector<4x128xf32>
    %217 = arith.addf %215, %216 : vector<4x128xf32>
    %218 = math.tanh %217 : vector<4x128xf32>
    %219 = arith.mulf %212, %218 : vector<4x128xf32>
    %220 = vector.extract_strided_slice %219 {offsets = [0, 0], sizes = [2, 128], strides = [1, 1]} : vector<4x128xf32> to vector<2x128xf32>
    %221 = vector.extract_strided_slice %217 {offsets = [0, 0], sizes = [2, 128], strides = [1, 1]} : vector<4x128xf32> to vector<2x128xf32>
    %222 = vector.extract_strided_slice %219 {offsets = [2, 0], sizes = [2, 128], strides = [1, 1]} : vector<4x128xf32> to vector<2x128xf32>
    %223 = vector.extract_strided_slice %217 {offsets = [2, 0], sizes = [2, 128], strides = [1, 1]} : vector<4x128xf32> to vector<2x128xf32>
    %224 = tpu.concatenate %222, %220 in 1 : vector<2x128xf32>, vector<2x128xf32> -> vector<2x256xf32>
    %225 = arith.truncf %224 : vector<2x256xf32> to vector<2x256xbf16>
    %c0_45 = arith.constant 0 : index
    %c0_46 = arith.constant 0 : index
    %226 = vector.load %arg3[%c0_45, %c0_46] : memref<256x1024xbf16, #tpu.memory_space<vmem>>, vector<256x1024xbf16>
    %cst_47 = arith.constant dense<0.000000e+00> : vector<2x1024xf32>
    %227 = tpu.matmul %225, %226, %cst_47 {dimension_numbers = #tpu.dot_dimension_numbers<[1], [0], [0], [1], [0, 0, 1, 1], [], []>} : vector<2x256xbf16>, vector<256x1024xbf16>, vector<2x1024xf32> -> vector<2x1024xf32>
    %228 = vector.extract_strided_slice %227 {offsets = [0, 512], sizes = [2, 512], strides = [1, 1]} : vector<2x1024xf32> to vector<2x512xf32>
    %c0_48 = arith.constant 0 : index
    %c0_49 = arith.constant 0 : index
    %229 = vector.load %arg4[%c0_48, %c0_49] : memref<1x512xf32, #tpu.memory_space<vmem>>, vector<1x512xf32>
    %230 = vector.broadcast %229 : vector<1x512xf32> to vector<2x512xf32>
    %231 = arith.addf %228, %230 : vector<2x512xf32>
    %232 = vector.extract_strided_slice %227 {offsets = [0, 0], sizes = [2, 512], strides = [1, 1]} : vector<2x1024xf32> to vector<2x512xf32>
    %233 = vector.extract_strided_slice %5 {offsets = [14, 0], sizes = [2, 512], strides = [1, 1]} : vector<16x512xf32> to vector<2x512xf32>
    %234 = arith.addf %232, %233 : vector<2x512xf32>
    %235 = tpu.concatenate %231, %234 in 0 : vector<2x512xf32>, vector<2x512xf32> -> vector<4x512xf32>
    %236 = tpu.concatenate %221, %223 in 0 : vector<2x128xf32>, vector<2x128xf32> -> vector<4x128xf32>
    %237 = vector.extract_strided_slice %235 {offsets = [0, 0], sizes = [4, 384], strides = [1, 1]} : vector<4x512xf32> to vector<4x384xf32>
    %238 = arith.negf %237 : vector<4x384xf32>
    %239 = math.exp %238 : vector<4x384xf32>
    %cst_50 = arith.constant 1.000000e+00 : f32
    %240 = vector.broadcast %cst_50 : f32 to vector<4x384xf32>
    %241 = arith.addf %240, %239 : vector<4x384xf32>
    %242 = arith.divf %240, %241 : vector<4x384xf32>
    %243 = vector.extract_strided_slice %242 {offsets = [0, 0], sizes = [4, 128], strides = [1, 1]} : vector<4x384xf32> to vector<4x128xf32>
    %244 = vector.extract_strided_slice %242 {offsets = [0, 128], sizes = [4, 128], strides = [1, 1]} : vector<4x384xf32> to vector<4x128xf32>
    %245 = vector.extract_strided_slice %242 {offsets = [0, 256], sizes = [4, 128], strides = [1, 1]} : vector<4x384xf32> to vector<4x128xf32>
    %246 = vector.extract_strided_slice %235 {offsets = [0, 384], sizes = [4, 128], strides = [1, 1]} : vector<4x512xf32> to vector<4x128xf32>
    %247 = math.tanh %246 : vector<4x128xf32>
    %248 = arith.mulf %244, %236 : vector<4x128xf32>
    %249 = arith.mulf %243, %247 : vector<4x128xf32>
    %250 = arith.addf %248, %249 : vector<4x128xf32>
    %251 = math.tanh %250 : vector<4x128xf32>
    %252 = arith.mulf %245, %251 : vector<4x128xf32>
    %253 = vector.extract_strided_slice %252 {offsets = [0, 0], sizes = [2, 128], strides = [1, 1]} : vector<4x128xf32> to vector<2x128xf32>
    %254 = vector.extract_strided_slice %250 {offsets = [0, 0], sizes = [2, 128], strides = [1, 1]} : vector<4x128xf32> to vector<2x128xf32>
    %255 = vector.extract_strided_slice %252 {offsets = [2, 0], sizes = [2, 128], strides = [1, 1]} : vector<4x128xf32> to vector<2x128xf32>
    %256 = tpu.concatenate %255, %253 in 1 : vector<2x128xf32>, vector<2x128xf32> -> vector<2x256xf32>
    %257 = arith.truncf %256 : vector<2x256xf32> to vector<2x256xbf16>
    %c0_51 = arith.constant 0 : index
    %c0_52 = arith.constant 0 : index
    %258 = vector.load %arg3[%c0_51, %c0_52] : memref<256x1024xbf16, #tpu.memory_space<vmem>>, vector<256x1024xbf16>
    %cst_53 = arith.constant dense<0.000000e+00> : vector<2x1024xf32>
    %259 = tpu.matmul %257, %258, %cst_53 {dimension_numbers = #tpu.dot_dimension_numbers<[1], [0], [0], [1], [0, 0, 1, 1], [], []>} : vector<2x256xbf16>, vector<256x1024xbf16>, vector<2x1024xf32> -> vector<2x1024xf32>
    %260 = vector.extract_strided_slice %259 {offsets = [0, 512], sizes = [2, 512], strides = [1, 1]} : vector<2x1024xf32> to vector<2x512xf32>
    %c0_54 = arith.constant 0 : index
    %c0_55 = arith.constant 0 : index
    %261 = vector.load %arg4[%c0_54, %c0_55] : memref<1x512xf32, #tpu.memory_space<vmem>>, vector<1x512xf32>
    %262 = vector.broadcast %261 : vector<1x512xf32> to vector<2x512xf32>
    %263 = arith.addf %260, %262 : vector<2x512xf32>
    %264 = vector.extract_strided_slice %263 {offsets = [0, 0], sizes = [2, 384], strides = [1, 1]} : vector<2x512xf32> to vector<2x384xf32>
    %265 = arith.negf %264 : vector<2x384xf32>
    %266 = math.exp %265 : vector<2x384xf32>
    %cst_56 = arith.constant 1.000000e+00 : f32
    %267 = vector.broadcast %cst_56 : f32 to vector<2x384xf32>
    %268 = arith.addf %267, %266 : vector<2x384xf32>
    %269 = arith.divf %267, %268 : vector<2x384xf32>
    %270 = vector.extract_strided_slice %269 {offsets = [0, 0], sizes = [2, 128], strides = [1, 1]} : vector<2x384xf32> to vector<2x128xf32>
    %271 = vector.extract_strided_slice %269 {offsets = [0, 128], sizes = [2, 128], strides = [1, 1]} : vector<2x384xf32> to vector<2x128xf32>
    %272 = vector.extract_strided_slice %269 {offsets = [0, 256], sizes = [2, 128], strides = [1, 1]} : vector<2x384xf32> to vector<2x128xf32>
    %273 = vector.extract_strided_slice %263 {offsets = [0, 384], sizes = [2, 128], strides = [1, 1]} : vector<2x512xf32> to vector<2x128xf32>
    %274 = math.tanh %273 : vector<2x128xf32>
    %275 = arith.mulf %271, %254 : vector<2x128xf32>
    %276 = arith.mulf %270, %274 : vector<2x128xf32>
    %277 = arith.addf %275, %276 : vector<2x128xf32>
    %278 = math.tanh %277 : vector<2x128xf32>
    %279 = arith.mulf %272, %278 : vector<2x128xf32>
    %280 = arith.truncf %279 : vector<2x128xf32> to vector<2x128xbf16>
    %c0_57 = arith.constant 0 : index
    %c0_58 = arith.constant 0 : index
    %281 = vector.load %arg5[%c0_57, %c0_58] : memref<128x8xbf16, #tpu.memory_space<vmem>>, vector<128x8xbf16>
    %cst_59 = arith.constant dense<0.000000e+00> : vector<2x8xf32>
    %282 = tpu.matmul %280, %281, %cst_59 {dimension_numbers = #tpu.dot_dimension_numbers<[1], [0], [0], [1], [0, 0, 1, 1], [], []>} : vector<2x128xbf16>, vector<128x8xbf16>, vector<2x8xf32> -> vector<2x8xf32>
    %c0_60 = arith.constant 0 : index
    %c0_61 = arith.constant 0 : index
    %283 = vector.load %arg6[%c0_60, %c0_61] : memref<1x8xf32, #tpu.memory_space<vmem>>, vector<1x8xf32>
    %284 = vector.broadcast %283 : vector<1x8xf32> to vector<2x8xf32>
    %285 = arith.addf %282, %284 : vector<2x8xf32>
    %286 = arith.negf %285 : vector<2x8xf32>
    %287 = math.exp %286 : vector<2x8xf32>
    %cst_62 = arith.constant 1.000000e+00 : f32
    %288 = vector.broadcast %cst_62 : f32 to vector<2x8xf32>
    %289 = arith.addf %288, %287 : vector<2x8xf32>
    %290 = arith.divf %288, %289 : vector<2x8xf32>
    %c0_63 = arith.constant 0 : index
    %c0_64 = arith.constant 0 : index
    %291 = vector.load %arg7[%c0_63, %c0_64] : memref<2x8xf32, #tpu.memory_space<vmem>>, vector<2x8xf32>
    tpu.vector_store %arg7[%c0_63, %c0_64], %290 {strides = array<i32>} : memref<2x8xf32, #tpu.memory_space<vmem>>, vector<2x8xf32>,
    return
  }
}

</mosaic_0001>

<llo_original>
// kernel: lstm_forward.1
$region0: #{lstm_forward.1}
  #allocation0 [shape = 'u32[]', space=smem, size = 0x4, offset = 0x4, fixed_abs, tag = 'smem constant byte address 0x4 - core index']
  #allocation1 [shape = 'u32[144,128]{1,0:T(1,128)}', space=vmem, size = 0x12000, scoped, tag = 'internal scratch']
  %s0 = inlined_call_operand.vmem [shape: bf16[16,32], index: 0, kind: input, shape index: {}]
  %s1 = inlined_call_operand.vmem [shape: bf16[32,512], index: 1, kind: input, shape index: {}]
  %s2 = inlined_call_operand.vmem [shape: f32[1,512], index: 2, kind: input, shape index: {}]
  %s3 = inlined_call_operand.hbm [shape: bf16[256,1024], index: 3, kind: input, shape index: {}]
  %s4 = inlined_call_operand.vmem [shape: f32[1,512], index: 4, kind: input, shape index: {}]
  %s5 = inlined_call_operand.vmem [shape: bf16[128,8], index: 5, kind: input, shape index: {}]
  %s6 = inlined_call_operand.vmem [shape: f32[1,8], index: 6, kind: input, shape index: {}]
  %s7 = inlined_call_operand.hbm [shape: f32[2,8], index: 7, kind: output, shape index: {}]
  %s8 = sld [smem:[#allocation0]]
  $region42: #{lstm_forward.1} parent=0
    _
  %s10 = ssub.s32 1, %s8
  %s11 = scalar_select 0, %s10, %s8
  $region1: #{lstm_forward.1} parent=0
    #allocation2 [shape = 'u8[524288]{0}', space=vmem, size = 0x80000, scoped, tag = 'input window, operand 3, single buffered']
    #allocation3 [shape = 's32[1]{0}', space=sflag, size = 0x4, scoped, tag = 'scoped memory for lstm_forward.1']
    #allocation4 [shape = 's32[1]{0}', space=sflag, size = 0x4, scoped, tag = 'scoped memory for lstm_forward.1']
    #allocation5 [shape = 'u8[1024]{0}', space=vmem, size = 0x400, scoped, tag = 'output window, operand 0, single buffered']
    %12 = vsyncpa [#allocation3], 0
    %13 = vsyncpa [#allocation4], 0
    // Predicated region
    $region2: #{lstm_forward.1} parent=1 // pred_check
      _
    $region3: #{lstm_forward.1} parent=1 // pred_check_branch
      %15 = sbr.rel (0) target = $region5
    $region4: #{lstm_forward.1} parent=1 // pred_region
      _
    $region5: #{lstm_forward.1} parent=1 // pred_fallthru
      _
    // Predicated region
    $region6: #{lstm_forward.1} parent=1 // pred_check
      _
    $region7: #{lstm_forward.1} parent=1 // pred_check_branch
      %17 = sbr.rel (0) target = $region9
    $region8: #{lstm_forward.1} parent=1 // pred_region
      _
    $region9: #{lstm_forward.1} parent=1 // pred_fallthru
      _
    // Predicated region
    $region10: #{lstm_forward.1} parent=1 // pred_check
      _
    $region11: #{lstm_forward.1} parent=1 // pred_check_branch
      %19 = sbr.rel (0) target = $region13
    $region12: #{lstm_forward.1} parent=1 // pred_region
      _
    $region13: #{lstm_forward.1} parent=1 // pred_fallthru
      _
    // Predicated region
    $region14: #{lstm_forward.1} parent=1 // pred_check
      _
    $region15: #{lstm_forward.1} parent=1 // pred_check_branch
      %21 = sbr.rel (0) target = $region17
    $region16: #{lstm_forward.1} parent=1 // pred_region
      %s23 = ssub.s32 16384, 16384
      %24 = vsyncadd [#allocation3], %s23
      %s25 = sshll.u32 [#allocation2], 4
      %s26 = int_to_ptr.vmem [resolvable:$true] %s25
      %31 = dma.hbm_to_vmem [thread:$0]  %s3, 16384, %s26, [#allocation3], 512, 512, 32
    $region17: #{lstm_forward.1} parent=1 // pred_fallthru
      _
    // Predicated region
    $region18: #{lstm_forward.1} parent=1 // pred_check
      _
    $region19: #{lstm_forward.1} parent=1 // pred_check_branch
      %33 = sbr.rel (0) target = $region21
    $region20: #{lstm_forward.1} parent=1 // pred_region
      _
    $region21: #{lstm_forward.1} parent=1 // pred_fallthru
      _
    // Predicated region
    $region22: #{lstm_forward.1} parent=1 // pred_check
      _
    $region23: #{lstm_forward.1} parent=1 // pred_check_branch
      %35 = sbr.rel (0) target = $region25
    $region24: #{lstm_forward.1} parent=1 // pred_region
      _
    $region25: #{lstm_forward.1} parent=1 // pred_fallthru
      _
    // Predicated region
    $region26: #{lstm_forward.1} parent=1 // pred_check
      _
    $region27: #{lstm_forward.1} parent=1 // pred_check_branch
      %37 = sbr.rel (0) target = $region29
    $region28: #{lstm_forward.1} parent=1 // pred_region
      _
    $region29: #{lstm_forward.1} parent=1 // pred_fallthru
      _
    // Predicated region
    $region30: #{lstm_forward.1} parent=1 // pred_check
      _
    $region31: #{lstm_forward.1} parent=1 // pred_check_branch
      %39 = sbr.rel (0) target = $region33
    $region32: #{lstm_forward.1} parent=1 // pred_region
      %40 = dma.done [#allocation3], 16384
    $region33: #{lstm_forward.1} parent=1 // pred_fallthru
      _
    %v42 = vld [vmem:[%s0] sm:$0xf]
    %v43 = vld [vmem:[%s0 + $0x4] sm:$0xf]
    %v44 = vld [vmem:[%s1] sm:$0xff]
    %v45 = vld [vmem:[%s1 + $0x8] sm:$0xff]
    %v46 = vld [vmem:[%s1 + $0x10] sm:$0xff]
    %v47 = vld [vmem:[%s1 + $0x18] sm:$0xff]
    %v48 = vld [vmem:[%s1 + $0x20] sm:$0xff]
    %v49 = vld [vmem:[%s1 + $0x28] sm:$0xff]
    %v50 = vld [vmem:[%s1 + $0x30] sm:$0xff]
    %v51 = vld [vmem:[%s1 + $0x38] sm:$0xff]
    %v52 = vld [vmem:[%s2] sm:$0xf]
    %v54 = vlaneseq
    %v55 = vshrl.u32 %v54, 7
    %v56 = vsub.s32 0, %v55
    %v57 = vrot.slane %v52, %v56
    %v58 = vlaneseq
    %v59 = vshrl.u32 %v58, 7
    %v60 = vsub.s32 1, %v59
    %v61 = vrot.slane %v52, %v60
    %v62 = vlaneseq
    %v63 = vshrl.u32 %v62, 7
    %v64 = vsub.s32 2, %v63
    %v65 = vrot.slane %v52, %v64
    %v66 = vlaneseq
    %v67 = vshrl.u32 %v66, 7
    %v68 = vsub.s32 3, %v67
    %v69 = vrot.slane %v52, %v68
    %v76 = vunpack.c.l.b16 %v42
    %v77 = vunpack.c.l.b16 %v43
    %v78 = vpack.c.b16 %v77, %v76
    %v87 = vunpack.c.l.b16 %v44
    %v88 = vunpack.c.h.b16 %v44
    %v89 = vunpack.c.l.b16 %v45
    %v90 = vunpack.c.h.b16 %v45
    %v91 = vunpack.c.l.b16 %v46
    %v92 = vunpack.c.h.b16 %v46
    %v93 = vunpack.c.l.b16 %v47
    %v94 = vunpack.c.h.b16 %v47
    %v95 = vunpack.c.l.b16 %v48
    %v96 = vunpack.c.h.b16 %v48
    %v97 = vunpack.c.l.b16 %v49
    %v98 = vunpack.c.h.b16 %v49
    %v99 = vunpack.c.l.b16 %v50
    %v100 = vunpack.c.h.b16 %v50
    %v101 = vunpack.c.l.b16 %v51
    %v102 = vunpack.c.h.b16 %v51
    %v103 = vpack.c.b16 %v91, %v87
    %v104 = vpack.c.b16 %v92, %v88
    %v105 = vpack.c.b16 %v93, %v89
    %v106 = vpack.c.b16 %v94, %v90
    %v107 = vpack.c.b16 %v99, %v95
    %v108 = vpack.c.b16 %v100, %v96
    %v109 = vpack.c.b16 %v101, %v97
    %v110 = vpack.c.b16 %v102, %v98
    %vm119 = vcmask 261120
    %v121 = vsel %vm119, %v78, 0
    %123 = vmatprep.subr.bf16.mxu0 0
    %124 = vmatpush1.bf16.msra.mxu0 0
    %125 = vmatprep.subr.bf16.mxu0 0
    %126 = vmatpush1.bf16.msra.mxu0 0
    %127 = vmatprep.subr.bf16.mxu0 0
    %128 = vmatpush1.bf16.msra.mxu0 0
    %129 = vmatprep.subr.bf16.mxu0 0
    %130 = vmatpush1.bf16.msra.mxu0 0
    %131 = vmatprep.subr.bf16.mxu0 0
    %132 = vmatpush1.bf16.msra.mxu0 0
    %133 = vmatprep.subr.bf16.mxu0 0
    %134 = vmatpush1.bf16.msra.mxu0 0
    %135 = vmatprep.subr.bf16.mxu0 %v108
    %136 = vmatpush1.bf16.msra.mxu0 %v107
    %137 = vmatprep.subr.bf16.mxu0 %v104
    %138 = vmatpush1.bf16.msra.mxu0 %v103
    %139 = vmatprep.subr.bf16.mxu0 0
    %140 = vmatpush2.bf16.msra.mxu0 0
    %141 = vmatprep.subr.bf16.mxu0 0
    %142 = vmatpush2.bf16.msra.mxu0 0
    %143 = vmatprep.subr.bf16.mxu0 0
    %144 = vmatpush2.bf16.msra.mxu0 0
    %145 = vmatprep.subr.bf16.mxu0 0
    %146 = vmatpush2.bf16.msra.mxu0 0
    %147 = vmatprep.subr.bf16.mxu0 0
    %148 = vmatpush2.bf16.msra.mxu0 0
    %149 = vmatprep.subr.bf16.mxu0 0
    %150 = vmatpush2.bf16.msra.mxu0 0
    %151 = vmatprep.subr.bf16.mxu0 0
    %152 = vmatpush2.bf16.msra.mxu0 0
    %153 = vmatprep.subr.bf16.mxu0 0
    %154 = vmatpush2.bf16.msra.mxu0 0
    %155 = vmatprep.mubr.bf16.mxu0 0
    %156 = vmatmul.mubr.bf16.gmra.mxu0 %v121
    %v157 = vpop.f32.mrf.mxu0
    %v158 = vadd.f32 %v57, %v157
    %v159 = vpop.f32.mrf.mxu0
    %v160 = vadd.f32 %v61, %v159
    %v161 = vpop.f32.mrf.mxu0
    %v162 = vadd.f32 %v57, %v161
    %v163 = vpop.f32.mrf.mxu0
    %v164 = vadd.f32 %v61, %v163
    %165 = vdwg.mxu0
    %166 = vmatprep.subr.bf16.mxu0 0
    %167 = vmatpush1.bf16.msra.mxu0 0
    %168 = vmatprep.subr.bf16.mxu0 0
    %169 = vmatpush1.bf16.msra.mxu0 0
    %170 = vmatprep.subr.bf16.mxu0 0
    %171 = vmatpush1.bf16.msra.mxu0 0
    %172 = vmatprep.subr.bf16.mxu0 0
    %173 = vmatpush1.bf16.msra.mxu0 0
    %174 = vmatprep.subr.bf16.mxu0 0
    %175 = vmatpush1.bf16.msra.mxu0 0
    %176 = vmatprep.subr.bf16.mxu0 0
    %177 = vmatpush1.bf16.msra.mxu0 0
    %178 = vmatprep.subr.bf16.mxu0 %v110
    %179 = vmatpush1.bf16.msra.mxu0 %v109
    %180 = vmatprep.subr.bf16.mxu0 %v106
    %181 = vmatpush1.bf16.msra.mxu0 %v105
    %182 = vmatprep.subr.bf16.mxu0 0
    %183 = vmatpush2.bf16.msra.mxu0 0
    %184 = vmatprep.subr.bf16.mxu0 0
    %185 = vmatpush2.bf16.msra.mxu0 0
    %186 = vmatprep.subr.bf16.mxu0 0
    %187 = vmatpush2.bf16.msra.mxu0 0
    %188 = vmatprep.subr.bf16.mxu0 0
    %189 = vmatpush2.bf16.msra.mxu0 0
    %190 = vmatprep.subr.bf16.mxu0 0
    %191 = vmatpush2.bf16.msra.mxu0 0
    %192 = vmatprep.subr.bf16.mxu0 0
    %193 = vmatpush2.bf16.msra.mxu0 0
    %194 = vmatprep.subr.bf16.mxu0 0
    %195 = vmatpush2.bf16.msra.mxu0 0
    %196 = vmatprep.subr.bf16.mxu0 0
    %197 = vmatpush2.bf16.msra.mxu0 0
    %198 = vmatprep.mubr.bf16.mxu0 0
    %199 = vmatmul.mubr.bf16.gmra.mxu0 %v121
    %v200 = vpop.f32.mrf.mxu0
    %v201 = vadd.f32 %v65, %v200
    %v202 = vpop.f32.mrf.mxu0
    %v203 = vadd.f32 %v69, %v202
    %v204 = vpop.f32.mrf.mxu0
    %v205 = vadd.f32 %v65, %v204
    %v206 = vpop.f32.mrf.mxu0
    %v207 = vadd.f32 %v69, %v206
    %208 = vdwg.mxu0
    %v209 = vxor.u32 %v158, 2147483648
    %v210 = vxor.u32 %v160, 2147483648
    %v211 = vxor.u32 %v201, 2147483648
    %v212 = vmul.f32 %v209, 1.442695
    %v213 = vpow.pop %v212
    %v214 = vmul.f32 %v210, 1.442695
    %v215 = vpow.pop %v214
    %v216 = vmul.f32 %v211, 1.442695
    %v217 = vpow.pop %v216
    %v218 = vadd.f32 %v213, 1.0
    %v219 = vadd.f32 %v215, 1.0
    %v220 = vadd.f32 %v217, 1.0
    %v221 = vrcp.pop %v218
    %v222 = vmul.f32 1.0, %v221
    %v223 = vrcp.pop %v219
    %v224 = vmul.f32 1.0, %v223
    %v225 = vrcp.pop %v220
    %v226 = vmul.f32 1.0, %v225
    %v227 = vtanh.pop %v203
    %v228 = vmul.f32 %v224, 0.0
    %v229 = vmul.f32 %v222, %v227
    %v230 = vadd.f32 %v228, %v229
    %v231 = vtanh.pop %v230
    %v232 = vmul.f32 %v226, %v231
    %v233 = vpack.c.bf16 %v232, %v232
    %v234 = vpack.c.bf16 0.0, 0.0
    %v235 = vld [vmem:[#allocation2] sm:$0xff]
    %v236 = vld [vmem:[#allocation2 + $0x8] sm:$0xff]
    %v237 = vld [vmem:[#allocation2 + $0x10] sm:$0xff]
    %v238 = vld [vmem:[#allocation2 + $0x18] sm:$0xff]
    %v239 = vld [vmem:[#allocation2 + $0x20] sm:$0xff]
    %v240 = vld [vmem:[#allocation2 + $0x28] sm:$0xff]
    %v241 = vld [vmem:[#allocation2 + $0x30] sm:$0xff]
    %v242 = vld [vmem:[#allocation2 + $0x38] sm:$0xff]
    %v243 = vld [vmem:[#allocation2 + $0x40] sm:$0xff]
    %v244 = vld [vmem:[#allocation2 + $0x48] sm:$0xff]
    %v245 = vld [vmem:[#allocation2 + $0x50] sm:$0xff]
    %v246 = vld [vmem:[#allocation2 + $0x58] sm:$0xff]
    %v247 = vld [vmem:[#allocation2 + $0x60] sm:$0xff]
    %v248 = vld [vmem:[#allocation2 + $0x68] sm:$0xff]
    %v249 = vld [vmem:[#allocation2 + $0x70] sm:$0xff]
    %v250 = vld [vmem:[#allocation2 + $0x78] sm:$0xff]
    %v251 = vld [vmem:[#allocation2 + $0x80] sm:$0xff]
    %v252 = vld [vmem:[#allocation2 + $0x88] sm:$0xff]
    %v253 = vld [vmem:[#allocation2 + $0x90] sm:$0xff]
    %v254 = vld [vmem:[#allocation2 + $0x98] sm:$0xff]
    %v255 = vld [vmem:[#allocation2 + $0xa0] sm:$0xff]
    %v256 = vld [vmem:[#allocation2 + $0xa8] sm:$0xff]
    %v257 = vld [vmem:[#allocation2 + $0xb0] sm:$0xff]
    %v258 = vld [vmem:[#allocation2 + $0xb8] sm:$0xff]
    %v259 = vld [vmem:[#allocation2 + $0xc0] sm:$0xff]
    %v260 = vld [vmem:[#allocation2 + $0xc8] sm:$0xff]
    %v261 = vld [vmem:[#allocation2 + $0xd0] sm:$0xff]
    %v262 = vld [vmem:[#allocation2 + $0xd8] sm:$0xff]
    %v263 = vld [vmem:[#allocation2 + $0xe0] sm:$0xff]
    %v264 = vld [vmem:[#allocation2 + $0xe8] sm:$0xff]
    %v265 = vld [vmem:[#allocation2 + $0xf0] sm:$0xff]
    %v266 = vld [vmem:[#allocation2 + $0xf8] sm:$0xff]
    %v267 = vld [vmem:[#allocation2 + $0x100] sm:$0xff]
    %v268 = vld [vmem:[#allocation2 + $0x108] sm:$0xff]
    %v269 = vld [vmem:[#allocation2 + $0x110] sm:$0xff]
    %v270 = vld [vmem:[#allocation2 + $0x118] sm:$0xff]
    %v271 = vld [vmem:[#allocation2 + $0x120] sm:$0xff]
    %v272 = vld [vmem:[#allocation2 + $0x128] sm:$0xff]
    %v273 = vld [vmem:[#allocation2 + $0x130] sm:$0xff]
    %v274 = vld [vmem:[#allocation2 + $0x138] sm:$0xff]
    %v275 = vld [vmem:[#allocation2 + $0x140] sm:$0xff]
    %v276 = vld [vmem:[#allocation2 + $0x148] sm:$0xff]
    %v277 = vld [vmem:[#allocation2 + $0x150] sm:$0xff]
    %v278 = vld [vmem:[#allocation2 + $0x158] sm:$0xff]
    %v279 = vld [vmem:[#allocation2 + $0x160] sm:$0xff]
    %v280 = vld [vmem:[#allocation2 + $0x168] sm:$0xff]
    %v281 = vld [vmem:[#allocation2 + $0x170] sm:$0xff]
    %v282 = vld [vmem:[#allocation2 + $0x178] sm:$0xff]
    %v283 = vld [vmem:[#allocation2 + $0x180] sm:$0xff]
    %v284 = vld [vmem:[#allocation2 + $0x188] sm:$0xff]
    %v285 = vld [vmem:[#allocation2 + $0x190] sm:$0xff]
    %v286 = vld [vmem:[#allocation2 + $0x198] sm:$0xff]
    %v287 = vld [vmem:[#allocation2 + $0x1a0] sm:$0xff]
    %v288 = vld [vmem:[#allocation2 + $0x1a8] sm:$0xff]
    %v289 = vld [vmem:[#allocation2 + $0x1b0] sm:$0xff]
    %v290 = vld [vmem:[#allocation2 + $0x1b8] sm:$0xff]
    %v291 = vld [vmem:[#allocation2 + $0x1c0] sm:$0xff]
    %v292 = vld [vmem:[#allocation2 + $0x1c8] sm:$0xff]
    %v293 = vld [vmem:[#allocation2 + $0x1d0] sm:$0xff]
    %v294 = vld [vmem:[#allocation2 + $0x1d8] sm:$0xff]
    %v295 = vld [vmem:[#allocation2 + $0x1e0] sm:$0xff]
    %v296 = vld [vmem:[#allocation2 + $0x1e8] sm:$0xff]
    %v297 = vld [vmem:[#allocation2 + $0x1f0] sm:$0xff]
    %v298 = vld [vmem:[#allocation2 + $0x1f8] sm:$0xff]
    %v299 = vld [vmem:[#allocation2 + $0x200] sm:$0xff]
    %v300 = vld [vmem:[#allocation2 + $0x208] sm:$0xff]
    %v301 = vld [vmem:[#allocation2 + $0x210] sm:$0xff]
    %v302 = vld [vmem:[#allocation2 + $0x218] sm:$0xff]
    %v303 = vld [vmem:[#allocation2 + $0x220] sm:$0xff]
    %v304 = vld [vmem:[#allocation2 + $0x228] sm:$0xff]
    %v305 = vld [vmem:[#allocation2 + $0x230] sm:$0xff]
    %v306 = vld [vmem:[#allocation2 + $0x238] sm:$0xff]
    %v307 = vld [vmem:[#allocation2 + $0x240] sm:$0xff]
    %v308 = vld [vmem:[#allocation2 + $0x248] sm:$0xff]
    %v309 = vld [vmem:[#allocation2 + $0x250] sm:$0xff]
    %v310 = vld [vmem:[#allocation2 + $0x258] sm:$0xff]
    %v311 = vld [vmem:[#allocation2 + $0x260] sm:$0xff]
    %v312 = vld [vmem:[#allocation2 + $0x268] sm:$0xff]
    %v313 = vld [vmem:[#allocation2 + $0x270] sm:$0xff]
    %v314 = vld [vmem:[#allocation2 + $0x278] sm:$0xff]
    %v315 = vld [vmem:[#allocation2 + $0x280] sm:$0xff]
    %v316 = vld [vmem:[#allocation2 + $0x288] sm:$0xff]
    %v317 = vld [vmem:[#allocation2 + $0x290] sm:$0xff]
    %v318 = vld [vmem:[#allocation2 + $0x298] sm:$0xff]
    %v319 = vld [vmem:[#allocation2 + $0x2a0] sm:$0xff]
    %v320 = vld [vmem:[#allocation2 + $0x2a8] sm:$0xff]
    %v321 = vld [vmem:[#allocation2 + $0x2b0] sm:$0xff]
    %v322 = vld [vmem:[#allocation2 + $0x2b8] sm:$0xff]
    %v323 = vld [vmem:[#allocation2 + $0x2c0] sm:$0xff]
    %v324 = vld [vmem:[#allocation2 + $0x2c8] sm:$0xff]
    %v325 = vld [vmem:[#allocation2 + $0x2d0] sm:$0xff]
    %v326 = vld [vmem:[#allocation2 + $0x2d8] sm:$0xff]
    %v327 = vld [vmem:[#allocation2 + $0x2e0] sm:$0xff]
    %v328 = vld [vmem:[#allocation2 + $0x2e8] sm:$0xff]
    %v329 = vld [vmem:[#allocation2 + $0x2f0] sm:$0xff]
    %v330 = vld [vmem:[#allocation2 + $0x2f8] sm:$0xff]
    %v331 = vld [vmem:[#allocation2 + $0x300] sm:$0xff]
    %v332 = vld [vmem:[#allocation2 + $0x308] sm:$0xff]
    %v333 = vld [vmem:[#allocation2 + $0x310] sm:$0xff]
    %v334 = vld [vmem:[#allocation2 + $0x318] sm:$0xff]
    %v335 = vld [vmem:[#allocation2 + $0x320] sm:$0xff]
    %v336 = vld [vmem:[#allocation2 + $0x328] sm:$0xff]
    %v337 = vld [vmem:[#allocation2 + $0x330] sm:$0xff]
    %v338 = vld [vmem:[#allocation2 + $0x338] sm:$0xff]
    %v339 = vld [vmem:[#allocation2 + $0x340] sm:$0xff]
    %v340 = vld [vmem:[#allocation2 + $0x348] sm:$0xff]
    %v341 = vld [vmem:[#allocation2 + $0x350] sm:$0xff]
    %v342 = vld [vmem:[#allocation2 + $0x358] sm:$0xff]
    %v343 = vld [vmem:[#allocation2 + $0x360] sm:$0xff]
    %v344 = vld [vmem:[#allocation2 + $0x368] sm:$0xff]
    %v345 = vld [vmem:[#allocation2 + $0x370] sm:$0xff]
    %v346 = vld [vmem:[#allocation2 + $0x378] sm:$0xff]
    %v347 = vld [vmem:[#allocation2 + $0x380] sm:$0xff]
    %v348 = vld [vmem:[#allocation2 + $0x388] sm:$0xff]
    %v349 = vld [vmem:[#allocation2 + $0x390] sm:$0xff]
    %v350 = vld [vmem:[#allocation2 + $0x398] sm:$0xff]
    %v351 = vld [vmem:[#allocation2 + $0x3a0] sm:$0xff]
    %v352 = vld [vmem:[#allocation2 + $0x3a8] sm:$0xff]
    %v353 = vld [vmem:[#allocation2 + $0x3b0] sm:$0xff]
    %v354 = vld [vmem:[#allocation2 + $0x3b8] sm:$0xff]
    %v355 = vld [vmem:[#allocation2 + $0x3c0] sm:$0xff]
    %v356 = vld [vmem:[#allocation2 + $0x3c8] sm:$0xff]
    %v357 = vld [vmem:[#allocation2 + $0x3d0] sm:$0xff]
    %v358 = vld [vmem:[#allocation2 + $0x3d8] sm:$0xff]
    %v359 = vld [vmem:[#allocation2 + $0x3e0] sm:$0xff]
    %v360 = vld [vmem:[#allocation2 + $0x3e8] sm:$0xff]
    %v361 = vld [vmem:[#allocation2 + $0x3f0] sm:$0xff]
    %v362 = vld [vmem:[#allocation2 + $0x3f8] sm:$0xff]
    %v491 = vunpack.c.l.b16 %v235
    %v492 = vunpack.c.h.b16 %v235
    %v493 = vunpack.c.l.b16 %v236
    %v494 = vunpack.c.h.b16 %v236
    %v495 = vunpack.c.l.b16 %v237
    %v496 = vunpack.c.h.b16 %v237
    %v497 = vunpack.c.l.b16 %v238
    %v498 = vunpack.c.h.b16 %v238
    %v499 = vunpack.c.l.b16 %v239
    %v500 = vunpack.c.h.b16 %v239
    %v501 = vunpack.c.l.b16 %v240
    %v502 = vunpack.c.h.b16 %v240
    %v503 = vunpack.c.l.b16 %v241
    %v504 = vunpack.c.h.b16 %v241
    %v505 = vunpack.c.l.b16 %v242
    %v506 = vunpack.c.h.b16 %v242
    %v507 = vunpack.c.l.b16 %v243
    %v508 = vunpack.c.h.b16 %v243
    %v509 = vunpack.c.l.b16 %v244
    %v510 = vunpack.c.h.b16 %v244
    %v511 = vunpack.c.l.b16 %v245
    %v512 = vunpack.c.h.b16 %v245
    %v513 = vunpack.c.l.b16 %v246
    %v514 = vunpack.c.h.b16 %v246
    %v515 = vunpack.c.l.b16 %v247
    %v516 = vunpack.c.h.b16 %v247
    %v517 = vunpack.c.l.b16 %v248
    %v518 = vunpack.c.h.b16 %v248
    %v519 = vunpack.c.l.b16 %v249
    %v520 = vunpack.c.h.b16 %v249
    %v521 = vunpack.c.l.b16 %v250
    %v522 = vunpack.c.h.b16 %v250
    %v523 = vunpack.c.l.b16 %v251
    %v524 = vunpack.c.h.b16 %v251
    %v525 = vunpack.c.l.b16 %v252
    %v526 = vunpack.c.h.b16 %v252
    %v527 = vunpack.c.l.b16 %v253
    %v528 = vunpack.c.h.b16 %v253
    %v529 = vunpack.c.l.b16 %v254
    %v530 = vunpack.c.h.b16 %v254
    %v531 = vunpack.c.l.b16 %v255
    %v532 = vunpack.c.h.b16 %v255
    %v533 = vunpack.c.l.b16 %v256
    %v534 = vunpack.c.h.b16 %v256
    %v535 = vunpack.c.l.b16 %v257
    %v536 = vunpack.c.h.b16 %v257
    %v537 = vunpack.c.l.b16 %v258
    %v538 = vunpack.c.h.b16 %v258
    %v539 = vunpack.c.l.b16 %v259
    %v540 = vunpack.c.h.b16 %v259
    %v541 = vunpack.c.l.b16 %v260
    %v542 = vunpack.c.h.b16 %v260
    %v543 = vunpack.c.l.b16 %v261
    %v544 = vunpack.c.h.b16 %v261
    %v545 = vunpack.c.l.b16 %v262
    %v546 = vunpack.c.h.b16 %v262
    %v547 = vunpack.c.l.b16 %v263
    %v548 = vunpack.c.h.b16 %v263
    %v549 = vunpack.c.l.b16 %v264
    %v550 = vunpack.c.h.b16 %v264
    %v551 = vunpack.c.l.b16 %v265
    %v552 = vunpack.c.h.b16 %v265
    %v553 = vunpack.c.l.b16 %v266
    %v554 = vunpack.c.h.b16 %v266
    %v555 = vunpack.c.l.b16 %v267
    %v556 = vunpack.c.h.b16 %v267
    %v557 = vunpack.c.l.b16 %v268
    %v558 = vunpack.c.h.b16 %v268
    %v559 = vunpack.c.l.b16 %v269
    %v560 = vunpack.c.h.b16 %v269
    %v561 = vunpack.c.l.b16 %v270
    %v562 = vunpack.c.h.b16 %v270
    %v563 = vunpack.c.l.b16 %v271
    %v564 = vunpack.c.h.b16 %v271
    %v565 = vunpack.c.l.b16 %v272
    %v566 = vunpack.c.h.b16 %v272
    %v567 = vunpack.c.l.b16 %v273
    %v568 = vunpack.c.h.b16 %v273
    %v569 = vunpack.c.l.b16 %v274
    %v570 = vunpack.c.h.b16 %v274
    %v571 = vunpack.c.l.b16 %v275
    %v572 = vunpack.c.h.b16 %v275
    %v573 = vunpack.c.l.b16 %v276
    %v574 = vunpack.c.h.b16 %v276
    %v575 = vunpack.c.l.b16 %v277
    %v576 = vunpack.c.h.b16 %v277
    %v577 = vunpack.c.l.b16 %v278
    %v578 = vunpack.c.h.b16 %v278
    %v579 = vunpack.c.l.b16 %v279
    %v580 = vunpack.c.h.b16 %v279
    %v581 = vunpack.c.l.b16 %v280
    %v582 = vunpack.c.h.b16 %v280
    %v583 = vunpack.c.l.b16 %v281
    %v584 = vunpack.c.h.b16 %v281
    %v585 = vunpack.c.l.b16 %v282
    %v586 = vunpack.c.h.b16 %v282
    %v587 = vunpack.c.l.b16 %v283
    %v588 = vunpack.c.h.b16 %v283
    %v589 = vunpack.c.l.b16 %v284
    %v590 = vunpack.c.h.b16 %v284
    %v591 = vunpack.c.l.b16 %v285
    %v592 = vunpack.c.h.b16 %v285
    %v593 = vunpack.c.l.b16 %v286
    %v594 = vunpack.c.h.b16 %v286
    %v595 = vunpack.c.l.b16 %v287
    %v596 = vunpack.c.h.b16 %v287
    %v597 = vunpack.c.l.b16 %v288
    %v598 = vunpack.c.h.b16 %v288
    %v599 = vunpack.c.l.b16 %v289
    %v600 = vunpack.c.h.b16 %v289
    %v601 = vunpack.c.l.b16 %v290
    %v602 = vunpack.c.h.b16 %v290
    %v603 = vunpack.c.l.b16 %v291
    %v604 = vunpack.c.h.b16 %v291
    %v605 = vunpack.c.l.b16 %v292
    %v606 = vunpack.c.h.b16 %v292
    %v607 = vunpack.c.l.b16 %v293
    %v608 = vunpack.c.h.b16 %v293
    %v609 = vunpack.c.l.b16 %v294
    %v610 = vunpack.c.h.b16 %v294
    %v611 = vunpack.c.l.b16 %v295
    %v612 = vunpack.c.h.b16 %v295
    %v613 = vunpack.c.l.b16 %v296
    %v614 = vunpack.c.h.b16 %v296
    %v615 = vunpack.c.l.b16 %v297
    %v616 = vunpack.c.h.b16 %v297
    %v617 = vunpack.c.l.b16 %v298
    %v618 = vunpack.c.h.b16 %v298
    %v619 = vunpack.c.l.b16 %v299
    %v620 = vunpack.c.h.b16 %v299
    %v621 = vunpack.c.l.b16 %v300
    %v622 = vunpack.c.h.b16 %v300
    %v623 = vunpack.c.l.b16 %v301
    %v624 = vunpack.c.h.b16 %v301
    %v625 = vunpack.c.l.b16 %v302
    %v626 = vunpack.c.h.b16 %v302
    %v627 = vunpack.c.l.b16 %v303
    %v628 = vunpack.c.h.b16 %v303
    %v629 = vunpack.c.l.b16 %v304
    %v630 = vunpack.c.h.b16 %v304
    %v631 = vunpack.c.l.b16 %v305
    %v632 = vunpack.c.h.b16 %v305
    %v633 = vunpack.c.l.b16 %v306
    %v634 = vunpack.c.h.b16 %v306
    %v635 = vunpack.c.l.b16 %v307
    %v636 = vunpack.c.h.b16 %v307
    %v637 = vunpack.c.l.b16 %v308
    %v638 = vunpack.c.h.b16 %v308
    %v639 = vunpack.c.l.b16 %v309
    %v640 = vunpack.c.h.b16 %v309
    %v641 = vunpack.c.l.b16 %v310
    %v642 = vunpack.c.h.b16 %v310
    %v643 = vunpack.c.l.b16 %v311
    %v644 = vunpack.c.h.b16 %v311
    %v645 = vunpack.c.l.b16 %v312
    %v646 = vunpack.c.h.b16 %v312
    %v647 = vunpack.c.l.b16 %v313
    %v648 = vunpack.c.h.b16 %v313
    %v649 = vunpack.c.l.b16 %v314
    %v650 = vunpack.c.h.b16 %v314
    %v651 = vunpack.c.l.b16 %v315
    %v652 = vunpack.c.h.b16 %v315
    %v653 = vunpack.c.l.b16 %v316
    %v654 = vunpack.c.h.b16 %v316
    %v655 = vunpack.c.l.b16 %v317
    %v656 = vunpack.c.h.b16 %v317
    %v657 = vunpack.c.l.b16 %v318
    %v658 = vunpack.c.h.b16 %v318
    %v659 = vunpack.c.l.b16 %v319
    %v660 = vunpack.c.h.b16 %v319
    %v661 = vunpack.c.l.b16 %v320
    %v662 = vunpack.c.h.b16 %v320
    %v663 = vunpack.c.l.b16 %v321
    %v664 = vunpack.c.h.b16 %v321
    %v665 = vunpack.c.l.b16 %v322
    %v666 = vunpack.c.h.b16 %v322
    %v667 = vunpack.c.l.b16 %v323
    %v668 = vunpack.c.h.b16 %v323
    %v669 = vunpack.c.l.b16 %v324
    %v670 = vunpack.c.h.b16 %v324
    %v671 = vunpack.c.l.b16 %v325
    %v672 = vunpack.c.h.b16 %v325
    %v673 = vunpack.c.l.b16 %v326
    %v674 = vunpack.c.h.b16 %v326
    %v675 = vunpack.c.l.b16 %v327
    %v676 = vunpack.c.h.b16 %v327
    %v677 = vunpack.c.l.b16 %v328
    %v678 = vunpack.c.h.b16 %v328
    %v679 = vunpack.c.l.b16 %v329
    %v680 = vunpack.c.h.b16 %v329
    %v681 = vunpack.c.l.b16 %v330
    %v682 = vunpack.c.h.b16 %v330
    %v683 = vunpack.c.l.b16 %v331
    %v684 = vunpack.c.h.b16 %v331
    %v685 = vunpack.c.l.b16 %v332
    %v686 = vunpack.c.h.b16 %v332
    %v687 = vunpack.c.l.b16 %v333
    %v688 = vunpack.c.h.b16 %v333
    %v689 = vunpack.c.l.b16 %v334
    %v690 = vunpack.c.h.b16 %v334
    %v691 = vunpack.c.l.b16 %v335
    %v692 = vunpack.c.h.b16 %v335
    %v693 = vunpack.c.l.b16 %v336
    %v694 = vunpack.c.h.b16 %v336
    %v695 = vunpack.c.l.b16 %v337
    %v696 = vunpack.c.h.b16 %v337
    %v697 = vunpack.c.l.b16 %v338
    %v698 = vunpack.c.h.b16 %v338
    %v699 = vunpack.c.l.b16 %v339
    %v700 = vunpack.c.h.b16 %v339
    %v701 = vunpack.c.l.b16 %v340
    %v702 = vunpack.c.h.b16 %v340
    %v703 = vunpack.c.l.b16 %v341
    %v704 = vunpack.c.h.b16 %v341
    %v705 = vunpack.c.l.b16 %v342
    %v706 = vunpack.c.h.b16 %v342
    %v707 = vunpack.c.l.b16 %v343
    %v708 = vunpack.c.h.b16 %v343
    %v709 = vunpack.c.l.b16 %v344
    %v710 = vunpack.c.h.b16 %v344
    %v711 = vunpack.c.l.b16 %v345
    %v712 = vunpack.c.h.b16 %v345
    %v713 = vunpack.c.l.b16 %v346
    %v714 = vunpack.c.h.b16 %v346
    %v715 = vunpack.c.l.b16 %v347
    %v716 = vunpack.c.h.b16 %v347
    %v717 = vunpack.c.l.b16 %v348
    %v718 = vunpack.c.h.b16 %v348
    %v719 = vunpack.c.l.b16 %v349
    %v720 = vunpack.c.h.b16 %v349
    %v721 = vunpack.c.l.b16 %v350
    %v722 = vunpack.c.h.b16 %v350
    %v723 = vunpack.c.l.b16 %v351
    %v724 = vunpack.c.h.b16 %v351
    %v725 = vunpack.c.l.b16 %v352
    %v726 = vunpack.c.h.b16 %v352
    %v727 = vunpack.c.l.b16 %v353
    %v728 = vunpack.c.h.b16 %v353
    %v729 = vunpack.c.l.b16 %v354
    %v730 = vunpack.c.h.b16 %v354
    %v731 = vunpack.c.l.b16 %v355
    %v732 = vunpack.c.h.b16 %v355
    %v733 = vunpack.c.l.b16 %v356
    %v734 = vunpack.c.h.b16 %v356
    %v735 = vunpack.c.l.b16 %v357
    %v736 = vunpack.c.h.b16 %v357
    %v737 = vunpack.c.l.b16 %v358
    %v738 = vunpack.c.h.b16 %v358
    %v739 = vunpack.c.l.b16 %v359
    %v740 = vunpack.c.h.b16 %v359
    %v741 = vunpack.c.l.b16 %v360
    %v742 = vunpack.c.h.b16 %v360
    %v743 = vunpack.c.l.b16 %v361
    %v744 = vunpack.c.h.b16 %v361
    %v745 = vunpack.c.l.b16 %v362
    %v746 = vunpack.c.h.b16 %v362
    %v747 = vpack.c.b16 %v499, %v491
    %v748 = vpack.c.b16 %v500, %v492
    %v749 = vpack.c.b16 %v501, %v493
    %v750 = vpack.c.b16 %v502, %v494
    %v751 = vpack.c.b16 %v503, %v495
    %v752 = vpack.c.b16 %v504, %v496
    %v753 = vpack.c.b16 %v505, %v497
    %v754 = vpack.c.b16 %v506, %v498
    %v755 = vpack.c.b16 %v515, %v507
    %v756 = vpack.c.b16 %v516, %v508
    %v757 = vpack.c.b16 %v517, %v509
    %v758 = vpack.c.b16 %v518, %v510
    %v759 = vpack.c.b16 %v519, %v511
    %v760 = vpack.c.b16 %v520, %v512
    %v761 = vpack.c.b16 %v521, %v513
    %v762 = vpack.c.b16 %v522, %v514
    %v763 = vpack.c.b16 %v531, %v523
    %v764 = vpack.c.b16 %v532, %v524
    %v765 = vpack.c.b16 %v533, %v525
    %v766 = vpack.c.b16 %v534, %v526
    %v767 = vpack.c.b16 %v535, %v527
    %v768 = vpack.c.b16 %v536, %v528
    %v769 = vpack.c.b16 %v537, %v529
    %v770 = vpack.c.b16 %v538, %v530
    %v771 = vpack.c.b16 %v547, %v539
    %v772 = vpack.c.b16 %v548, %v540
    %v773 = vpack.c.b16 %v549, %v541
    %v774 = vpack.c.b16 %v550, %v542
    %v775 = vpack.c.b16 %v551, %v543
    %v776 = vpack.c.b16 %v552, %v544
    %v777 = vpack.c.b16 %v553, %v545
    %v778 = vpack.c.b16 %v554, %v546
    %v779 = vpack.c.b16 %v563, %v555
    %v780 = vpack.c.b16 %v564, %v556
    %v781 = vpack.c.b16 %v565, %v557
    %v782 = vpack.c.b16 %v566, %v558
    %v783 = vpack.c.b16 %v567, %v559
    %v784 = vpack.c.b16 %v568, %v560
    %v785 = vpack.c.b16 %v569, %v561
    %v786 = vpack.c.b16 %v570, %v562
    %v787 = vpack.c.b16 %v579, %v571
    %v788 = vpack.c.b16 %v580, %v572
    %v789 = vpack.c.b16 %v581, %v573
    %v790 = vpack.c.b16 %v582, %v574
    %v791 = vpack.c.b16 %v583, %v575
    %v792 = vpack.c.b16 %v584, %v576
    %v793 = vpack.c.b16 %v585, %v577
    %v794 = vpack.c.b16 %v586, %v578
    %v795 = vpack.c.b16 %v595, %v587
    %v796 = vpack.c.b16 %v596, %v588
    %v797 = vpack.c.b16 %v597, %v589
    %v798 = vpack.c.b16 %v598, %v590
    %v799 = vpack.c.b16 %v599, %v591
    %v800 = vpack.c.b16 %v600, %v592
    %v801 = vpack.c.b16 %v601, %v593
    %v802 = vpack.c.b16 %v602, %v594
    %v803 = vpack.c.b16 %v611, %v603
    %v804 = vpack.c.b16 %v612, %v604
    %v805 = vpack.c.b16 %v613, %v605
    %v806 = vpack.c.b16 %v614, %v606
    %v807 = vpack.c.b16 %v615, %v607
    %v808 = vpack.c.b16 %v616, %v608
    %v809 = vpack.c.b16 %v617, %v609
    %v810 = vpack.c.b16 %v618, %v610
    %v811 = vpack.c.b16 %v627, %v619
    %v812 = vpack.c.b16 %v628, %v620
    %v813 = vpack.c.b16 %v629, %v621
    %v814 = vpack.c.b16 %v630, %v622
    %v815 = vpack.c.b16 %v631, %v623
    %v816 = vpack.c.b16 %v632, %v624
    %v817 = vpack.c.b16 %v633, %v625
    %v818 = vpack.c.b16 %v634, %v626
    %v819 = vpack.c.b16 %v643, %v635
    %v820 = vpack.c.b16 %v644, %v636
    %v821 = vpack.c.b16 %v645, %v637
    %v822 = vpack.c.b16 %v646, %v638
    %v823 = vpack.c.b16 %v647, %v639
    %v824 = vpack.c.b16 %v648, %v640
    %v825 = vpack.c.b16 %v649, %v641
    %v826 = vpack.c.b16 %v650, %v642
    %v827 = vpack.c.b16 %v659, %v651
    %v828 = vpack.c.b16 %v660, %v652
    %v829 = vpack.c.b16 %v661, %v653
    %v830 = vpack.c.b16 %v662, %v654
    %v831 = vpack.c.b16 %v663, %v655
    %v832 = vpack.c.b16 %v664, %v656
    %v833 = vpack.c.b16 %v665, %v657
    %v834 = vpack.c.b16 %v666, %v658
    %v835 = vpack.c.b16 %v675, %v667
    %v836 = vpack.c.b16 %v676, %v668
    %v837 = vpack.c.b16 %v677, %v669
    %v838 = vpack.c.b16 %v678, %v670
    %v839 = vpack.c.b16 %v679, %v671
    %v840 = vpack.c.b16 %v680, %v672
    %v841 = vpack.c.b16 %v681, %v673
    %v842 = vpack.c.b16 %v682, %v674
    %v843 = vpack.c.b16 %v691, %v683
    %v844 = vpack.c.b16 %v692, %v684
    %v845 = vpack.c.b16 %v693, %v685
    %v846 = vpack.c.b16 %v694, %v686
    %v847 = vpack.c.b16 %v695, %v687
    %v848 = vpack.c.b16 %v696, %v688
    %v849 = vpack.c.b16 %v697, %v689
    %v850 = vpack.c.b16 %v698, %v690
    %v851 = vpack.c.b16 %v707, %v699
    %v852 = vpack.c.b16 %v708, %v700
    %v853 = vpack.c.b16 %v709, %v701
    %v854 = vpack.c.b16 %v710, %v702
    %v855 = vpack.c.b16 %v711, %v703
    %v856 = vpack.c.b16 %v712, %v704
    %v857 = vpack.c.b16 %v713, %v705
    %v858 = vpack.c.b16 %v714, %v706
    %v859 = vpack.c.b16 %v723, %v715
    %v860 = vpack.c.b16 %v724, %v716
    %v861 = vpack.c.b16 %v725, %v717
    %v862 = vpack.c.b16 %v726, %v718
    %v863 = vpack.c.b16 %v727, %v719
    %v864 = vpack.c.b16 %v728, %v720
    %v865 = vpack.c.b16 %v729, %v721
    %v866 = vpack.c.b16 %v730, %v722
    %v867 = vpack.c.b16 %v739, %v731
    %v868 = vpack.c.b16 %v740, %v732
    %v869 = vpack.c.b16 %v741, %v733
    %v870 = vpack.c.b16 %v742, %v734
    %v871 = vpack.c.b16 %v743, %v735
    %v872 = vpack.c.b16 %v744, %v736
    %v873 = vpack.c.b16 %v745, %v737
    %v874 = vpack.c.b16 %v746, %v738
    %1003 = vmatprep.subr.bf16.mxu0 %v804
    %1004 = vmatpush1.bf16.msra.mxu0 %v803
    %1005 = vmatprep.subr.bf16.mxu0 %v796
    %1006 = vmatpush1.bf16.msra.mxu0 %v795
    %1007 = vmatprep.subr.bf16.mxu0 %v788
    %1008 = vmatpush1.bf16.msra.mxu0 %v787
    %1009 = vmatprep.subr.bf16.mxu0 %v780
    %1010 = vmatpush1.bf16.msra.mxu0 %v779
    %1011 = vmatprep.subr.bf16.mxu0 %v772
    %1012 = vmatpush1.bf16.msra.mxu0 %v771
    %1013 = vmatprep.subr.bf16.mxu0 %v764
    %1014 = vmatpush1.bf16.msra.mxu0 %v763
    %1015 = vmatprep.subr.bf16.mxu0 %v756
    %1016 = vmatpush1.bf16.msra.mxu0 %v755
    %1017 = vmatprep.subr.bf16.mxu0 %v748
    %1018 = vmatpush1.bf16.msra.mxu0 %v747
    %1019 = vmatprep.subr.bf16.mxu0 %v868
    %1020 = vmatpush2.bf16.msra.mxu0 %v867
    %1021 = vmatprep.subr.bf16.mxu0 %v860
    %1022 = vmatpush2.bf16.msra.mxu0 %v859
    %1023 = vmatprep.subr.bf16.mxu0 %v852
    %1024 = vmatpush2.bf16.msra.mxu0 %v851
    %1025 = vmatprep.subr.bf16.mxu0 %v844
    %1026 = vmatpush2.bf16.msra.mxu0 %v843
    %1027 = vmatprep.subr.bf16.mxu0 %v836
    %1028 = vmatpush2.bf16.msra.mxu0 %v835
    %1029 = vmatprep.subr.bf16.mxu0 %v828
    %1030 = vmatpush2.bf16.msra.mxu0 %v827
    %1031 = vmatprep.subr.bf16.mxu0 %v820
    %1032 = vmatpush2.bf16.msra.mxu0 %v819
    %1033 = vmatprep.subr.bf16.mxu0 %v812
    %1034 = vmatpush2.bf16.msra.mxu0 %v811
    %1035 = vmatprep.mubr.bf16.mxu0 %v234
    %1036 = vmatmul.mubr.bf16.gmra.mxu0 %v233
    %v1037 = vpop.f32.mrf.mxu0
    %v1038 = vadd.f32 0.0, %v1037
    %v1039 = vpop.f32.mrf.mxu0
    %v1040 = vadd.f32 0.0, %v1039
    %v1041 = vpop.f32.mrf.mxu0
    %v1042 = vpop.f32.mrf.mxu0
    %1043 = vdwg.mxu0
    %1044 = vmatprep.subr.bf16.mxu0 %v806
    %1045 = vmatpush1.bf16.msra.mxu0 %v805
    %1046 = vmatprep.subr.bf16.mxu0 %v798
    %1047 = vmatpush1.bf16.msra.mxu0 %v797
    %1048 = vmatprep.subr.bf16.mxu0 %v790
    %1049 = vmatpush1.bf16.msra.mxu0 %v789
    %1050 = vmatprep.subr.bf16.mxu0 %v782
    %1051 = vmatpush1.bf16.msra.mxu0 %v781
    %1052 = vmatprep.subr.bf16.mxu0 %v774
    %1053 = vmatpush1.bf16.msra.mxu0 %v773
    %1054 = vmatprep.subr.bf16.mxu0 %v766
    %1055 = vmatpush1.bf16.msra.mxu0 %v765
    %1056 = vmatprep.subr.bf16.mxu0 %v758
    %1057 = vmatpush1.bf16.msra.mxu0 %v757
    %1058 = vmatprep.subr.bf16.mxu0 %v750
    %1059 = vmatpush1.bf16.msra.mxu0 %v749
    %1060 = vmatprep.subr.bf16.mxu0 %v870
    %1061 = vmatpush2.bf16.msra.mxu0 %v869
    %1062 = vmatprep.subr.bf16.mxu0 %v862
    %1063 = vmatpush2.bf16.msra.mxu0 %v861
    %1064 = vmatprep.subr.bf16.mxu0 %v854
    %1065 = vmatpush2.bf16.msra.mxu0 %v853
    %1066 = vmatprep.subr.bf16.mxu0 %v846
    %1067 = vmatpush2.bf16.msra.mxu0 %v845
    %1068 = vmatprep.subr.bf16.mxu0 %v838
    %1069 = vmatpush2.bf16.msra.mxu0 %v837
    %1070 = vmatprep.subr.bf16.mxu0 %v830
    %1071 = vmatpush2.bf16.msra.mxu0 %v829
    %1072 = vmatprep.subr.bf16.mxu0 %v822
    %1073 = vmatpush2.bf16.msra.mxu0 %v821
    %1074 = vmatprep.subr.bf16.mxu0 %v814
    %1075 = vmatpush2.bf16.msra.mxu0 %v813
    %1076 = vmatprep.mubr.bf16.mxu0 %v234
    %1077 = vmatmul.mubr.bf16.gmra.mxu0 %v233
    %v1078 = vpop.f32.mrf.mxu0
    %v1079 = vadd.f32 0.0, %v1078
    %v1080 = vpop.f32.mrf.mxu0
    %v1081 = vadd.f32 0.0, %v1080
    %v1082 = vpop.f32.mrf.mxu0
    %v1083 = vpop.f32.mrf.mxu0
    %1084 = vdwg.mxu0
    %1085 = vmatprep.subr.bf16.mxu0 %v808
    %1086 = vmatpush1.bf16.msra.mxu0 %v807
    %1087 = vmatprep.subr.bf16.mxu0 %v800
    %1088 = vmatpush1.bf16.msra.mxu0 %v799
    %1089 = vmatprep.subr.bf16.mxu0 %v792
    %1090 = vmatpush1.bf16.msra.mxu0 %v791
    %1091 = vmatprep.subr.bf16.mxu0 %v784
    %1092 = vmatpush1.bf16.msra.mxu0 %v783
    %1093 = vmatprep.subr.bf16.mxu0 %v776
    %1094 = vmatpush1.bf16.msra.mxu0 %v775
    %1095 = vmatprep.subr.bf16.mxu0 %v768
    %1096 = vmatpush1.bf16.msra.mxu0 %v767
    %1097 = vmatprep.subr.bf16.mxu0 %v760
    %1098 = vmatpush1.bf16.msra.mxu0 %v759
    %1099 = vmatprep.subr.bf16.mxu0 %v752
    %1100 = vmatpush1.bf16.msra.mxu0 %v751
    %1101 = vmatprep.subr.bf16.mxu0 %v872
    %1102 = vmatpush2.bf16.msra.mxu0 %v871
    %1103 = vmatprep.subr.bf16.mxu0 %v864
    %1104 = vmatpush2.bf16.msra.mxu0 %v863
    %1105 = vmatprep.subr.bf16.mxu0 %v856
    %1106 = vmatpush2.bf16.msra.mxu0 %v855
    %1107 = vmatprep.subr.bf16.mxu0 %v848
    %1108 = vmatpush2.bf16.msra.mxu0 %v847
    %1109 = vmatprep.subr.bf16.mxu0 %v840
    %1110 = vmatpush2.bf16.msra.mxu0 %v839
    %1111 = vmatprep.subr.bf16.mxu0 %v832
    %1112 = vmatpush2.bf16.msra.mxu0 %v831
    %1113 = vmatprep.subr.bf16.mxu0 %v824
    %1114 = vmatpush2.bf16.msra.mxu0 %v823
    %1115 = vmatprep.subr.bf16.mxu0 %v816
    %1116 = vmatpush2.bf16.msra.mxu0 %v815
    %1117 = vmatprep.mubr.bf16.mxu0 %v234
    %1118 = vmatmul.mubr.bf16.gmra.mxu0 %v233
    %v1119 = vpop.f32.mrf.mxu0
    %v1120 = vadd.f32 0.0, %v1119
    %v1121 = vpop.f32.mrf.mxu0
    %v1122 = vadd.f32 0.0, %v1121
    %v1123 = vpop.f32.mrf.mxu0
    %v1124 = vpop.f32.mrf.mxu0
    %1125 = vdwg.mxu0
    %1126 = vmatprep.subr.bf16.mxu0 %v810
    %1127 = vmatpush1.bf16.msra.mxu0 %v809
    %1128 = vmatprep.subr.bf16.mxu0 %v802
    %1129 = vmatpush1.bf16.msra.mxu0 %v801
    %1130 = vmatprep.subr.bf16.mxu0 %v794
    %1131 = vmatpush1.bf16.msra.mxu0 %v793
    %1132 = vmatprep.subr.bf16.mxu0 %v786
    %1133 = vmatpush1.bf16.msra.mxu0 %v785
    %1134 = vmatprep.subr.bf16.mxu0 %v778
    %1135 = vmatpush1.bf16.msra.mxu0 %v777
    %1136 = vmatprep.subr.bf16.mxu0 %v770
    %1137 = vmatpush1.bf16.msra.mxu0 %v769
    %1138 = vmatprep.subr.bf16.mxu0 %v762
    %1139 = vmatpush1.bf16.msra.mxu0 %v761
    %1140 = vmatprep.subr.bf16.mxu0 %v754
    %1141 = vmatpush1.bf16.msra.mxu0 %v753
    %1142 = vmatprep.subr.bf16.mxu0 %v874
    %1143 = vmatpush2.bf16.msra.mxu0 %v873
    %1144 = vmatprep.subr.bf16.mxu0 %v866
    %1145 = vmatpush2.bf16.msra.mxu0 %v865
    %1146 = vmatprep.subr.bf16.mxu0 %v858
    %1147 = vmatpush2.bf16.msra.mxu0 %v857
    %1148 = vmatprep.subr.bf16.mxu0 %v850
    %1149 = vmatpush2.bf16.msra.mxu0 %v849
    %1150 = vmatprep.subr.bf16.mxu0 %v842
    %1151 = vmatpush2.bf16.msra.mxu0 %v841
    %1152 = vmatprep.subr.bf16.mxu0 %v834
    %1153 = vmatpush2.bf16.msra.mxu0 %v833
    %1154 = vmatprep.subr.bf16.mxu0 %v826
    %1155 = vmatpush2.bf16.msra.mxu0 %v825
    %1156 = vmatprep.subr.bf16.mxu0 %v818
    %1157 = vmatpush2.bf16.msra.mxu0 %v817
    %1158 = vmatprep.mubr.bf16.mxu0 %v234
    %1159 = vmatmul.mubr.bf16.gmra.mxu0 %v233
    %v1160 = vpop.f32.mrf.mxu0
    %v1161 = vadd.f32 0.0, %v1160
    %v1162 = vpop.f32.mrf.mxu0
    %v1163 = vadd.f32 0.0, %v1162
    %v1164 = vpop.f32.mrf.mxu0
    %v1165 = vpop.f32.mrf.mxu0
    %1166 = vdwg.mxu0
    %v1167 = vld [vmem:[%s4] sm:$0xf]
    %v1169 = vlaneseq
    %v1170 = vshrl.u32 %v1169, 7
    %v1171 = vsub.s32 0, %v1170
    %v1172 = vrot.slane %v1167, %v1171
    %v1173 = vlaneseq
    %v1174 = vshrl.u32 %v1173, 7
    %v1175 = vsub.s32 1, %v1174
    %v1176 = vrot.slane %v1167, %v1175
    %v1177 = vlaneseq
    %v1178 = vshrl.u32 %v1177, 7
    %v1179 = vsub.s32 2, %v1178
    %v1180 = vrot.slane %v1167, %v1179
    %v1181 = vlaneseq
    %v1182 = vshrl.u32 %v1181, 7
    %v1183 = vsub.s32 3, %v1182
    %v1184 = vrot.slane %v1167, %v1183
    %v1189 = vadd.f32 %v1120, %v1172
    %v1190 = vadd.f32 %v1122, %v1176
    %v1191 = vadd.f32 %v1161, %v1180
    %v1192 = vadd.f32 %v1163, %v1184
    %v1197 = vrot.slane %v158, 2
    %v1198 = vrot.slane %v160, 2
    %v1199 = vrot.slane %v201, 2
    %v1200 = vrot.slane %v203, 2
    %v1205 = vadd.f32 %v1038, %v1197
    %v1206 = vadd.f32 %v1040, %v1198
    %v1207 = vadd.f32 %v1079, %v1199
    %v1208 = vadd.f32 %v1081, %v1200
    %v1213 = vrot.slane %v1205, 6
    %v1214 = vrot.slane %v1206, 6
    %v1215 = vrot.slane %v1207, 6
    %v1216 = vrot.slane %v1208, 6
    %vm1221 = vcmask 1041408
    %v1222 = vsel %vm1221, %v1189, %v1213
    %v1223 = vsel %vm1221, %v1190, %v1214
    %v1224 = vsel %vm1221, %v1191, %v1215
    %v1225 = vsel %vm1221, %v1192, %v1216
    %v1227 = vrot.slane %v230, 6
    %v1229 = vsel %vm1221, 0.0, %v1227
    %v1230 = vxor.u32 %v1222, 2147483648
    %v1231 = vxor.u32 %v1223, 2147483648
    %v1232 = vxor.u32 %v1224, 2147483648
    %v1233 = vmul.f32 %v1230, 1.442695
    %v1234 = vpow.pop %v1233
    %v1235 = vmul.f32 %v1231, 1.442695
    %v1236 = vpow.pop %v1235
    %v1237 = vmul.f32 %v1232, 1.442695
    %v1238 = vpow.pop %v1237
    %v1239 = vadd.f32 %v1234, 1.0
    %v1240 = vadd.f32 %v1236, 1.0
    %v1241 = vadd.f32 %v1238, 1.0
    %v1242 = vrcp.pop %v1239
    %v1243 = vmul.f32 1.0, %v1242
    %v1244 = vrcp.pop %v1240
    %v1245 = vmul.f32 1.0, %v1244
    %v1246 = vrcp.pop %v1241
    %v1247 = vmul.f32 1.0, %v1246
    %v1248 = vtanh.pop %v1225
    %v1249 = vmul.f32 %v1245, %v1229
    %v1250 = vmul.f32 %v1243, %v1248
    %v1251 = vadd.f32 %v1249, %v1250
    %v1252 = vtanh.pop %v1251
    %v1253 = vmul.f32 %v1247, %v1252
    %v1255 = vrot.slane %v1253, 6
    %v1257 = vpack.c.bf16 %v1253, %v1253
    %v1258 = vpack.c.bf16 %v1255, %v1255
    %v1261 = vrot.slane %v1257, 1
    %v1262 = vrot.slane %v1258, 1
    %1265 = vmatprep.subr.bf16.mxu0 %v804
    %1266 = vmatpush1.bf16.msra.mxu0 %v803
    %1267 = vmatprep.subr.bf16.mxu0 %v796
    %1268 = vmatpush1.bf16.msra.mxu0 %v795
    %1269 = vmatprep.subr.bf16.mxu0 %v788
    %1270 = vmatpush1.bf16.msra.mxu0 %v787
    %1271 = vmatprep.subr.bf16.mxu0 %v780
    %1272 = vmatpush1.bf16.msra.mxu0 %v779
    %1273 = vmatprep.subr.bf16.mxu0 %v772
    %1274 = vmatpush1.bf16.msra.mxu0 %v771
    %1275 = vmatprep.subr.bf16.mxu0 %v764
    %1276 = vmatpush1.bf16.msra.mxu0 %v763
    %1277 = vmatprep.subr.bf16.mxu0 %v756
    %1278 = vmatpush1.bf16.msra.mxu0 %v755
    %1279 = vmatprep.subr.bf16.mxu0 %v748
    %1280 = vmatpush1.bf16.msra.mxu0 %v747
    %1281 = vmatprep.subr.bf16.mxu0 %v868
    %1282 = vmatpush2.bf16.msra.mxu0 %v867
    %1283 = vmatprep.subr.bf16.mxu0 %v860
    %1284 = vmatpush2.bf16.msra.mxu0 %v859
    %1285 = vmatprep.subr.bf16.mxu0 %v852
    %1286 = vmatpush2.bf16.msra.mxu0 %v851
    %1287 = vmatprep.subr.bf16.mxu0 %v844
    %1288 = vmatpush2.bf16.msra.mxu0 %v843
    %1289 = vmatprep.subr.bf16.mxu0 %v836
    %1290 = vmatpush2.bf16.msra.mxu0 %v835
    %1291 = vmatprep.subr.bf16.mxu0 %v828
    %1292 = vmatpush2.bf16.msra.mxu0 %v827
    %1293 = vmatprep.subr.bf16.mxu0 %v820
    %1294 = vmatpush2.bf16.msra.mxu0 %v819
    %1295 = vmatprep.subr.bf16.mxu0 %v812
    %1296 = vmatpush2.bf16.msra.mxu0 %v811
    %1297 = vmatprep.mubr.bf16.mxu0 %v1262
    %1298 = vmatmul.mubr.bf16.gmra.mxu0 %v1261
    %v1299 = vpop.f32.mrf.mxu0
    %v1300 = vadd.f32 0.0, %v1299
    %v1301 = vpop.f32.mrf.mxu0
    %v1302 = vadd.f32 0.0, %v1301
    %v1303 = vpop.f32.mrf.mxu0
    %v1304 = vpop.f32.mrf.mxu0
    %1305 = vdwg.mxu0
    %1306 = vmatprep.subr.bf16.mxu0 %v806
    %1307 = vmatpush1.bf16.msra.mxu0 %v805
    %1308 = vmatprep.subr.bf16.mxu0 %v798
    %1309 = vmatpush1.bf16.msra.mxu0 %v797
    %1310 = vmatprep.subr.bf16.mxu0 %v790
    %1311 = vmatpush1.bf16.msra.mxu0 %v789
    %1312 = vmatprep.subr.bf16.mxu0 %v782
    %1313 = vmatpush1.bf16.msra.mxu0 %v781
    %1314 = vmatprep.subr.bf16.mxu0 %v774
    %1315 = vmatpush1.bf16.msra.mxu0 %v773
    %1316 = vmatprep.subr.bf16.mxu0 %v766
    %1317 = vmatpush1.bf16.msra.mxu0 %v765
    %1318 = vmatprep.subr.bf16.mxu0 %v758
    %1319 = vmatpush1.bf16.msra.mxu0 %v757
    %1320 = vmatprep.subr.bf16.mxu0 %v750
    %1321 = vmatpush1.bf16.msra.mxu0 %v749
    %1322 = vmatprep.subr.bf16.mxu0 %v870
    %1323 = vmatpush2.bf16.msra.mxu0 %v869
    %1324 = vmatprep.subr.bf16.mxu0 %v862
    %1325 = vmatpush2.bf16.msra.mxu0 %v861
    %1326 = vmatprep.subr.bf16.mxu0 %v854
    %1327 = vmatpush2.bf16.msra.mxu0 %v853
    %1328 = vmatprep.subr.bf16.mxu0 %v846
    %1329 = vmatpush2.bf16.msra.mxu0 %v845
    %1330 = vmatprep.subr.bf16.mxu0 %v838
    %1331 = vmatpush2.bf16.msra.mxu0 %v837
    %1332 = vmatprep.subr.bf16.mxu0 %v830
    %1333 = vmatpush2.bf16.msra.mxu0 %v829
    %1334 = vmatprep.subr.bf16.mxu0 %v822
    %1335 = vmatpush2.bf16.msra.mxu0 %v821
    %1336 = vmatprep.subr.bf16.mxu0 %v814
    %1337 = vmatpush2.bf16.msra.mxu0 %v813
    %1338 = vmatprep.mubr.bf16.mxu0 %v1262
    %1339 = vmatmul.mubr.bf16.gmra.mxu0 %v1261
    %v1340 = vpop.f32.mrf.mxu0
    %v1341 = vadd.f32 0.0, %v1340
    %v1342 = vpop.f32.mrf.mxu0
    %v1343 = vadd.f32 0.0, %v1342
    %v1344 = vpop.f32.mrf.mxu0
    %v1345 = vpop.f32.mrf.mxu0
    %1346 = vdwg.mxu0
    %1347 = vmatprep.subr.bf16.mxu0 %v808
    %1348 = vmatpush1.bf16.msra.mxu0 %v807
    %1349 = vmatprep.subr.bf16.mxu0 %v800
    %1350 = vmatpush1.bf16.msra.mxu0 %v799
    %1351 = vmatprep.subr.bf16.mxu0 %v792
    %1352 = vmatpush1.bf16.msra.mxu0 %v791
    %1353 = vmatprep.subr.bf16.mxu0 %v784
    %1354 = vmatpush1.bf16.msra.mxu0 %v783
    %1355 = vmatprep.subr.bf16.mxu0 %v776
    %1356 = vmatpush1.bf16.msra.mxu0 %v775
    %1357 = vmatprep.subr.bf16.mxu0 %v768
    %1358 = vmatpush1.bf16.msra.mxu0 %v767
    %1359 = vmatprep.subr.bf16.mxu0 %v760
    %1360 = vmatpush1.bf16.msra.mxu0 %v759
    %1361 = vmatprep.subr.bf16.mxu0 %v752
    %1362 = vmatpush1.bf16.msra.mxu0 %v751
    %1363 = vmatprep.subr.bf16.mxu0 %v872
    %1364 = vmatpush2.bf16.msra.mxu0 %v871
    %1365 = vmatprep.subr.bf16.mxu0 %v864
    %1366 = vmatpush2.bf16.msra.mxu0 %v863
    %1367 = vmatprep.subr.bf16.mxu0 %v856
    %1368 = vmatpush2.bf16.msra.mxu0 %v855
    %1369 = vmatprep.subr.bf16.mxu0 %v848
    %1370 = vmatpush2.bf16.msra.mxu0 %v847
    %1371 = vmatprep.subr.bf16.mxu0 %v840
    %1372 = vmatpush2.bf16.msra.mxu0 %v839
    %1373 = vmatprep.subr.bf16.mxu0 %v832
    %1374 = vmatpush2.bf16.msra.mxu0 %v831
    %1375 = vmatprep.subr.bf16.mxu0 %v824
    %1376 = vmatpush2.bf16.msra.mxu0 %v823
    %1377 = vmatprep.subr.bf16.mxu0 %v816
    %1378 = vmatpush2.bf16.msra.mxu0 %v815
    %1379 = vmatprep.mubr.bf16.mxu0 %v1262
    %1380 = vmatmul.mubr.bf16.gmra.mxu0 %v1261
    %v1381 = vpop.f32.mrf.mxu0
    %v1382 = vadd.f32 0.0, %v1381
    %v1383 = vpop.f32.mrf.mxu0
    %v1384 = vadd.f32 0.0, %v1383
    %v1385 = vpop.f32.mrf.mxu0
    %v1386 = vpop.f32.mrf.mxu0
    %1387 = vdwg.mxu0
    %1388 = vmatprep.subr.bf16.mxu0 %v810
    %1389 = vmatpush1.bf16.msra.mxu0 %v809
    %1390 = vmatprep.subr.bf16.mxu0 %v802
    %1391 = vmatpush1.bf16.msra.mxu0 %v801
    %1392 = vmatprep.subr.bf16.mxu0 %v794
    %1393 = vmatpush1.bf16.msra.mxu0 %v793
    %1394 = vmatprep.subr.bf16.mxu0 %v786
    %1395 = vmatpush1.bf16.msra.mxu0 %v785
    %1396 = vmatprep.subr.bf16.mxu0 %v778
    %1397 = vmatpush1.bf16.msra.mxu0 %v777
    %1398 = vmatprep.subr.bf16.mxu0 %v770
    %1399 = vmatpush1.bf16.msra.mxu0 %v769
    %1400 = vmatprep.subr.bf16.mxu0 %v762
    %1401 = vmatpush1.bf16.msra.mxu0 %v761
    %1402 = vmatprep.subr.bf16.mxu0 %v754
    %1403 = vmatpush1.bf16.msra.mxu0 %v753
    %1404 = vmatprep.subr.bf16.mxu0 %v874
    %1405 = vmatpush2.bf16.msra.mxu0 %v873
    %1406 = vmatprep.subr.bf16.mxu0 %v866
    %1407 = vmatpush2.bf16.msra.mxu0 %v865
    %1408 = vmatprep.subr.bf16.mxu0 %v858
    %1409 = vmatpush2.bf16.msra.mxu0 %v857
    %1410 = vmatprep.subr.bf16.mxu0 %v850
    %1411 = vmatpush2.bf16.msra.mxu0 %v849
    %1412 = vmatprep.subr.bf16.mxu0 %v842
    %1413 = vmatpush2.bf16.msra.mxu0 %v841
    %1414 = vmatprep.subr.bf16.mxu0 %v834
    %1415 = vmatpush2.bf16.msra.mxu0 %v833
    %1416 = vmatprep.subr.bf16.mxu0 %v826
    %1417 = vmatpush2.bf16.msra.mxu0 %v825
    %1418 = vmatprep.subr.bf16.mxu0 %v818
    %1419 = vmatpush2.bf16.msra.mxu0 %v817
    %1420 = vmatprep.mubr.bf16.mxu0 %v1262
    %1421 = vmatmul.mubr.bf16.gmra.mxu0 %v1261
    %v1422 = vpop.f32.mrf.mxu0
    %v1423 = vadd.f32 0.0, %v1422
    %v1424 = vpop.f32.mrf.mxu0
    %v1425 = vadd.f32 0.0, %v1424
    %v1426 = vpop.f32.mrf.mxu0
    %v1427 = vpop.f32.mrf.mxu0
    %1428 = vdwg.mxu0
    %v1429 = vadd.f32 %v1382, %v1172
    %v1430 = vadd.f32 %v1384, %v1176
    %v1431 = vadd.f32 %v1423, %v1180
    %v1432 = vadd.f32 %v1425, %v1184
    %v1433 = vrot.slane %v158, 4
    %v1434 = vrot.slane %v160, 4
    %v1435 = vrot.slane %v201, 4
    %v1436 = vrot.slane %v203, 4
    %v1441 = vadd.f32 %v1300, %v1433
    %v1442 = vadd.f32 %v1302, %v1434
    %v1443 = vadd.f32 %v1341, %v1435
    %v1444 = vadd.f32 %v1343, %v1436
    %v1449 = vrot.slane %v1441, 6
    %v1450 = vrot.slane %v1442, 6
    %v1451 = vrot.slane %v1443, 6
    %v1452 = vrot.slane %v1444, 6
    %v1457 = vsel %vm1221, %v1429, %v1449
    %v1458 = vsel %vm1221, %v1430, %v1450
    %v1459 = vsel %vm1221, %v1431, %v1451
    %v1460 = vsel %vm1221, %v1432, %v1452
    %v1461 = vxor.u32 %v1457, 2147483648
    %v1462 = vxor.u32 %v1458, 2147483648
    %v1463 = vxor.u32 %v1459, 2147483648
    %v1464 = vmul.f32 %v1461, 1.442695
    %v1465 = vpow.pop %v1464
    %v1466 = vmul.f32 %v1462, 1.442695
    %v1467 = vpow.pop %v1466
    %v1468 = vmul.f32 %v1463, 1.442695
    %v1469 = vpow.pop %v1468
    %v1470 = vadd.f32 %v1465, 1.0
    %v1471 = vadd.f32 %v1467, 1.0
    %v1472 = vadd.f32 %v1469, 1.0
    %v1473 = vrcp.pop %v1470
    %v1474 = vmul.f32 1.0, %v1473
    %v1475 = vrcp.pop %v1471
    %v1476 = vmul.f32 1.0, %v1475
    %v1477 = vrcp.pop %v1472
    %v1478 = vmul.f32 1.0, %v1477
    %v1479 = vtanh.pop %v1460
    %v1480 = vmul.f32 %v1476, %v1251
    %v1481 = vmul.f32 %v1474, %v1479
    %v1482 = vadd.f32 %v1480, %v1481
    %v1483 = vtanh.pop %v1482
    %v1484 = vmul.f32 %v1478, %v1483
    %v1486 = vrot.slane %v1484, 6
    %v1488 = vpack.c.bf16 %v1484, %v1484
    %v1489 = vpack.c.bf16 %v1486, %v1486
    %v1492 = vrot.slane %v1488, 1
    %v1493 = vrot.slane %v1489, 1
    %1496 = vmatprep.subr.bf16.mxu0 %v804
    %1497 = vmatpush1.bf16.msra.mxu0 %v803
    %1498 = vmatprep.subr.bf16.mxu0 %v796
    %1499 = vmatpush1.bf16.msra.mxu0 %v795
    %1500 = vmatprep.subr.bf16.mxu0 %v788
    %1501 = vmatpush1.bf16.msra.mxu0 %v787
    %1502 = vmatprep.subr.bf16.mxu0 %v780
    %1503 = vmatpush1.bf16.msra.mxu0 %v779
    %1504 = vmatprep.subr.bf16.mxu0 %v772
    %1505 = vmatpush1.bf16.msra.mxu0 %v771
    %1506 = vmatprep.subr.bf16.mxu0 %v764
    %1507 = vmatpush1.bf16.msra.mxu0 %v763
    %1508 = vmatprep.subr.bf16.mxu0 %v756
    %1509 = vmatpush1.bf16.msra.mxu0 %v755
    %1510 = vmatprep.subr.bf16.mxu0 %v748
    %1511 = vmatpush1.bf16.msra.mxu0 %v747
    %1512 = vmatprep.subr.bf16.mxu0 %v868
    %1513 = vmatpush2.bf16.msra.mxu0 %v867
    %1514 = vmatprep.subr.bf16.mxu0 %v860
    %1515 = vmatpush2.bf16.msra.mxu0 %v859
    %1516 = vmatprep.subr.bf16.mxu0 %v852
    %1517 = vmatpush2.bf16.msra.mxu0 %v851
    %1518 = vmatprep.subr.bf16.mxu0 %v844
    %1519 = vmatpush2.bf16.msra.mxu0 %v843
    %1520 = vmatprep.subr.bf16.mxu0 %v836
    %1521 = vmatpush2.bf16.msra.mxu0 %v835
    %1522 = vmatprep.subr.bf16.mxu0 %v828
    %1523 = vmatpush2.bf16.msra.mxu0 %v827
    %1524 = vmatprep.subr.bf16.mxu0 %v820
    %1525 = vmatpush2.bf16.msra.mxu0 %v819
    %1526 = vmatprep.subr.bf16.mxu0 %v812
    %1527 = vmatpush2.bf16.msra.mxu0 %v811
    %1528 = vmatprep.mubr.bf16.mxu0 %v1493
    %1529 = vmatmul.mubr.bf16.gmra.mxu0 %v1492
    %v1530 = vpop.f32.mrf.mxu0
    %v1531 = vadd.f32 0.0, %v1530
    %v1532 = vpop.f32.mrf.mxu0
    %v1533 = vadd.f32 0.0, %v1532
    %v1534 = vpop.f32.mrf.mxu0
    %v1535 = vpop.f32.mrf.mxu0
    %1536 = vdwg.mxu0
    %1537 = vmatprep.subr.bf16.mxu0 %v806
    %1538 = vmatpush1.bf16.msra.mxu0 %v805
    %1539 = vmatprep.subr.bf16.mxu0 %v798
    %1540 = vmatpush1.bf16.msra.mxu0 %v797
    %1541 = vmatprep.subr.bf16.mxu0 %v790
    %1542 = vmatpush1.bf16.msra.mxu0 %v789
    %1543 = vmatprep.subr.bf16.mxu0 %v782
    %1544 = vmatpush1.bf16.msra.mxu0 %v781
    %1545 = vmatprep.subr.bf16.mxu0 %v774
    %1546 = vmatpush1.bf16.msra.mxu0 %v773
    %1547 = vmatprep.subr.bf16.mxu0 %v766
    %1548 = vmatpush1.bf16.msra.mxu0 %v765
    %1549 = vmatprep.subr.bf16.mxu0 %v758
    %1550 = vmatpush1.bf16.msra.mxu0 %v757
    %1551 = vmatprep.subr.bf16.mxu0 %v750
    %1552 = vmatpush1.bf16.msra.mxu0 %v749
    %1553 = vmatprep.subr.bf16.mxu0 %v870
    %1554 = vmatpush2.bf16.msra.mxu0 %v869
    %1555 = vmatprep.subr.bf16.mxu0 %v862
    %1556 = vmatpush2.bf16.msra.mxu0 %v861
    %1557 = vmatprep.subr.bf16.mxu0 %v854
    %1558 = vmatpush2.bf16.msra.mxu0 %v853
    %1559 = vmatprep.subr.bf16.mxu0 %v846
    %1560 = vmatpush2.bf16.msra.mxu0 %v845
    %1561 = vmatprep.subr.bf16.mxu0 %v838
    %1562 = vmatpush2.bf16.msra.mxu0 %v837
    %1563 = vmatprep.subr.bf16.mxu0 %v830
    %1564 = vmatpush2.bf16.msra.mxu0 %v829
    %1565 = vmatprep.subr.bf16.mxu0 %v822
    %1566 = vmatpush2.bf16.msra.mxu0 %v821
    %1567 = vmatprep.subr.bf16.mxu0 %v814
    %1568 = vmatpush2.bf16.msra.mxu0 %v813
    %1569 = vmatprep.mubr.bf16.mxu0 %v1493
    %1570 = vmatmul.mubr.bf16.gmra.mxu0 %v1492
    %v1571 = vpop.f32.mrf.mxu0
    %v1572 = vadd.f32 0.0, %v1571
    %v1573 = vpop.f32.mrf.mxu0
    %v1574 = vadd.f32 0.0, %v1573
    %v1575 = vpop.f32.mrf.mxu0
    %v1576 = vpop.f32.mrf.mxu0
    %1577 = vdwg.mxu0
    %1578 = vmatprep.subr.bf16.mxu0 %v808
    %1579 = vmatpush1.bf16.msra.mxu0 %v807
    %1580 = vmatprep.subr.bf16.mxu0 %v800
    %1581 = vmatpush1.bf16.msra.mxu0 %v799
    %1582 = vmatprep.subr.bf16.mxu0 %v792
    %1583 = vmatpush1.bf16.msra.mxu0 %v791
    %1584 = vmatprep.subr.bf16.mxu0 %v784
    %1585 = vmatpush1.bf16.msra.mxu0 %v783
    %1586 = vmatprep.subr.bf16.mxu0 %v776
    %1587 = vmatpush1.bf16.msra.mxu0 %v775
    %1588 = vmatprep.subr.bf16.mxu0 %v768
    %1589 = vmatpush1.bf16.msra.mxu0 %v767
    %1590 = vmatprep.subr.bf16.mxu0 %v760
    %1591 = vmatpush1.bf16.msra.mxu0 %v759
    %1592 = vmatprep.subr.bf16.mxu0 %v752
    %1593 = vmatpush1.bf16.msra.mxu0 %v751
    %1594 = vmatprep.subr.bf16.mxu0 %v872
    %1595 = vmatpush2.bf16.msra.mxu0 %v871
    %1596 = vmatprep.subr.bf16.mxu0 %v864
    %1597 = vmatpush2.bf16.msra.mxu0 %v863
    %1598 = vmatprep.subr.bf16.mxu0 %v856
    %1599 = vmatpush2.bf16.msra.mxu0 %v855
    %1600 = vmatprep.subr.bf16.mxu0 %v848
    %1601 = vmatpush2.bf16.msra.mxu0 %v847
    %1602 = vmatprep.subr.bf16.mxu0 %v840
    %1603 = vmatpush2.bf16.msra.mxu0 %v839
    %1604 = vmatprep.subr.bf16.mxu0 %v832
    %1605 = vmatpush2.bf16.msra.mxu0 %v831
    %1606 = vmatprep.subr.bf16.mxu0 %v824
    %1607 = vmatpush2.bf16.msra.mxu0 %v823
    %1608 = vmatprep.subr.bf16.mxu0 %v816
    %1609 = vmatpush2.bf16.msra.mxu0 %v815
    %1610 = vmatprep.mubr.bf16.mxu0 %v1493
    %1611 = vmatmul.mubr.bf16.gmra.mxu0 %v1492
    %v1612 = vpop.f32.mrf.mxu0
    %v1613 = vadd.f32 0.0, %v1612
    %v1614 = vpop.f32.mrf.mxu0
    %v1615 = vadd.f32 0.0, %v1614
    %v1616 = vpop.f32.mrf.mxu0
    %v1617 = vpop.f32.mrf.mxu0
    %1618 = vdwg.mxu0
    %1619 = vmatprep.subr.bf16.mxu0 %v810
    %1620 = vmatpush1.bf16.msra.mxu0 %v809
    %1621 = vmatprep.subr.bf16.mxu0 %v802
    %1622 = vmatpush1.bf16.msra.mxu0 %v801
    %1623 = vmatprep.subr.bf16.mxu0 %v794
    %1624 = vmatpush1.bf16.msra.mxu0 %v793
    %1625 = vmatprep.subr.bf16.mxu0 %v786
    %1626 = vmatpush1.bf16.msra.mxu0 %v785
    %1627 = vmatprep.subr.bf16.mxu0 %v778
    %1628 = vmatpush1.bf16.msra.mxu0 %v777
    %1629 = vmatprep.subr.bf16.mxu0 %v770
    %1630 = vmatpush1.bf16.msra.mxu0 %v769
    %1631 = vmatprep.subr.bf16.mxu0 %v762
    %1632 = vmatpush1.bf16.msra.mxu0 %v761
    %1633 = vmatprep.subr.bf16.mxu0 %v754
    %1634 = vmatpush1.bf16.msra.mxu0 %v753
    %1635 = vmatprep.subr.bf16.mxu0 %v874
    %1636 = vmatpush2.bf16.msra.mxu0 %v873
    %1637 = vmatprep.subr.bf16.mxu0 %v866
    %1638 = vmatpush2.bf16.msra.mxu0 %v865
    %1639 = vmatprep.subr.bf16.mxu0 %v858
    %1640 = vmatpush2.bf16.msra.mxu0 %v857
    %1641 = vmatprep.subr.bf16.mxu0 %v850
    %1642 = vmatpush2.bf16.msra.mxu0 %v849
    %1643 = vmatprep.subr.bf16.mxu0 %v842
    %1644 = vmatpush2.bf16.msra.mxu0 %v841
    %1645 = vmatprep.subr.bf16.mxu0 %v834
    %1646 = vmatpush2.bf16.msra.mxu0 %v833
    %1647 = vmatprep.subr.bf16.mxu0 %v826
    %1648 = vmatpush2.bf16.msra.mxu0 %v825
    %1649 = vmatprep.subr.bf16.mxu0 %v818
    %1650 = vmatpush2.bf16.msra.mxu0 %v817
    %1651 = vmatprep.mubr.bf16.mxu0 %v1493
    %1652 = vmatmul.mubr.bf16.gmra.mxu0 %v1492
    %v1653 = vpop.f32.mrf.mxu0
    %v1654 = vadd.f32 0.0, %v1653
    %v1655 = vpop.f32.mrf.mxu0
    %v1656 = vadd.f32 0.0, %v1655
    %v1657 = vpop.f32.mrf.mxu0
    %v1658 = vpop.f32.mrf.mxu0
    %1659 = vdwg.mxu0
    %v1660 = vadd.f32 %v1613, %v1172
    %v1661 = vadd.f32 %v1615, %v1176
    %v1662 = vadd.f32 %v1654, %v1180
    %v1663 = vadd.f32 %v1656, %v1184
    %v1664 = vrot.slane %v158, 6
    %v1665 = vrot.slane %v160, 6
    %v1666 = vrot.slane %v201, 6
    %v1667 = vrot.slane %v203, 6
    %v1672 = vadd.f32 %v1531, %v1664
    %v1673 = vadd.f32 %v1533, %v1665
    %v1674 = vadd.f32 %v1572, %v1666
    %v1675 = vadd.f32 %v1574, %v1667
    %v1680 = vrot.slane %v1672, 6
    %v1681 = vrot.slane %v1673, 6
    %v1682 = vrot.slane %v1674, 6
    %v1683 = vrot.slane %v1675, 6
    %v1688 = vsel %vm1221, %v1660, %v1680
    %v1689 = vsel %vm1221, %v1661, %v1681
    %v1690 = vsel %vm1221, %v1662, %v1682
    %v1691 = vsel %vm1221, %v1663, %v1683
    %v1692 = vxor.u32 %v1688, 2147483648
    %v1693 = vxor.u32 %v1689, 2147483648
    %v1694 = vxor.u32 %v1690, 2147483648
    %v1695 = vmul.f32 %v1692, 1.442695
    %v1696 = vpow.pop %v1695
    %v1697 = vmul.f32 %v1693, 1.442695
    %v1698 = vpow.pop %v1697
    %v1699 = vmul.f32 %v1694, 1.442695
    %v1700 = vpow.pop %v1699
    %v1701 = vadd.f32 %v1696, 1.0
    %v1702 = vadd.f32 %v1698, 1.0
    %v1703 = vadd.f32 %v1700, 1.0
    %v1704 = vrcp.pop %v1701
    %v1705 = vmul.f32 1.0, %v1704
    %v1706 = vrcp.pop %v1702
    %v1707 = vmul.f32 1.0, %v1706
    %v1708 = vrcp.pop %v1703
    %v1709 = vmul.f32 1.0, %v1708
    %v1710 = vtanh.pop %v1691
    %v1711 = vmul.f32 %v1707, %v1482
    %v1712 = vmul.f32 %v1705, %v1710
    %v1713 = vadd.f32 %v1711, %v1712
    %v1714 = vtanh.pop %v1713
    %v1715 = vmul.f32 %v1709, %v1714
    %v1717 = vrot.slane %v1715, 6
    %v1719 = vpack.c.bf16 %v1715, %v1715
    %v1720 = vpack.c.bf16 %v1717, %v1717
    %v1723 = vrot.slane %v1719, 1
    %v1724 = vrot.slane %v1720, 1
    %1727 = vmatprep.subr.bf16.mxu0 %v804
    %1728 = vmatpush1.bf16.msra.mxu0 %v803
    %1729 = vmatprep.subr.bf16.mxu0 %v796
    %1730 = vmatpush1.bf16.msra.mxu0 %v795
    %1731 = vmatprep.subr.bf16.mxu0 %v788
    %1732 = vmatpush1.bf16.msra.mxu0 %v787
    %1733 = vmatprep.subr.bf16.mxu0 %v780
    %1734 = vmatpush1.bf16.msra.mxu0 %v779
    %1735 = vmatprep.subr.bf16.mxu0 %v772
    %1736 = vmatpush1.bf16.msra.mxu0 %v771
    %1737 = vmatprep.subr.bf16.mxu0 %v764
    %1738 = vmatpush1.bf16.msra.mxu0 %v763
    %1739 = vmatprep.subr.bf16.mxu0 %v756
    %1740 = vmatpush1.bf16.msra.mxu0 %v755
    %1741 = vmatprep.subr.bf16.mxu0 %v748
    %1742 = vmatpush1.bf16.msra.mxu0 %v747
    %1743 = vmatprep.subr.bf16.mxu0 %v868
    %1744 = vmatpush2.bf16.msra.mxu0 %v867
    %1745 = vmatprep.subr.bf16.mxu0 %v860
    %1746 = vmatpush2.bf16.msra.mxu0 %v859
    %1747 = vmatprep.subr.bf16.mxu0 %v852
    %1748 = vmatpush2.bf16.msra.mxu0 %v851
    %1749 = vmatprep.subr.bf16.mxu0 %v844
    %1750 = vmatpush2.bf16.msra.mxu0 %v843
    %1751 = vmatprep.subr.bf16.mxu0 %v836
    %1752 = vmatpush2.bf16.msra.mxu0 %v835
    %1753 = vmatprep.subr.bf16.mxu0 %v828
    %1754 = vmatpush2.bf16.msra.mxu0 %v827
    %1755 = vmatprep.subr.bf16.mxu0 %v820
    %1756 = vmatpush2.bf16.msra.mxu0 %v819
    %1757 = vmatprep.subr.bf16.mxu0 %v812
    %1758 = vmatpush2.bf16.msra.mxu0 %v811
    %1759 = vmatprep.mubr.bf16.mxu0 %v1724
    %1760 = vmatmul.mubr.bf16.gmra.mxu0 %v1723
    %v1761 = vpop.f32.mrf.mxu0
    %v1762 = vadd.f32 0.0, %v1761
    %v1763 = vpop.f32.mrf.mxu0
    %v1764 = vadd.f32 0.0, %v1763
    %v1765 = vpop.f32.mrf.mxu0
    %v1766 = vpop.f32.mrf.mxu0
    %1767 = vdwg.mxu0
    %1768 = vmatprep.subr.bf16.mxu0 %v806
    %1769 = vmatpush1.bf16.msra.mxu0 %v805
    %1770 = vmatprep.subr.bf16.mxu0 %v798
    %1771 = vmatpush1.bf16.msra.mxu0 %v797
    %1772 = vmatprep.subr.bf16.mxu0 %v790
    %1773 = vmatpush1.bf16.msra.mxu0 %v789
    %1774 = vmatprep.subr.bf16.mxu0 %v782
    %1775 = vmatpush1.bf16.msra.mxu0 %v781
    %1776 = vmatprep.subr.bf16.mxu0 %v774
    %1777 = vmatpush1.bf16.msra.mxu0 %v773
    %1778 = vmatprep.subr.bf16.mxu0 %v766
    %1779 = vmatpush1.bf16.msra.mxu0 %v765
    %1780 = vmatprep.subr.bf16.mxu0 %v758
    %1781 = vmatpush1.bf16.msra.mxu0 %v757
    %1782 = vmatprep.subr.bf16.mxu0 %v750
    %1783 = vmatpush1.bf16.msra.mxu0 %v749
    %1784 = vmatprep.subr.bf16.mxu0 %v870
    %1785 = vmatpush2.bf16.msra.mxu0 %v869
    %1786 = vmatprep.subr.bf16.mxu0 %v862
    %1787 = vmatpush2.bf16.msra.mxu0 %v861
    %1788 = vmatprep.subr.bf16.mxu0 %v854
    %1789 = vmatpush2.bf16.msra.mxu0 %v853
    %1790 = vmatprep.subr.bf16.mxu0 %v846
    %1791 = vmatpush2.bf16.msra.mxu0 %v845
    %1792 = vmatprep.subr.bf16.mxu0 %v838
    %1793 = vmatpush2.bf16.msra.mxu0 %v837
    %1794 = vmatprep.subr.bf16.mxu0 %v830
    %1795 = vmatpush2.bf16.msra.mxu0 %v829
    %1796 = vmatprep.subr.bf16.mxu0 %v822
    %1797 = vmatpush2.bf16.msra.mxu0 %v821
    %1798 = vmatprep.subr.bf16.mxu0 %v814
    %1799 = vmatpush2.bf16.msra.mxu0 %v813
    %1800 = vmatprep.mubr.bf16.mxu0 %v1724
    %1801 = vmatmul.mubr.bf16.gmra.mxu0 %v1723
    %v1802 = vpop.f32.mrf.mxu0
    %v1803 = vadd.f32 0.0, %v1802
    %v1804 = vpop.f32.mrf.mxu0
    %v1805 = vadd.f32 0.0, %v1804
    %v1806 = vpop.f32.mrf.mxu0
    %v1807 = vpop.f32.mrf.mxu0
    %1808 = vdwg.mxu0
    %1809 = vmatprep.subr.bf16.mxu0 %v808
    %1810 = vmatpush1.bf16.msra.mxu0 %v807
    %1811 = vmatprep.subr.bf16.mxu0 %v800
    %1812 = vmatpush1.bf16.msra.mxu0 %v799
    %1813 = vmatprep.subr.bf16.mxu0 %v792
    %1814 = vmatpush1.bf16.msra.mxu0 %v791
    %1815 = vmatprep.subr.bf16.mxu0 %v784
    %1816 = vmatpush1.bf16.msra.mxu0 %v783
    %1817 = vmatprep.subr.bf16.mxu0 %v776
    %1818 = vmatpush1.bf16.msra.mxu0 %v775
    %1819 = vmatprep.subr.bf16.mxu0 %v768
    %1820 = vmatpush1.bf16.msra.mxu0 %v767
    %1821 = vmatprep.subr.bf16.mxu0 %v760
    %1822 = vmatpush1.bf16.msra.mxu0 %v759
    %1823 = vmatprep.subr.bf16.mxu0 %v752
    %1824 = vmatpush1.bf16.msra.mxu0 %v751
    %1825 = vmatprep.subr.bf16.mxu0 %v872
    %1826 = vmatpush2.bf16.msra.mxu0 %v871
    %1827 = vmatprep.subr.bf16.mxu0 %v864
    %1828 = vmatpush2.bf16.msra.mxu0 %v863
    %1829 = vmatprep.subr.bf16.mxu0 %v856
    %1830 = vmatpush2.bf16.msra.mxu0 %v855
    %1831 = vmatprep.subr.bf16.mxu0 %v848
    %1832 = vmatpush2.bf16.msra.mxu0 %v847
    %1833 = vmatprep.subr.bf16.mxu0 %v840
    %1834 = vmatpush2.bf16.msra.mxu0 %v839
    %1835 = vmatprep.subr.bf16.mxu0 %v832
    %1836 = vmatpush2.bf16.msra.mxu0 %v831
    %1837 = vmatprep.subr.bf16.mxu0 %v824
    %1838 = vmatpush2.bf16.msra.mxu0 %v823
    %1839 = vmatprep.subr.bf16.mxu0 %v816
    %1840 = vmatpush2.bf16.msra.mxu0 %v815
    %1841 = vmatprep.mubr.bf16.mxu0 %v1724
    %1842 = vmatmul.mubr.bf16.gmra.mxu0 %v1723
    %v1843 = vpop.f32.mrf.mxu0
    %v1844 = vadd.f32 0.0, %v1843
    %v1845 = vpop.f32.mrf.mxu0
    %v1846 = vadd.f32 0.0, %v1845
    %v1847 = vpop.f32.mrf.mxu0
    %v1848 = vpop.f32.mrf.mxu0
    %1849 = vdwg.mxu0
    %1850 = vmatprep.subr.bf16.mxu0 %v810
    %1851 = vmatpush1.bf16.msra.mxu0 %v809
    %1852 = vmatprep.subr.bf16.mxu0 %v802
    %1853 = vmatpush1.bf16.msra.mxu0 %v801
    %1854 = vmatprep.subr.bf16.mxu0 %v794
    %1855 = vmatpush1.bf16.msra.mxu0 %v793
    %1856 = vmatprep.subr.bf16.mxu0 %v786
    %1857 = vmatpush1.bf16.msra.mxu0 %v785
    %1858 = vmatprep.subr.bf16.mxu0 %v778
    %1859 = vmatpush1.bf16.msra.mxu0 %v777
    %1860 = vmatprep.subr.bf16.mxu0 %v770
    %1861 = vmatpush1.bf16.msra.mxu0 %v769
    %1862 = vmatprep.subr.bf16.mxu0 %v762
    %1863 = vmatpush1.bf16.msra.mxu0 %v761
    %1864 = vmatprep.subr.bf16.mxu0 %v754
    %1865 = vmatpush1.bf16.msra.mxu0 %v753
    %1866 = vmatprep.subr.bf16.mxu0 %v874
    %1867 = vmatpush2.bf16.msra.mxu0 %v873
    %1868 = vmatprep.subr.bf16.mxu0 %v866
    %1869 = vmatpush2.bf16.msra.mxu0 %v865
    %1870 = vmatprep.subr.bf16.mxu0 %v858
    %1871 = vmatpush2.bf16.msra.mxu0 %v857
    %1872 = vmatprep.subr.bf16.mxu0 %v850
    %1873 = vmatpush2.bf16.msra.mxu0 %v849
    %1874 = vmatprep.subr.bf16.mxu0 %v842
    %1875 = vmatpush2.bf16.msra.mxu0 %v841
    %1876 = vmatprep.subr.bf16.mxu0 %v834
    %1877 = vmatpush2.bf16.msra.mxu0 %v833
    %1878 = vmatprep.subr.bf16.mxu0 %v826
    %1879 = vmatpush2.bf16.msra.mxu0 %v825
    %1880 = vmatprep.subr.bf16.mxu0 %v818
    %1881 = vmatpush2.bf16.msra.mxu0 %v817
    %1882 = vmatprep.mubr.bf16.mxu0 %v1724
    %1883 = vmatmul.mubr.bf16.gmra.mxu0 %v1723
    %v1884 = vpop.f32.mrf.mxu0
    %v1885 = vadd.f32 0.0, %v1884
    %v1886 = vpop.f32.mrf.mxu0
    %v1887 = vadd.f32 0.0, %v1886
    %v1888 = vpop.f32.mrf.mxu0
    %v1889 = vpop.f32.mrf.mxu0
    %1890 = vdwg.mxu0
    %v1891 = vadd.f32 %v1844, %v1172
    %v1892 = vadd.f32 %v1846, %v1176
    %v1893 = vadd.f32 %v1885, %v1180
    %v1894 = vadd.f32 %v1887, %v1184
    %v1895 = vadd.f32 %v1762, %v162
    %v1896 = vadd.f32 %v1764, %v164
    %v1897 = vadd.f32 %v1803, %v205
    %v1898 = vadd.f32 %v1805, %v207
    %v1903 = vrot.slane %v1895, 6
    %v1904 = vrot.slane %v1896, 6
    %v1905 = vrot.slane %v1897, 6
    %v1906 = vrot.slane %v1898, 6
    %v1911 = vsel %vm1221, %v1891, %v1903
    %v1912 = vsel %vm1221, %v1892, %v1904
    %v1913 = vsel %vm1221, %v1893, %v1905
    %v1914 = vsel %vm1221, %v1894, %v1906
    %v1915 = vxor.u32 %v1911, 2147483648
    %v1916 = vxor.u32 %v1912, 2147483648
    %v1917 = vxor.u32 %v1913, 2147483648
    %v1918 = vmul.f32 %v1915, 1.442695
    %v1919 = vpow.pop %v1918
    %v1920 = vmul.f32 %v1916, 1.442695
    %v1921 = vpow.pop %v1920
    %v1922 = vmul.f32 %v1917, 1.442695
    %v1923 = vpow.pop %v1922
    %v1924 = vadd.f32 %v1919, 1.0
    %v1925 = vadd.f32 %v1921, 1.0
    %v1926 = vadd.f32 %v1923, 1.0
    %v1927 = vrcp.pop %v1924
    %v1928 = vmul.f32 1.0, %v1927
    %v1929 = vrcp.pop %v1925
    %v1930 = vmul.f32 1.0, %v1929
    %v1931 = vrcp.pop %v1926
    %v1932 = vmul.f32 1.0, %v1931
    %v1933 = vtanh.pop %v1914
    %v1934 = vmul.f32 %v1930, %v1713
    %v1935 = vmul.f32 %v1928, %v1933
    %v1936 = vadd.f32 %v1934, %v1935
    %v1937 = vtanh.pop %v1936
    %v1938 = vmul.f32 %v1932, %v1937
    %v1940 = vrot.slane %v1938, 6
    %v1942 = vpack.c.bf16 %v1938, %v1938
    %v1943 = vpack.c.bf16 %v1940, %v1940
    %v1946 = vrot.slane %v1942, 1
    %v1947 = vrot.slane %v1943, 1
    %1950 = vmatprep.subr.bf16.mxu0 %v804
    %1951 = vmatpush1.bf16.msra.mxu0 %v803
    %1952 = vmatprep.subr.bf16.mxu0 %v796
    %1953 = vmatpush1.bf16.msra.mxu0 %v795
    %1954 = vmatprep.subr.bf16.mxu0 %v788
    %1955 = vmatpush1.bf16.msra.mxu0 %v787
    %1956 = vmatprep.subr.bf16.mxu0 %v780
    %1957 = vmatpush1.bf16.msra.mxu0 %v779
    %1958 = vmatprep.subr.bf16.mxu0 %v772
    %1959 = vmatpush1.bf16.msra.mxu0 %v771
    %1960 = vmatprep.subr.bf16.mxu0 %v764
    %1961 = vmatpush1.bf16.msra.mxu0 %v763
    %1962 = vmatprep.subr.bf16.mxu0 %v756
    %1963 = vmatpush1.bf16.msra.mxu0 %v755
    %1964 = vmatprep.subr.bf16.mxu0 %v748
    %1965 = vmatpush1.bf16.msra.mxu0 %v747
    %1966 = vmatprep.subr.bf16.mxu0 %v868
    %1967 = vmatpush2.bf16.msra.mxu0 %v867
    %1968 = vmatprep.subr.bf16.mxu0 %v860
    %1969 = vmatpush2.bf16.msra.mxu0 %v859
    %1970 = vmatprep.subr.bf16.mxu0 %v852
    %1971 = vmatpush2.bf16.msra.mxu0 %v851
    %1972 = vmatprep.subr.bf16.mxu0 %v844
    %1973 = vmatpush2.bf16.msra.mxu0 %v843
    %1974 = vmatprep.subr.bf16.mxu0 %v836
    %1975 = vmatpush2.bf16.msra.mxu0 %v835
    %1976 = vmatprep.subr.bf16.mxu0 %v828
    %1977 = vmatpush2.bf16.msra.mxu0 %v827
    %1978 = vmatprep.subr.bf16.mxu0 %v820
    %1979 = vmatpush2.bf16.msra.mxu0 %v819
    %1980 = vmatprep.subr.bf16.mxu0 %v812
    %1981 = vmatpush2.bf16.msra.mxu0 %v811
    %1982 = vmatprep.mubr.bf16.mxu0 %v1947
    %1983 = vmatmul.mubr.bf16.gmra.mxu0 %v1946
    %v1984 = vpop.f32.mrf.mxu0
    %v1985 = vadd.f32 0.0, %v1984
    %v1986 = vpop.f32.mrf.mxu0
    %v1987 = vadd.f32 0.0, %v1986
    %v1988 = vpop.f32.mrf.mxu0
    %v1989 = vpop.f32.mrf.mxu0
    %1990 = vdwg.mxu0
    %1991 = vmatprep.subr.bf16.mxu0 %v806
    %1992 = vmatpush1.bf16.msra.mxu0 %v805
    %1993 = vmatprep.subr.bf16.mxu0 %v798
    %1994 = vmatpush1.bf16.msra.mxu0 %v797
    %1995 = vmatprep.subr.bf16.mxu0 %v790
    %1996 = vmatpush1.bf16.msra.mxu0 %v789
    %1997 = vmatprep.subr.bf16.mxu0 %v782
    %1998 = vmatpush1.bf16.msra.mxu0 %v781
    %1999 = vmatprep.subr.bf16.mxu0 %v774
    %2000 = vmatpush1.bf16.msra.mxu0 %v773
    %2001 = vmatprep.subr.bf16.mxu0 %v766
    %2002 = vmatpush1.bf16.msra.mxu0 %v765
    %2003 = vmatprep.subr.bf16.mxu0 %v758
    %2004 = vmatpush1.bf16.msra.mxu0 %v757
    %2005 = vmatprep.subr.bf16.mxu0 %v750
    %2006 = vmatpush1.bf16.msra.mxu0 %v749
    %2007 = vmatprep.subr.bf16.mxu0 %v870
    %2008 = vmatpush2.bf16.msra.mxu0 %v869
    %2009 = vmatprep.subr.bf16.mxu0 %v862
    %2010 = vmatpush2.bf16.msra.mxu0 %v861
    %2011 = vmatprep.subr.bf16.mxu0 %v854
    %2012 = vmatpush2.bf16.msra.mxu0 %v853
    %2013 = vmatprep.subr.bf16.mxu0 %v846
    %2014 = vmatpush2.bf16.msra.mxu0 %v845
    %2015 = vmatprep.subr.bf16.mxu0 %v838
    %2016 = vmatpush2.bf16.msra.mxu0 %v837
    %2017 = vmatprep.subr.bf16.mxu0 %v830
    %2018 = vmatpush2.bf16.msra.mxu0 %v829
    %2019 = vmatprep.subr.bf16.mxu0 %v822
    %2020 = vmatpush2.bf16.msra.mxu0 %v821
    %2021 = vmatprep.subr.bf16.mxu0 %v814
    %2022 = vmatpush2.bf16.msra.mxu0 %v813
    %2023 = vmatprep.mubr.bf16.mxu0 %v1947
    %2024 = vmatmul.mubr.bf16.gmra.mxu0 %v1946
    %v2025 = vpop.f32.mrf.mxu0
    %v2026 = vadd.f32 0.0, %v2025
    %v2027 = vpop.f32.mrf.mxu0
    %v2028 = vadd.f32 0.0, %v2027
    %v2029 = vpop.f32.mrf.mxu0
    %v2030 = vpop.f32.mrf.mxu0
    %2031 = vdwg.mxu0
    %2032 = vmatprep.subr.bf16.mxu0 %v808
    %2033 = vmatpush1.bf16.msra.mxu0 %v807
    %2034 = vmatprep.subr.bf16.mxu0 %v800
    %2035 = vmatpush1.bf16.msra.mxu0 %v799
    %2036 = vmatprep.subr.bf16.mxu0 %v792
    %2037 = vmatpush1.bf16.msra.mxu0 %v791
    %2038 = vmatprep.subr.bf16.mxu0 %v784
    %2039 = vmatpush1.bf16.msra.mxu0 %v783
    %2040 = vmatprep.subr.bf16.mxu0 %v776
    %2041 = vmatpush1.bf16.msra.mxu0 %v775
    %2042 = vmatprep.subr.bf16.mxu0 %v768
    %2043 = vmatpush1.bf16.msra.mxu0 %v767
    %2044 = vmatprep.subr.bf16.mxu0 %v760
    %2045 = vmatpush1.bf16.msra.mxu0 %v759
    %2046 = vmatprep.subr.bf16.mxu0 %v752
    %2047 = vmatpush1.bf16.msra.mxu0 %v751
    %2048 = vmatprep.subr.bf16.mxu0 %v872
    %2049 = vmatpush2.bf16.msra.mxu0 %v871
    %2050 = vmatprep.subr.bf16.mxu0 %v864
    %2051 = vmatpush2.bf16.msra.mxu0 %v863
    %2052 = vmatprep.subr.bf16.mxu0 %v856
    %2053 = vmatpush2.bf16.msra.mxu0 %v855
    %2054 = vmatprep.subr.bf16.mxu0 %v848
    %2055 = vmatpush2.bf16.msra.mxu0 %v847
    %2056 = vmatprep.subr.bf16.mxu0 %v840
    %2057 = vmatpush2.bf16.msra.mxu0 %v839
    %2058 = vmatprep.subr.bf16.mxu0 %v832
    %2059 = vmatpush2.bf16.msra.mxu0 %v831
    %2060 = vmatprep.subr.bf16.mxu0 %v824
    %2061 = vmatpush2.bf16.msra.mxu0 %v823
    %2062 = vmatprep.subr.bf16.mxu0 %v816
    %2063 = vmatpush2.bf16.msra.mxu0 %v815
    %2064 = vmatprep.mubr.bf16.mxu0 %v1947
    %2065 = vmatmul.mubr.bf16.gmra.mxu0 %v1946
    %v2066 = vpop.f32.mrf.mxu0
    %v2067 = vadd.f32 0.0, %v2066
    %v2068 = vpop.f32.mrf.mxu0
    %v2069 = vadd.f32 0.0, %v2068
    %v2070 = vpop.f32.mrf.mxu0
    %v2071 = vpop.f32.mrf.mxu0
    %2072 = vdwg.mxu0
    %2073 = vmatprep.subr.bf16.mxu0 %v810
    %2074 = vmatpush1.bf16.msra.mxu0 %v809
    %2075 = vmatprep.subr.bf16.mxu0 %v802
    %2076 = vmatpush1.bf16.msra.mxu0 %v801
    %2077 = vmatprep.subr.bf16.mxu0 %v794
    %2078 = vmatpush1.bf16.msra.mxu0 %v793
    %2079 = vmatprep.subr.bf16.mxu0 %v786
    %2080 = vmatpush1.bf16.msra.mxu0 %v785
    %2081 = vmatprep.subr.bf16.mxu0 %v778
    %2082 = vmatpush1.bf16.msra.mxu0 %v777
    %2083 = vmatprep.subr.bf16.mxu0 %v770
    %2084 = vmatpush1.bf16.msra.mxu0 %v769
    %2085 = vmatprep.subr.bf16.mxu0 %v762
    %2086 = vmatpush1.bf16.msra.mxu0 %v761
    %2087 = vmatprep.subr.bf16.mxu0 %v754
    %2088 = vmatpush1.bf16.msra.mxu0 %v753
    %2089 = vmatprep.subr.bf16.mxu0 %v874
    %2090 = vmatpush2.bf16.msra.mxu0 %v873
    %2091 = vmatprep.subr.bf16.mxu0 %v866
    %2092 = vmatpush2.bf16.msra.mxu0 %v865
    %2093 = vmatprep.subr.bf16.mxu0 %v858
    %2094 = vmatpush2.bf16.msra.mxu0 %v857
    %2095 = vmatprep.subr.bf16.mxu0 %v850
    %2096 = vmatpush2.bf16.msra.mxu0 %v849
    %2097 = vmatprep.subr.bf16.mxu0 %v842
    %2098 = vmatpush2.bf16.msra.mxu0 %v841
    %2099 = vmatprep.subr.bf16.mxu0 %v834
    %2100 = vmatpush2.bf16.msra.mxu0 %v833
    %2101 = vmatprep.subr.bf16.mxu0 %v826
    %2102 = vmatpush2.bf16.msra.mxu0 %v825
    %2103 = vmatprep.subr.bf16.mxu0 %v818
    %2104 = vmatpush2.bf16.msra.mxu0 %v817
    %2105 = vmatprep.mubr.bf16.mxu0 %v1947
    %2106 = vmatmul.mubr.bf16.gmra.mxu0 %v1946
    %v2107 = vpop.f32.mrf.mxu0
    %v2108 = vadd.f32 0.0, %v2107
    %v2109 = vpop.f32.mrf.mxu0
    %v2110 = vadd.f32 0.0, %v2109
    %v2111 = vpop.f32.mrf.mxu0
    %v2112 = vpop.f32.mrf.mxu0
    %2113 = vdwg.mxu0
    %v2114 = vadd.f32 %v2067, %v1172
    %v2115 = vadd.f32 %v2069, %v1176
    %v2116 = vadd.f32 %v2108, %v1180
    %v2117 = vadd.f32 %v2110, %v1184
    %v2122 = vrot.slane %v162, 2
    %v2123 = vrot.slane %v164, 2
    %v2124 = vrot.slane %v205, 2
    %v2125 = vrot.slane %v207, 2
    %v2130 = vadd.f32 %v1985, %v2122
    %v2131 = vadd.f32 %v1987, %v2123
    %v2132 = vadd.f32 %v2026, %v2124
    %v2133 = vadd.f32 %v2028, %v2125
    %v2138 = vrot.slane %v2130, 6
    %v2139 = vrot.slane %v2131, 6
    %v2140 = vrot.slane %v2132, 6
    %v2141 = vrot.slane %v2133, 6
    %v2146 = vsel %vm1221, %v2114, %v2138
    %v2147 = vsel %vm1221, %v2115, %v2139
    %v2148 = vsel %vm1221, %v2116, %v2140
    %v2149 = vsel %vm1221, %v2117, %v2141
    %v2150 = vxor.u32 %v2146, 2147483648
    %v2151 = vxor.u32 %v2147, 2147483648
    %v2152 = vxor.u32 %v2148, 2147483648
    %v2153 = vmul.f32 %v2150, 1.442695
    %v2154 = vpow.pop %v2153
    %v2155 = vmul.f32 %v2151, 1.442695
    %v2156 = vpow.pop %v2155
    %v2157 = vmul.f32 %v2152, 1.442695
    %v2158 = vpow.pop %v2157
    %v2159 = vadd.f32 %v2154, 1.0
    %v2160 = vadd.f32 %v2156, 1.0
    %v2161 = vadd.f32 %v2158, 1.0
    %v2162 = vrcp.pop %v2159
    %v2163 = vmul.f32 1.0, %v2162
    %v2164 = vrcp.pop %v2160
    %v2165 = vmul.f32 1.0, %v2164
    %v2166 = vrcp.pop %v2161
    %v2167 = vmul.f32 1.0, %v2166
    %v2168 = vtanh.pop %v2149
    %v2169 = vmul.f32 %v2165, %v1936
    %v2170 = vmul.f32 %v2163, %v2168
    %v2171 = vadd.f32 %v2169, %v2170
    %v2172 = vtanh.pop %v2171
    %v2173 = vmul.f32 %v2167, %v2172
    %v2175 = vrot.slane %v2173, 6
    %v2177 = vpack.c.bf16 %v2173, %v2173
    %v2178 = vpack.c.bf16 %v2175, %v2175
    %v2181 = vrot.slane %v2177, 1
    %v2182 = vrot.slane %v2178, 1
    %2185 = vmatprep.subr.bf16.mxu0 %v804
    %2186 = vmatpush1.bf16.msra.mxu0 %v803
    %2187 = vmatprep.subr.bf16.mxu0 %v796
    %2188 = vmatpush1.bf16.msra.mxu0 %v795
    %2189 = vmatprep.subr.bf16.mxu0 %v788
    %2190 = vmatpush1.bf16.msra.mxu0 %v787
    %2191 = vmatprep.subr.bf16.mxu0 %v780
    %2192 = vmatpush1.bf16.msra.mxu0 %v779
    %2193 = vmatprep.subr.bf16.mxu0 %v772
    %2194 = vmatpush1.bf16.msra.mxu0 %v771
    %2195 = vmatprep.subr.bf16.mxu0 %v764
    %2196 = vmatpush1.bf16.msra.mxu0 %v763
    %2197 = vmatprep.subr.bf16.mxu0 %v756
    %2198 = vmatpush1.bf16.msra.mxu0 %v755
    %2199 = vmatprep.subr.bf16.mxu0 %v748
    %2200 = vmatpush1.bf16.msra.mxu0 %v747
    %2201 = vmatprep.subr.bf16.mxu0 %v868
    %2202 = vmatpush2.bf16.msra.mxu0 %v867
    %2203 = vmatprep.subr.bf16.mxu0 %v860
    %2204 = vmatpush2.bf16.msra.mxu0 %v859
    %2205 = vmatprep.subr.bf16.mxu0 %v852
    %2206 = vmatpush2.bf16.msra.mxu0 %v851
    %2207 = vmatprep.subr.bf16.mxu0 %v844
    %2208 = vmatpush2.bf16.msra.mxu0 %v843
    %2209 = vmatprep.subr.bf16.mxu0 %v836
    %2210 = vmatpush2.bf16.msra.mxu0 %v835
    %2211 = vmatprep.subr.bf16.mxu0 %v828
    %2212 = vmatpush2.bf16.msra.mxu0 %v827
    %2213 = vmatprep.subr.bf16.mxu0 %v820
    %2214 = vmatpush2.bf16.msra.mxu0 %v819
    %2215 = vmatprep.subr.bf16.mxu0 %v812
    %2216 = vmatpush2.bf16.msra.mxu0 %v811
    %2217 = vmatprep.mubr.bf16.mxu0 %v2182
    %2218 = vmatmul.mubr.bf16.gmra.mxu0 %v2181
    %v2219 = vpop.f32.mrf.mxu0
    %v2220 = vadd.f32 0.0, %v2219
    %v2221 = vpop.f32.mrf.mxu0
    %v2222 = vadd.f32 0.0, %v2221
    %v2223 = vpop.f32.mrf.mxu0
    %v2224 = vpop.f32.mrf.mxu0
    %2225 = vdwg.mxu0
    %2226 = vmatprep.subr.bf16.mxu0 %v806
    %2227 = vmatpush1.bf16.msra.mxu0 %v805
    %2228 = vmatprep.subr.bf16.mxu0 %v798
    %2229 = vmatpush1.bf16.msra.mxu0 %v797
    %2230 = vmatprep.subr.bf16.mxu0 %v790
    %2231 = vmatpush1.bf16.msra.mxu0 %v789
    %2232 = vmatprep.subr.bf16.mxu0 %v782
    %2233 = vmatpush1.bf16.msra.mxu0 %v781
    %2234 = vmatprep.subr.bf16.mxu0 %v774
    %2235 = vmatpush1.bf16.msra.mxu0 %v773
    %2236 = vmatprep.subr.bf16.mxu0 %v766
    %2237 = vmatpush1.bf16.msra.mxu0 %v765
    %2238 = vmatprep.subr.bf16.mxu0 %v758
    %2239 = vmatpush1.bf16.msra.mxu0 %v757
    %2240 = vmatprep.subr.bf16.mxu0 %v750
    %2241 = vmatpush1.bf16.msra.mxu0 %v749
    %2242 = vmatprep.subr.bf16.mxu0 %v870
    %2243 = vmatpush2.bf16.msra.mxu0 %v869
    %2244 = vmatprep.subr.bf16.mxu0 %v862
    %2245 = vmatpush2.bf16.msra.mxu0 %v861
    %2246 = vmatprep.subr.bf16.mxu0 %v854
    %2247 = vmatpush2.bf16.msra.mxu0 %v853
    %2248 = vmatprep.subr.bf16.mxu0 %v846
    %2249 = vmatpush2.bf16.msra.mxu0 %v845
    %2250 = vmatprep.subr.bf16.mxu0 %v838
    %2251 = vmatpush2.bf16.msra.mxu0 %v837
    %2252 = vmatprep.subr.bf16.mxu0 %v830
    %2253 = vmatpush2.bf16.msra.mxu0 %v829
    %2254 = vmatprep.subr.bf16.mxu0 %v822
    %2255 = vmatpush2.bf16.msra.mxu0 %v821
    %2256 = vmatprep.subr.bf16.mxu0 %v814
    %2257 = vmatpush2.bf16.msra.mxu0 %v813
    %2258 = vmatprep.mubr.bf16.mxu0 %v2182
    %2259 = vmatmul.mubr.bf16.gmra.mxu0 %v2181
    %v2260 = vpop.f32.mrf.mxu0
    %v2261 = vadd.f32 0.0, %v2260
    %v2262 = vpop.f32.mrf.mxu0
    %v2263 = vadd.f32 0.0, %v2262
    %v2264 = vpop.f32.mrf.mxu0
    %v2265 = vpop.f32.mrf.mxu0
    %2266 = vdwg.mxu0
    %2267 = vmatprep.subr.bf16.mxu0 %v808
    %2268 = vmatpush1.bf16.msra.mxu0 %v807
    %2269 = vmatprep.subr.bf16.mxu0 %v800
    %2270 = vmatpush1.bf16.msra.mxu0 %v799
    %2271 = vmatprep.subr.bf16.mxu0 %v792
    %2272 = vmatpush1.bf16.msra.mxu0 %v791
    %2273 = vmatprep.subr.bf16.mxu0 %v784
    %2274 = vmatpush1.bf16.msra.mxu0 %v783
    %2275 = vmatprep.subr.bf16.mxu0 %v776
    %2276 = vmatpush1.bf16.msra.mxu0 %v775
    %2277 = vmatprep.subr.bf16.mxu0 %v768
    %2278 = vmatpush1.bf16.msra.mxu0 %v767
    %2279 = vmatprep.subr.bf16.mxu0 %v760
    %2280 = vmatpush1.bf16.msra.mxu0 %v759
    %2281 = vmatprep.subr.bf16.mxu0 %v752
    %2282 = vmatpush1.bf16.msra.mxu0 %v751
    %2283 = vmatprep.subr.bf16.mxu0 %v872
    %2284 = vmatpush2.bf16.msra.mxu0 %v871
    %2285 = vmatprep.subr.bf16.mxu0 %v864
    %2286 = vmatpush2.bf16.msra.mxu0 %v863
    %2287 = vmatprep.subr.bf16.mxu0 %v856
    %2288 = vmatpush2.bf16.msra.mxu0 %v855
    %2289 = vmatprep.subr.bf16.mxu0 %v848
    %2290 = vmatpush2.bf16.msra.mxu0 %v847
    %2291 = vmatprep.subr.bf16.mxu0 %v840
    %2292 = vmatpush2.bf16.msra.mxu0 %v839
    %2293 = vmatprep.subr.bf16.mxu0 %v832
    %2294 = vmatpush2.bf16.msra.mxu0 %v831
    %2295 = vmatprep.subr.bf16.mxu0 %v824
    %2296 = vmatpush2.bf16.msra.mxu0 %v823
    %2297 = vmatprep.subr.bf16.mxu0 %v816
    %2298 = vmatpush2.bf16.msra.mxu0 %v815
    %2299 = vmatprep.mubr.bf16.mxu0 %v2182
    %2300 = vmatmul.mubr.bf16.gmra.mxu0 %v2181
    %v2301 = vpop.f32.mrf.mxu0
    %v2302 = vadd.f32 0.0, %v2301
    %v2303 = vpop.f32.mrf.mxu0
    %v2304 = vadd.f32 0.0, %v2303
    %v2305 = vpop.f32.mrf.mxu0
    %v2306 = vpop.f32.mrf.mxu0
    %2307 = vdwg.mxu0
    %2308 = vmatprep.subr.bf16.mxu0 %v810
    %2309 = vmatpush1.bf16.msra.mxu0 %v809
    %2310 = vmatprep.subr.bf16.mxu0 %v802
    %2311 = vmatpush1.bf16.msra.mxu0 %v801
    %2312 = vmatprep.subr.bf16.mxu0 %v794
    %2313 = vmatpush1.bf16.msra.mxu0 %v793
    %2314 = vmatprep.subr.bf16.mxu0 %v786
    %2315 = vmatpush1.bf16.msra.mxu0 %v785
    %2316 = vmatprep.subr.bf16.mxu0 %v778
    %2317 = vmatpush1.bf16.msra.mxu0 %v777
    %2318 = vmatprep.subr.bf16.mxu0 %v770
    %2319 = vmatpush1.bf16.msra.mxu0 %v769
    %2320 = vmatprep.subr.bf16.mxu0 %v762
    %2321 = vmatpush1.bf16.msra.mxu0 %v761
    %2322 = vmatprep.subr.bf16.mxu0 %v754
    %2323 = vmatpush1.bf16.msra.mxu0 %v753
    %2324 = vmatprep.subr.bf16.mxu0 %v874
    %2325 = vmatpush2.bf16.msra.mxu0 %v873
    %2326 = vmatprep.subr.bf16.mxu0 %v866
    %2327 = vmatpush2.bf16.msra.mxu0 %v865
    %2328 = vmatprep.subr.bf16.mxu0 %v858
    %2329 = vmatpush2.bf16.msra.mxu0 %v857
    %2330 = vmatprep.subr.bf16.mxu0 %v850
    %2331 = vmatpush2.bf16.msra.mxu0 %v849
    %2332 = vmatprep.subr.bf16.mxu0 %v842
    %2333 = vmatpush2.bf16.msra.mxu0 %v841
    %2334 = vmatprep.subr.bf16.mxu0 %v834
    %2335 = vmatpush2.bf16.msra.mxu0 %v833
    %2336 = vmatprep.subr.bf16.mxu0 %v826
    %2337 = vmatpush2.bf16.msra.mxu0 %v825
    %2338 = vmatprep.subr.bf16.mxu0 %v818
    %2339 = vmatpush2.bf16.msra.mxu0 %v817
    %2340 = vmatprep.mubr.bf16.mxu0 %v2182
    %2341 = vmatmul.mubr.bf16.gmra.mxu0 %v2181
    %v2342 = vpop.f32.mrf.mxu0
    %v2343 = vadd.f32 0.0, %v2342
    %v2344 = vpop.f32.mrf.mxu0
    %v2345 = vadd.f32 0.0, %v2344
    %v2346 = vpop.f32.mrf.mxu0
    %v2347 = vpop.f32.mrf.mxu0
    %2348 = vdwg.mxu0
    %v2349 = vadd.f32 %v2302, %v1172
    %v2350 = vadd.f32 %v2304, %v1176
    %v2351 = vadd.f32 %v2343, %v1180
    %v2352 = vadd.f32 %v2345, %v1184
    %v2353 = vrot.slane %v162, 4
    %v2354 = vrot.slane %v164, 4
    %v2355 = vrot.slane %v205, 4
    %v2356 = vrot.slane %v207, 4
    %v2361 = vadd.f32 %v2220, %v2353
    %v2362 = vadd.f32 %v2222, %v2354
    %v2363 = vadd.f32 %v2261, %v2355
    %v2364 = vadd.f32 %v2263, %v2356
    %v2369 = vrot.slane %v2361, 6
    %v2370 = vrot.slane %v2362, 6
    %v2371 = vrot.slane %v2363, 6
    %v2372 = vrot.slane %v2364, 6
    %v2377 = vsel %vm1221, %v2349, %v2369
    %v2378 = vsel %vm1221, %v2350, %v2370
    %v2379 = vsel %vm1221, %v2351, %v2371
    %v2380 = vsel %vm1221, %v2352, %v2372
    %v2381 = vxor.u32 %v2377, 2147483648
    %v2382 = vxor.u32 %v2378, 2147483648
    %v2383 = vxor.u32 %v2379, 2147483648
    %v2384 = vmul.f32 %v2381, 1.442695
    %v2385 = vpow.pop %v2384
    %v2386 = vmul.f32 %v2382, 1.442695
    %v2387 = vpow.pop %v2386
    %v2388 = vmul.f32 %v2383, 1.442695
    %v2389 = vpow.pop %v2388
    %v2390 = vadd.f32 %v2385, 1.0
    %v2391 = vadd.f32 %v2387, 1.0
    %v2392 = vadd.f32 %v2389, 1.0
    %v2393 = vrcp.pop %v2390
    %v2394 = vmul.f32 1.0, %v2393
    %v2395 = vrcp.pop %v2391
    %v2396 = vmul.f32 1.0, %v2395
    %v2397 = vrcp.pop %v2392
    %v2398 = vmul.f32 1.0, %v2397
    %v2399 = vtanh.pop %v2380
    %v2400 = vmul.f32 %v2396, %v2171
    %v2401 = vmul.f32 %v2394, %v2399
    %v2402 = vadd.f32 %v2400, %v2401
    %v2403 = vtanh.pop %v2402
    %v2404 = vmul.f32 %v2398, %v2403
    %v2406 = vrot.slane %v2404, 6
    %v2408 = vpack.c.bf16 %v2404, %v2404
    %v2409 = vpack.c.bf16 %v2406, %v2406
    %v2412 = vrot.slane %v2408, 1
    %v2413 = vrot.slane %v2409, 1
    %2416 = vmatprep.subr.bf16.mxu0 %v804
    %2417 = vmatpush1.bf16.msra.mxu0 %v803
    %2418 = vmatprep.subr.bf16.mxu0 %v796
    %2419 = vmatpush1.bf16.msra.mxu0 %v795
    %2420 = vmatprep.subr.bf16.mxu0 %v788
    %2421 = vmatpush1.bf16.msra.mxu0 %v787
    %2422 = vmatprep.subr.bf16.mxu0 %v780
    %2423 = vmatpush1.bf16.msra.mxu0 %v779
    %2424 = vmatprep.subr.bf16.mxu0 %v772
    %2425 = vmatpush1.bf16.msra.mxu0 %v771
    %2426 = vmatprep.subr.bf16.mxu0 %v764
    %2427 = vmatpush1.bf16.msra.mxu0 %v763
    %2428 = vmatprep.subr.bf16.mxu0 %v756
    %2429 = vmatpush1.bf16.msra.mxu0 %v755
    %2430 = vmatprep.subr.bf16.mxu0 %v748
    %2431 = vmatpush1.bf16.msra.mxu0 %v747
    %2432 = vmatprep.subr.bf16.mxu0 %v868
    %2433 = vmatpush2.bf16.msra.mxu0 %v867
    %2434 = vmatprep.subr.bf16.mxu0 %v860
    %2435 = vmatpush2.bf16.msra.mxu0 %v859
    %2436 = vmatprep.subr.bf16.mxu0 %v852
    %2437 = vmatpush2.bf16.msra.mxu0 %v851
    %2438 = vmatprep.subr.bf16.mxu0 %v844
    %2439 = vmatpush2.bf16.msra.mxu0 %v843
    %2440 = vmatprep.subr.bf16.mxu0 %v836
    %2441 = vmatpush2.bf16.msra.mxu0 %v835
    %2442 = vmatprep.subr.bf16.mxu0 %v828
    %2443 = vmatpush2.bf16.msra.mxu0 %v827
    %2444 = vmatprep.subr.bf16.mxu0 %v820
    %2445 = vmatpush2.bf16.msra.mxu0 %v819
    %2446 = vmatprep.subr.bf16.mxu0 %v812
    %2447 = vmatpush2.bf16.msra.mxu0 %v811
    %2448 = vmatprep.mubr.bf16.mxu0 %v2413
    %2449 = vmatmul.mubr.bf16.gmra.mxu0 %v2412
    %v2450 = vpop.f32.mrf.mxu0
    %v2451 = vadd.f32 0.0, %v2450
    %v2452 = vpop.f32.mrf.mxu0
    %v2453 = vadd.f32 0.0, %v2452
    %v2454 = vpop.f32.mrf.mxu0
    %v2455 = vpop.f32.mrf.mxu0
    %2456 = vdwg.mxu0
    %2457 = vmatprep.subr.bf16.mxu0 %v806
    %2458 = vmatpush1.bf16.msra.mxu0 %v805
    %2459 = vmatprep.subr.bf16.mxu0 %v798
    %2460 = vmatpush1.bf16.msra.mxu0 %v797
    %2461 = vmatprep.subr.bf16.mxu0 %v790
    %2462 = vmatpush1.bf16.msra.mxu0 %v789
    %2463 = vmatprep.subr.bf16.mxu0 %v782
    %2464 = vmatpush1.bf16.msra.mxu0 %v781
    %2465 = vmatprep.subr.bf16.mxu0 %v774
    %2466 = vmatpush1.bf16.msra.mxu0 %v773
    %2467 = vmatprep.subr.bf16.mxu0 %v766
    %2468 = vmatpush1.bf16.msra.mxu0 %v765
    %2469 = vmatprep.subr.bf16.mxu0 %v758
    %2470 = vmatpush1.bf16.msra.mxu0 %v757
    %2471 = vmatprep.subr.bf16.mxu0 %v750
    %2472 = vmatpush1.bf16.msra.mxu0 %v749
    %2473 = vmatprep.subr.bf16.mxu0 %v870
    %2474 = vmatpush2.bf16.msra.mxu0 %v869
    %2475 = vmatprep.subr.bf16.mxu0 %v862
    %2476 = vmatpush2.bf16.msra.mxu0 %v861
    %2477 = vmatprep.subr.bf16.mxu0 %v854
    %2478 = vmatpush2.bf16.msra.mxu0 %v853
    %2479 = vmatprep.subr.bf16.mxu0 %v846
    %2480 = vmatpush2.bf16.msra.mxu0 %v845
    %2481 = vmatprep.subr.bf16.mxu0 %v838
    %2482 = vmatpush2.bf16.msra.mxu0 %v837
    %2483 = vmatprep.subr.bf16.mxu0 %v830
    %2484 = vmatpush2.bf16.msra.mxu0 %v829
    %2485 = vmatprep.subr.bf16.mxu0 %v822
    %2486 = vmatpush2.bf16.msra.mxu0 %v821
    %2487 = vmatprep.subr.bf16.mxu0 %v814
    %2488 = vmatpush2.bf16.msra.mxu0 %v813
    %2489 = vmatprep.mubr.bf16.mxu0 %v2413
    %2490 = vmatmul.mubr.bf16.gmra.mxu0 %v2412
    %v2491 = vpop.f32.mrf.mxu0
    %v2492 = vadd.f32 0.0, %v2491
    %v2493 = vpop.f32.mrf.mxu0
    %v2494 = vadd.f32 0.0, %v2493
    %v2495 = vpop.f32.mrf.mxu0
    %v2496 = vpop.f32.mrf.mxu0
    %2497 = vdwg.mxu0
    %2498 = vmatprep.subr.bf16.mxu0 %v808
    %2499 = vmatpush1.bf16.msra.mxu0 %v807
    %2500 = vmatprep.subr.bf16.mxu0 %v800
    %2501 = vmatpush1.bf16.msra.mxu0 %v799
    %2502 = vmatprep.subr.bf16.mxu0 %v792
    %2503 = vmatpush1.bf16.msra.mxu0 %v791
    %2504 = vmatprep.subr.bf16.mxu0 %v784
    %2505 = vmatpush1.bf16.msra.mxu0 %v783
    %2506 = vmatprep.subr.bf16.mxu0 %v776
    %2507 = vmatpush1.bf16.msra.mxu0 %v775
    %2508 = vmatprep.subr.bf16.mxu0 %v768
    %2509 = vmatpush1.bf16.msra.mxu0 %v767
    %2510 = vmatprep.subr.bf16.mxu0 %v760
    %2511 = vmatpush1.bf16.msra.mxu0 %v759
    %2512 = vmatprep.subr.bf16.mxu0 %v752
    %2513 = vmatpush1.bf16.msra.mxu0 %v751
    %2514 = vmatprep.subr.bf16.mxu0 %v872
    %2515 = vmatpush2.bf16.msra.mxu0 %v871
    %2516 = vmatprep.subr.bf16.mxu0 %v864
    %2517 = vmatpush2.bf16.msra.mxu0 %v863
    %2518 = vmatprep.subr.bf16.mxu0 %v856
    %2519 = vmatpush2.bf16.msra.mxu0 %v855
    %2520 = vmatprep.subr.bf16.mxu0 %v848
    %2521 = vmatpush2.bf16.msra.mxu0 %v847
    %2522 = vmatprep.subr.bf16.mxu0 %v840
    %2523 = vmatpush2.bf16.msra.mxu0 %v839
    %2524 = vmatprep.subr.bf16.mxu0 %v832
    %2525 = vmatpush2.bf16.msra.mxu0 %v831
    %2526 = vmatprep.subr.bf16.mxu0 %v824
    %2527 = vmatpush2.bf16.msra.mxu0 %v823
    %2528 = vmatprep.subr.bf16.mxu0 %v816
    %2529 = vmatpush2.bf16.msra.mxu0 %v815
    %2530 = vmatprep.mubr.bf16.mxu0 %v2413
    %2531 = vmatmul.mubr.bf16.gmra.mxu0 %v2412
    %v2532 = vpop.f32.mrf.mxu0
    %v2533 = vadd.f32 0.0, %v2532
    %v2534 = vpop.f32.mrf.mxu0
    %v2535 = vadd.f32 0.0, %v2534
    %v2536 = vpop.f32.mrf.mxu0
    %v2537 = vpop.f32.mrf.mxu0
    %2538 = vdwg.mxu0
    %2539 = vmatprep.subr.bf16.mxu0 %v810
    %2540 = vmatpush1.bf16.msra.mxu0 %v809
    %2541 = vmatprep.subr.bf16.mxu0 %v802
    %2542 = vmatpush1.bf16.msra.mxu0 %v801
    %2543 = vmatprep.subr.bf16.mxu0 %v794
    %2544 = vmatpush1.bf16.msra.mxu0 %v793
    %2545 = vmatprep.subr.bf16.mxu0 %v786
    %2546 = vmatpush1.bf16.msra.mxu0 %v785
    %2547 = vmatprep.subr.bf16.mxu0 %v778
    %2548 = vmatpush1.bf16.msra.mxu0 %v777
    %2549 = vmatprep.subr.bf16.mxu0 %v770
    %2550 = vmatpush1.bf16.msra.mxu0 %v769
    %2551 = vmatprep.subr.bf16.mxu0 %v762
    %2552 = vmatpush1.bf16.msra.mxu0 %v761
    %2553 = vmatprep.subr.bf16.mxu0 %v754
    %2554 = vmatpush1.bf16.msra.mxu0 %v753
    %2555 = vmatprep.subr.bf16.mxu0 %v874
    %2556 = vmatpush2.bf16.msra.mxu0 %v873
    %2557 = vmatprep.subr.bf16.mxu0 %v866
    %2558 = vmatpush2.bf16.msra.mxu0 %v865
    %2559 = vmatprep.subr.bf16.mxu0 %v858
    %2560 = vmatpush2.bf16.msra.mxu0 %v857
    %2561 = vmatprep.subr.bf16.mxu0 %v850
    %2562 = vmatpush2.bf16.msra.mxu0 %v849
    %2563 = vmatprep.subr.bf16.mxu0 %v842
    %2564 = vmatpush2.bf16.msra.mxu0 %v841
    %2565 = vmatprep.subr.bf16.mxu0 %v834
    %2566 = vmatpush2.bf16.msra.mxu0 %v833
    %2567 = vmatprep.subr.bf16.mxu0 %v826
    %2568 = vmatpush2.bf16.msra.mxu0 %v825
    %2569 = vmatprep.subr.bf16.mxu0 %v818
    %2570 = vmatpush2.bf16.msra.mxu0 %v817
    %2571 = vmatprep.mubr.bf16.mxu0 %v2413
    %2572 = vmatmul.mubr.bf16.gmra.mxu0 %v2412
    %v2573 = vpop.f32.mrf.mxu0
    %v2574 = vadd.f32 0.0, %v2573
    %v2575 = vpop.f32.mrf.mxu0
    %v2576 = vadd.f32 0.0, %v2575
    %v2577 = vpop.f32.mrf.mxu0
    %v2578 = vpop.f32.mrf.mxu0
    %2579 = vdwg.mxu0
    %v2580 = vadd.f32 %v2533, %v1172
    %v2581 = vadd.f32 %v2535, %v1176
    %v2582 = vadd.f32 %v2574, %v1180
    %v2583 = vadd.f32 %v2576, %v1184
    %v2584 = vrot.slane %v162, 6
    %v2585 = vrot.slane %v164, 6
    %v2586 = vrot.slane %v205, 6
    %v2587 = vrot.slane %v207, 6
    %v2592 = vadd.f32 %v2451, %v2584
    %v2593 = vadd.f32 %v2453, %v2585
    %v2594 = vadd.f32 %v2492, %v2586
    %v2595 = vadd.f32 %v2494, %v2587
    %v2600 = vrot.slane %v2592, 6
    %v2601 = vrot.slane %v2593, 6
    %v2602 = vrot.slane %v2594, 6
    %v2603 = vrot.slane %v2595, 6
    %v2608 = vsel %vm1221, %v2580, %v2600
    %v2609 = vsel %vm1221, %v2581, %v2601
    %v2610 = vsel %vm1221, %v2582, %v2602
    %v2611 = vsel %vm1221, %v2583, %v2603
    %v2612 = vxor.u32 %v2608, 2147483648
    %v2613 = vxor.u32 %v2609, 2147483648
    %v2614 = vxor.u32 %v2610, 2147483648
    %v2615 = vmul.f32 %v2612, 1.442695
    %v2616 = vpow.pop %v2615
    %v2617 = vmul.f32 %v2613, 1.442695
    %v2618 = vpow.pop %v2617
    %v2619 = vmul.f32 %v2614, 1.442695
    %v2620 = vpow.pop %v2619
    %v2621 = vadd.f32 %v2616, 1.0
    %v2622 = vadd.f32 %v2618, 1.0
    %v2623 = vadd.f32 %v2620, 1.0
    %v2624 = vrcp.pop %v2621
    %v2625 = vmul.f32 1.0, %v2624
    %v2626 = vrcp.pop %v2622
    %v2627 = vmul.f32 1.0, %v2626
    %v2628 = vrcp.pop %v2623
    %v2629 = vmul.f32 1.0, %v2628
    %v2630 = vtanh.pop %v2611
    %v2631 = vmul.f32 %v2627, %v2402
    %v2632 = vmul.f32 %v2625, %v2630
    %v2633 = vadd.f32 %v2631, %v2632
    %v2634 = vtanh.pop %v2633
    %v2635 = vmul.f32 %v2629, %v2634
    %v2637 = vrot.slane %v2635, 6
    %v2639 = vpack.c.bf16 %v2635, %v2635
    %v2640 = vpack.c.bf16 %v2637, %v2637
    %v2643 = vrot.slane %v2639, 1
    %v2644 = vrot.slane %v2640, 1
    %2647 = vmatprep.subr.bf16.mxu0 %v808
    %2648 = vmatpush1.bf16.msra.mxu0 %v807
    %2649 = vmatprep.subr.bf16.mxu0 %v800
    %2650 = vmatpush1.bf16.msra.mxu0 %v799
    %2651 = vmatprep.subr.bf16.mxu0 %v792
    %2652 = vmatpush1.bf16.msra.mxu0 %v791
    %2653 = vmatprep.subr.bf16.mxu0 %v784
    %2654 = vmatpush1.bf16.msra.mxu0 %v783
    %2655 = vmatprep.subr.bf16.mxu0 %v776
    %2656 = vmatpush1.bf16.msra.mxu0 %v775
    %2657 = vmatprep.subr.bf16.mxu0 %v768
    %2658 = vmatpush1.bf16.msra.mxu0 %v767
    %2659 = vmatprep.subr.bf16.mxu0 %v760
    %2660 = vmatpush1.bf16.msra.mxu0 %v759
    %2661 = vmatprep.subr.bf16.mxu0 %v752
    %2662 = vmatpush1.bf16.msra.mxu0 %v751
    %2663 = vmatprep.subr.bf16.mxu0 %v872
    %2664 = vmatpush2.bf16.msra.mxu0 %v871
    %2665 = vmatprep.subr.bf16.mxu0 %v864
    %2666 = vmatpush2.bf16.msra.mxu0 %v863
    %2667 = vmatprep.subr.bf16.mxu0 %v856
    %2668 = vmatpush2.bf16.msra.mxu0 %v855
    %2669 = vmatprep.subr.bf16.mxu0 %v848
    %2670 = vmatpush2.bf16.msra.mxu0 %v847
    %2671 = vmatprep.subr.bf16.mxu0 %v840
    %2672 = vmatpush2.bf16.msra.mxu0 %v839
    %2673 = vmatprep.subr.bf16.mxu0 %v832
    %2674 = vmatpush2.bf16.msra.mxu0 %v831
    %2675 = vmatprep.subr.bf16.mxu0 %v824
    %2676 = vmatpush2.bf16.msra.mxu0 %v823
    %2677 = vmatprep.subr.bf16.mxu0 %v816
    %2678 = vmatpush2.bf16.msra.mxu0 %v815
    %2679 = vmatprep.mubr.bf16.mxu0 %v2644
    %2680 = vmatmul.mubr.bf16.gmra.mxu0 %v2643
    %v2681 = vpop.f32.mrf.mxu0
    %v2682 = vadd.f32 0.0, %v2681
    %v2683 = vpop.f32.mrf.mxu0
    %v2684 = vadd.f32 0.0, %v2683
    %v2685 = vpop.f32.mrf.mxu0
    %v2686 = vpop.f32.mrf.mxu0
    %2687 = vdwg.mxu0
    %2688 = vmatprep.subr.bf16.mxu0 %v810
    %2689 = vmatpush1.bf16.msra.mxu0 %v809
    %2690 = vmatprep.subr.bf16.mxu0 %v802
    %2691 = vmatpush1.bf16.msra.mxu0 %v801
    %2692 = vmatprep.subr.bf16.mxu0 %v794
    %2693 = vmatpush1.bf16.msra.mxu0 %v793
    %2694 = vmatprep.subr.bf16.mxu0 %v786
    %2695 = vmatpush1.bf16.msra.mxu0 %v785
    %2696 = vmatprep.subr.bf16.mxu0 %v778
    %2697 = vmatpush1.bf16.msra.mxu0 %v777
    %2698 = vmatprep.subr.bf16.mxu0 %v770
    %2699 = vmatpush1.bf16.msra.mxu0 %v769
    %2700 = vmatprep.subr.bf16.mxu0 %v762
    %2701 = vmatpush1.bf16.msra.mxu0 %v761
    %2702 = vmatprep.subr.bf16.mxu0 %v754
    %2703 = vmatpush1.bf16.msra.mxu0 %v753
    %2704 = vmatprep.subr.bf16.mxu0 %v874
    %2705 = vmatpush2.bf16.msra.mxu0 %v873
    %2706 = vmatprep.subr.bf16.mxu0 %v866
    %2707 = vmatpush2.bf16.msra.mxu0 %v865
    %2708 = vmatprep.subr.bf16.mxu0 %v858
    %2709 = vmatpush2.bf16.msra.mxu0 %v857
    %2710 = vmatprep.subr.bf16.mxu0 %v850
    %2711 = vmatpush2.bf16.msra.mxu0 %v849
    %2712 = vmatprep.subr.bf16.mxu0 %v842
    %2713 = vmatpush2.bf16.msra.mxu0 %v841
    %2714 = vmatprep.subr.bf16.mxu0 %v834
    %2715 = vmatpush2.bf16.msra.mxu0 %v833
    %2716 = vmatprep.subr.bf16.mxu0 %v826
    %2717 = vmatpush2.bf16.msra.mxu0 %v825
    %2718 = vmatprep.subr.bf16.mxu0 %v818
    %2719 = vmatpush2.bf16.msra.mxu0 %v817
    %2720 = vmatprep.mubr.bf16.mxu0 %v2644
    %2721 = vmatmul.mubr.bf16.gmra.mxu0 %v2643
    %v2722 = vpop.f32.mrf.mxu0
    %v2723 = vadd.f32 0.0, %v2722
    %v2724 = vpop.f32.mrf.mxu0
    %v2725 = vadd.f32 0.0, %v2724
    %v2726 = vpop.f32.mrf.mxu0
    %v2727 = vpop.f32.mrf.mxu0
    %2728 = vdwg.mxu0
    %v2729 = vadd.f32 %v2682, %v1172
    %v2730 = vadd.f32 %v2684, %v1176
    %v2731 = vadd.f32 %v2723, %v1180
    %v2732 = vadd.f32 %v2725, %v1184
    %v2733 = vxor.u32 %v2729, 2147483648
    %v2734 = vxor.u32 %v2730, 2147483648
    %v2735 = vxor.u32 %v2731, 2147483648
    %v2736 = vmul.f32 %v2733, 1.442695
    %v2737 = vpow.pop %v2736
    %v2738 = vmul.f32 %v2734, 1.442695
    %v2739 = vpow.pop %v2738
    %v2740 = vmul.f32 %v2735, 1.442695
    %v2741 = vpow.pop %v2740
    %v2742 = vadd.f32 %v2737, 1.0
    %v2743 = vadd.f32 %v2739, 1.0
    %v2744 = vadd.f32 %v2741, 1.0
    %v2745 = vrcp.pop %v2742
    %v2746 = vmul.f32 1.0, %v2745
    %v2747 = vrcp.pop %v2743
    %v2748 = vmul.f32 1.0, %v2747
    %v2749 = vrcp.pop %v2744
    %v2750 = vmul.f32 1.0, %v2749
    %v2751 = vtanh.pop %v2732
    %v2752 = vmul.f32 %v2748, %v2633
    %v2753 = vmul.f32 %v2746, %v2751
    %v2754 = vadd.f32 %v2752, %v2753
    %v2755 = vtanh.pop %v2754
    %v2756 = vmul.f32 %v2750, %v2755
    %v2757 = vpack.c.bf16 %v2756, %v2756
    %v2758 = vld [vmem:[%s5] sm:$0xf]
    %v2759 = vld [vmem:[%s5 + $0x4] sm:$0xf]
    %v2760 = vld [vmem:[%s5 + $0x8] sm:$0xf]
    %v2761 = vld [vmem:[%s5 + $0xc] sm:$0xf]
    %v2762 = vld [vmem:[%s5 + $0x10] sm:$0xf]
    %v2763 = vld [vmem:[%s5 + $0x14] sm:$0xf]
    %v2764 = vld [vmem:[%s5 + $0x18] sm:$0xf]
    %v2765 = vld [vmem:[%s5 + $0x1c] sm:$0xf]
    %v2766 = vld [vmem:[%s5 + $0x20] sm:$0xf]
    %v2767 = vld [vmem:[%s5 + $0x24] sm:$0xf]
    %v2768 = vld [vmem:[%s5 + $0x28] sm:$0xf]
    %v2769 = vld [vmem:[%s5 + $0x2c] sm:$0xf]
    %v2770 = vld [vmem:[%s5 + $0x30] sm:$0xf]
    %v2771 = vld [vmem:[%s5 + $0x34] sm:$0xf]
    %v2772 = vld [vmem:[%s5 + $0x38] sm:$0xf]
    %v2773 = vld [vmem:[%s5 + $0x3c] sm:$0xf]
    %v2774 = vld [vmem:[%s6] sm:$0x1]
    %v2776 = vlaneseq
    %v2777 = vshrl.u32 %v2776, 7
    %v2778 = vsub.s32 0, %v2777
    %v2779 = vrot.slane %v2774, %v2778
    %v2797 = vunpack.c.l.b16 %v2758
    %v2798 = vunpack.c.l.b16 %v2759
    %v2799 = vunpack.c.l.b16 %v2760
    %v2800 = vunpack.c.l.b16 %v2761
    %v2801 = vunpack.c.l.b16 %v2762
    %v2802 = vunpack.c.l.b16 %v2763
    %v2803 = vunpack.c.l.b16 %v2764
    %v2804 = vunpack.c.l.b16 %v2765
    %v2805 = vunpack.c.l.b16 %v2766
    %v2806 = vunpack.c.l.b16 %v2767
    %v2807 = vunpack.c.l.b16 %v2768
    %v2808 = vunpack.c.l.b16 %v2769
    %v2809 = vunpack.c.l.b16 %v2770
    %v2810 = vunpack.c.l.b16 %v2771
    %v2811 = vunpack.c.l.b16 %v2772
    %v2812 = vunpack.c.l.b16 %v2773
    %v2813 = vpack.c.b16 %v2798, %v2797
    %v2814 = vpack.c.b16 %v2800, %v2799
    %v2815 = vpack.c.b16 %v2802, %v2801
    %v2816 = vpack.c.b16 %v2804, %v2803
    %v2817 = vpack.c.b16 %v2806, %v2805
    %v2818 = vpack.c.b16 %v2808, %v2807
    %v2819 = vpack.c.b16 %v2810, %v2809
    %v2820 = vpack.c.b16 %v2812, %v2811
    %2829 = vmatprep.subr.bf16.mxu0 0
    %2830 = vmatpush1.bf16.msra.mxu0 %v2820
    %2831 = vmatprep.subr.bf16.mxu0 0
    %2832 = vmatpush1.bf16.msra.mxu0 %v2819
    %2833 = vmatprep.subr.bf16.mxu0 0
    %2834 = vmatpush1.bf16.msra.mxu0 %v2818
    %2835 = vmatprep.subr.bf16.mxu0 0
    %2836 = vmatpush1.bf16.msra.mxu0 %v2817
    %2837 = vmatprep.subr.bf16.mxu0 0
    %2838 = vmatpush1.bf16.msra.mxu0 %v2816
    %2839 = vmatprep.subr.bf16.mxu0 0
    %2840 = vmatpush1.bf16.msra.mxu0 %v2815
    %2841 = vmatprep.subr.bf16.mxu0 0
    %2842 = vmatpush1.bf16.msra.mxu0 %v2814
    %2843 = vmatprep.subr.bf16.mxu0 0
    %2844 = vmatpush1.bf16.msra.mxu0 %v2813
    %2845 = vmatprep.subr.bf16.mxu0 0
    %2846 = vmatpush2.bf16.msra.mxu0 0
    %2847 = vmatprep.subr.bf16.mxu0 0
    %2848 = vmatpush2.bf16.msra.mxu0 0
    %2849 = vmatprep.subr.bf16.mxu0 0
    %2850 = vmatpush2.bf16.msra.mxu0 0
    %2851 = vmatprep.subr.bf16.mxu0 0
    %2852 = vmatpush2.bf16.msra.mxu0 0
    %2853 = vmatprep.subr.bf16.mxu0 0
    %2854 = vmatpush2.bf16.msra.mxu0 0
    %2855 = vmatprep.subr.bf16.mxu0 0
    %2856 = vmatpush2.bf16.msra.mxu0 0
    %2857 = vmatprep.subr.bf16.mxu0 0
    %2858 = vmatpush2.bf16.msra.mxu0 0
    %2859 = vmatprep.subr.bf16.mxu0 0
    %2860 = vmatpush2.bf16.msra.mxu0 0
    %2861 = vmatprep.mubr.bf16.mxu0 0
    %2862 = vmatmul.mubr.bf16.gmra.mxu0 %v2757
    %v2863 = vpop.f32.mrf.mxu0
    %v2864 = vadd.f32 %v2779, %v2863
    %v2865 = vpop.f32.mrf.mxu0
    %v2866 = vpop.f32.mrf.mxu0
    %v2867 = vpop.f32.mrf.mxu0
    %2868 = vdwg.mxu0
    %v2869 = vxor.u32 %v2864, 2147483648
    %v2870 = vmul.f32 %v2869, 1.442695
    %v2871 = vpow.pop %v2870
    %v2872 = vadd.f32 %v2871, 1.0
    %v2873 = vrcp.pop %v2872
    %v2874 = vmul.f32 1.0, %v2873
    %vm2875 = vcmask 58368
    %2876 = vst.msk [vmem:[#allocation5] sm:$0x3] %vm2875, %v2874
    // Predicated region
    $region34: #{lstm_forward.1} parent=1 // pred_check
      _
    $region35: #{lstm_forward.1} parent=1 // pred_check_branch
      %2878 = sbr.rel (0) target = $region37
    $region36: #{lstm_forward.1} parent=1 // pred_region
      %s2880 = ssub.s32 32, 32
      %2881 = vsyncadd [#allocation4], %s2880
      %s2883 = sshll.u32 [#allocation5], 4
      %s2884 = int_to_ptr.vmem [resolvable:$true] %s2883
      %2886 = dma.vmem_to_hbm [thread:$0]  %s2884, 32, %s7, [#allocation4]
    $region37: #{lstm_forward.1} parent=1 // pred_fallthru
      _
    // Predicated region
    $region38: #{lstm_forward.1} parent=1 // pred_check
      _
    $region39: #{lstm_forward.1} parent=1 // pred_check_branch
      %2888 = sbr.rel (0) target = $region41
    $region40: #{lstm_forward.1} parent=1 // pred_region
      %2889 = dma.done [#allocation4], 32
    $region41: #{lstm_forward.1} parent=1 // pred_fallthru
      _
    %2890 = vsyncpa [#allocation3], 1
    %2891 = vsyncpa [#allocation4], 1

</llo_original>
